<compile_context>
chip_gen: v7x
topology: tpu7x:2x2x1
jax: 0.10.0
libtpu: 0.0.40
codegen_flags: <defaults>
</compile_context>

<pallas_src>
import functools

import jax
import jax.numpy as jnp
from jax.experimental import pallas as pl
from jax.experimental.pallas import tpu as pltpu

N_EMBD = 384
HIDDEN = 4 * N_EMBD
DROPOUT_P = 0.2  # TODO(synk): training-mode dropout (inverted random mask via
                 # pltpu.prng_seed/prng_random_bits) not applied; forward here
                 # matches nn.Dropout in eval() mode (identity).


def _round_up(x, m):
    return (x + m - 1) // m * m


def _ffn_kernel(x_ref, w1_ref, b1_ref, w2_ref, b2_ref, o_ref):
    # x_ref:  (tm, n_embd)     bf16 tile of tokens
    # w1_ref: (n_embd, hidden) bf16 full weight, resident across the grid
    # b1_ref: (1, hidden)      f32
    # w2_ref: (hidden, n_embd) bf16 full weight, resident across the grid
    # b2_ref: (1, n_embd)      f32
    # o_ref:  (tm, n_embd)     f32
    h = jnp.dot(x_ref[...], w1_ref[...], preferred_element_type=jnp.float32)
    h = jnp.maximum(h + b1_ref[...], 0.0)            # bias + ReLU in f32
    y = jnp.dot(h.astype(jnp.bfloat16), w2_ref[...],
                preferred_element_type=jnp.float32)
    o_ref[...] = (y + b2_ref[...]).astype(o_ref.dtype)


@functools.partial(jax.jit, static_argnames=("tm",))
def feed_forward(x, w1, b1, w2, b2, *, tm=256):
    """x: (B, T, n_embd) f32. Returns (B, T, n_embd) f32."""
    B, T, E = x.shape
    assert E == N_EMBD
    H = HIDDEN
    M = B * T

    # Clamp the row tile to the (sublane-aligned) problem size and pad M so the
    # grid divides evenly.  Padded rows are zeros and get sliced off at the end.
    tm_eff = min(tm, _round_up(M, 8))
    Mp = _round_up(M, tm_eff)
    grid_m = Mp // tm_eff

    x2d = x.reshape(M, E)
    if Mp != M:
        x2d = jnp.pad(x2d, ((0, Mp - M), (0, 0)))

    # bf16 MXU operands; biases / accumulation / output stay f32.
    x_bf = x2d.astype(jnp.bfloat16)
    w1_bf = w1.astype(jnp.bfloat16)
    w2_bf = w2.astype(jnp.bfloat16)

    cost = pl.CostEstimate(
        flops=4 * Mp * E * H,                       # two matmuls: 2*M*E*H each
        transcendentals=0,
        bytes_accessed=(Mp * E * 2) + (Mp * E * 4)  # x in (bf16) + out (f32)
        + (E * H * 2) + (H * E * 2)                 # W1, W2 (bf16)
        + (H * 4) + (E * 4),                        # b1, b2 (f32)
    )

    out = pl.pallas_call(
        _ffn_kernel,
        out_shape=jax.ShapeDtypeStruct((Mp, E), x.dtype),
        grid_spec=pltpu.PrefetchScalarGridSpec(
            num_scalar_prefetch=0,
            grid=(grid_m,),
            in_specs=[
                pl.BlockSpec((tm_eff, E), lambda i: (i, 0)),   # x tile
                pl.BlockSpec((E, H), lambda i: (0, 0)),        # W1 (resident)
                pl.BlockSpec((1, H), lambda i: (0, 0)),        # b1 (resident)
                pl.BlockSpec((H, E), lambda i: (0, 0)),        # W2 (resident)
                pl.BlockSpec((1, E), lambda i: (0, 0)),        # b2 (resident)
            ],
            out_specs=pl.BlockSpec((tm_eff, E), lambda i: (i, 0)),
        ),
        compiler_params=pltpu.CompilerParams(
            dimension_semantics=("parallel",),
        ),
        cost_estimate=cost,
    )(x_bf, w1_bf, b1, w2_bf, b2)

    return out[:M].reshape(B, T, E)


def init_params(key):
    """Deterministic init mirroring nn.Linear's U(-1/sqrt(fan_in), +1/sqrt(fan_in)).
    Weights are stored transposed relative to PyTorch: (in, out)."""
    k1, k2, k3, k4 = jax.random.split(key, 4)
    bound1 = 1.0 / jnp.sqrt(jnp.float32(N_EMBD))
    bound2 = 1.0 / jnp.sqrt(jnp.float32(HIDDEN))
    w1 = jax.random.uniform(k1, (N_EMBD, HIDDEN), jnp.float32, -bound1, bound1)
    b1 = jax.random.uniform(k2, (1, HIDDEN), jnp.float32, -bound1, bound1)
    w2 = jax.random.uniform(k3, (HIDDEN, N_EMBD), jnp.float32, -bound2, bound2)
    b2 = jax.random.uniform(k4, (1, N_EMBD), jnp.float32, -bound2, bound2)
    return w1, b1, w2, b2


if __name__ == "__main__":
    key = jax.random.PRNGKey(0)
    kx, kp = jax.random.split(key)

    B, T = 2, 8
    x = jax.random.normal(kx, (B, T, N_EMBD), jnp.float32)
    w1, b1, w2, b2 = init_params(kp)

    y = feed_forward(x, w1, b1, w2, b2)
    y = jax.block_until_ready(y)
    assert y.shape == (B, T, N_EMBD)
    assert y.dtype == jnp.float32

    # Pure-JAX reference with the same bf16 MXU operands / f32 accumulation
    # (eval-mode dropout = identity).
    xb = x.reshape(-1, N_EMBD).astype(jnp.bfloat16)
    h_ref = jnp.maximum(
        jnp.dot(xb, w1.astype(jnp.bfloat16), preferred_element_type=jnp.float32)
        + b1, 0.0)
    ref = jnp.dot(h_ref.astype(jnp.bfloat16), w2.astype(jnp.bfloat16),
                  preferred_element_type=jnp.float32) + b2
    ref = ref.reshape(B, T, N_EMBD)
    assert jnp.allclose(y, ref, atol=2e-2, rtol=2e-2), (
        float(jnp.max(jnp.abs(y - ref))))

    # Sanity vs. full-f32 math (looser tolerance for the bf16 operand rounding).
    ref_f32 = (jnp.maximum(x.reshape(-1, N_EMBD) @ w1 + b1, 0.0) @ w2 + b2
               ).reshape(B, T, N_EMBD)
    assert jnp.allclose(y, ref_f32, atol=1e-1, rtol=1e-1)

    print("KERNEL_OK")
</pallas_src>

<mosaic_0001>
module attributes {stable_mosaic.version = 11 : i64} {
  func.func @_ffn_kernel(%arg0: i32, %arg1: memref<16x384xbf16, #tpu.memory_space<vmem>>, %arg2: memref<384x1536xbf16, #tpu.memory_space<vmem>>, %arg3: memref<1x1536xf32, #tpu.memory_space<vmem>>, %arg4: memref<1536x384xbf16, #tpu.memory_space<vmem>>, %arg5: memref<1x384xf32, #tpu.memory_space<vmem>>, %arg6: memref<16x384xf32, #tpu.memory_space<vmem>>) attributes {dimension_semantics = [#tpu.dimension_semantics<parallel>], iteration_bounds = array<i64: 1>, scalar_prefetch = 0 : i64, scratch_operands = 0 : i64, tpu.core_type = #tpu.core_type<tc>, window_params = [{transform_indices = @transform_0, window_bounds = array<i64: 16, 384>}, {pipeline_mode = #tpu.pipeline_mode<synchronous>, transform_indices = @transform_1, window_bounds = array<i64: 384, 1536>}, {pipeline_mode = #tpu.pipeline_mode<synchronous>, transform_indices = @transform_2, window_bounds = array<i64: 1, 1536>}, {pipeline_mode = #tpu.pipeline_mode<synchronous>, transform_indices = @transform_3, window_bounds = array<i64: 1536, 384>}, {pipeline_mode = #tpu.pipeline_mode<synchronous>, transform_indices = @transform_4, window_bounds = array<i64: 1, 384>}, {transform_indices = @transform_5, window_bounds = array<i64: 16, 384>}]} {
    %c0 = arith.constant 0 : index
    %c0_0 = arith.constant 0 : index
    %0 = vector.load %arg1[%c0, %c0_0] : memref<16x384xbf16, #tpu.memory_space<vmem>>, vector<16x384xbf16>
    %c0_1 = arith.constant 0 : index
    %c0_2 = arith.constant 0 : index
    %1 = vector.load %arg2[%c0_1, %c0_2] : memref<384x1536xbf16, #tpu.memory_space<vmem>>, vector<384x1536xbf16>
    %cst = arith.constant dense<0.000000e+00> : vector<16x1536xf32>
    %2 = tpu.matmul %0, %1, %cst {dimension_numbers = #tpu.dot_dimension_numbers<[1], [0], [0], [1], [0, 0, 1, 1], [], []>} : vector<16x384xbf16>, vector<384x1536xbf16>, vector<16x1536xf32> -> vector<16x1536xf32>
    %c0_3 = arith.constant 0 : index
    %c0_4 = arith.constant 0 : index
    %3 = vector.load %arg3[%c0_3, %c0_4] : memref<1x1536xf32, #tpu.memory_space<vmem>>, vector<1x1536xf32>
    %4 = vector.broadcast %3 : vector<1x1536xf32> to vector<16x1536xf32>
    %5 = arith.addf %2, %4 : vector<16x1536xf32>
    %cst_5 = arith.constant 0.000000e+00 : f32
    %6 = vector.broadcast %cst_5 : f32 to vector<16x1536xf32>
    %7 = arith.maximumf %5, %6 : vector<16x1536xf32>
    %8 = arith.truncf %7 : vector<16x1536xf32> to vector<16x1536xbf16>
    %c0_6 = arith.constant 0 : index
    %c0_7 = arith.constant 0 : index
    %9 = vector.load %arg4[%c0_6, %c0_7] : memref<1536x384xbf16, #tpu.memory_space<vmem>>, vector<1536x384xbf16>
    %cst_8 = arith.constant dense<0.000000e+00> : vector<16x384xf32>
    %10 = tpu.matmul %8, %9, %cst_8 {dimension_numbers = #tpu.dot_dimension_numbers<[1], [0], [0], [1], [0, 0, 1, 1], [], []>} : vector<16x1536xbf16>, vector<1536x384xbf16>, vector<16x384xf32> -> vector<16x384xf32>
    %c0_9 = arith.constant 0 : index
    %c0_10 = arith.constant 0 : index
    %11 = vector.load %arg5[%c0_9, %c0_10] : memref<1x384xf32, #tpu.memory_space<vmem>>, vector<1x384xf32>
    %12 = vector.broadcast %11 : vector<1x384xf32> to vector<16x384xf32>
    %13 = arith.addf %10, %12 : vector<16x384xf32>
    %c0_11 = arith.constant 0 : index
    %c0_12 = arith.constant 0 : index
    %14 = vector.load %arg6[%c0_11, %c0_12] : memref<16x384xf32, #tpu.memory_space<vmem>>, vector<16x384xf32>
    tpu.vector_store %arg6[%c0_11, %c0_12], %13 {strides = array<i32>} : memref<16x384xf32, #tpu.memory_space<vmem>>, vector<16x384xf32>,
    return
  }
  func.func @transform_0(%arg0: i32) -> (i32, i32) {
    %c0_i32 = arith.constant 0 : i32
    %c0_i32_0 = arith.constant 0 : i32
    return %arg0, %c0_i32 : i32, i32
  }
  func.func @transform_1(%arg0: i32) -> (i32, i32) {
    %c0_i32 = arith.constant 0 : i32
    %c0_i32_0 = arith.constant 0 : i32
    %c0_i32_1 = arith.constant 0 : i32
    return %c0_i32, %c0_i32_0 : i32, i32
  }
  func.func @transform_2(%arg0: i32) -> (i32, i32) {
    %c0_i32 = arith.constant 0 : i32
    %c0_i32_0 = arith.constant 0 : i32
    %c0_i32_1 = arith.constant 0 : i32
    return %c0_i32, %c0_i32_0 : i32, i32
  }
  func.func @transform_3(%arg0: i32) -> (i32, i32) {
    %c0_i32 = arith.constant 0 : i32
    %c0_i32_0 = arith.constant 0 : i32
    %c0_i32_1 = arith.constant 0 : i32
    return %c0_i32, %c0_i32_0 : i32, i32
  }
  func.func @transform_4(%arg0: i32) -> (i32, i32) {
    %c0_i32 = arith.constant 0 : i32
    %c0_i32_0 = arith.constant 0 : i32
    %c0_i32_1 = arith.constant 0 : i32
    return %c0_i32, %c0_i32_0 : i32, i32
  }
  func.func @transform_5(%arg0: i32) -> (i32, i32) {
    %c0_i32 = arith.constant 0 : i32
    %c0_i32_0 = arith.constant 0 : i32
    return %arg0, %c0_i32 : i32, i32
  }
}

</mosaic_0001>

<llo_original>
// kernel: feed_forward.1
$region0: #{feed_forward.1}
  #allocation0 [shape = 'u32[]', space=smem, size = 0x4, offset = 0x4, fixed_abs, tag = 'smem constant byte address 0x4 - core index']
  #allocation1 [shape = 'u32[144,128]{1,0:T(1,128)}', space=vmem, size = 0x12000, scoped, tag = 'internal scratch']
  %s0 = inlined_call_operand.vmem [shape: bf16[16,384], index: 0, kind: input, shape index: {}]
  %s1 = inlined_call_operand.vmem [shape: bf16[384,1536], index: 1, kind: input, shape index: {}]
  %s2 = inlined_call_operand.vmem [shape: f32[1,1536], index: 2, kind: input, shape index: {}]
  %s3 = inlined_call_operand.vmem [shape: bf16[1536,384], index: 3, kind: input, shape index: {}]
  %s4 = inlined_call_operand.vmem [shape: f32[1,384], index: 4, kind: input, shape index: {}]
  %s5 = inlined_call_operand.hbm [shape: f32[16,384], index: 5, kind: output, shape index: {}]
  %s6 = sld [smem:[#allocation0]]
  $region30: #{feed_forward.1} parent=0
    _
  %s8 = ssub.s32 1, %s6
  %s9 = scalar_select 0, %s8, %s6
  $region1: #{feed_forward.1} parent=0
    #allocation2 [shape = 'u8[24576]{0}', space=vmem, size = 0x6000, scoped, tag = 'output window, operand 0, single buffered']
    #allocation3 [shape = 's32[1]{0}', space=sflag, size = 0x4, scoped, tag = 'scoped memory for feed_forward.1']
    %10 = vsyncpa [#allocation3], 0
    // Predicated region
    $region2: #{feed_forward.1} parent=1 // pred_check
      _
    $region3: #{feed_forward.1} parent=1 // pred_check_branch
      %12 = sbr.rel (0) target = $region5
    $region4: #{feed_forward.1} parent=1 // pred_region
      _
    $region5: #{feed_forward.1} parent=1 // pred_fallthru
      _
    // Predicated region
    $region6: #{feed_forward.1} parent=1 // pred_check
      _
    $region7: #{feed_forward.1} parent=1 // pred_check_branch
      %14 = sbr.rel (0) target = $region9
    $region8: #{feed_forward.1} parent=1 // pred_region
      _
    $region9: #{feed_forward.1} parent=1 // pred_fallthru
      _
    // Predicated region
    $region10: #{feed_forward.1} parent=1 // pred_check
      _
    $region11: #{feed_forward.1} parent=1 // pred_check_branch
      %16 = sbr.rel (0) target = $region13
    $region12: #{feed_forward.1} parent=1 // pred_region
      _
    $region13: #{feed_forward.1} parent=1 // pred_fallthru
      _
    // Predicated region
    $region14: #{feed_forward.1} parent=1 // pred_check
      _
    $region15: #{feed_forward.1} parent=1 // pred_check_branch
      %18 = sbr.rel (0) target = $region17
    $region16: #{feed_forward.1} parent=1 // pred_region
      _
    $region17: #{feed_forward.1} parent=1 // pred_fallthru
      _
    // Predicated region
    $region18: #{feed_forward.1} parent=1 // pred_check
      _
    $region19: #{feed_forward.1} parent=1 // pred_check_branch
      %20 = sbr.rel (0) target = $region21
    $region20: #{feed_forward.1} parent=1 // pred_region
      _
    $region21: #{feed_forward.1} parent=1 // pred_fallthru
      _
    %v22 = vld [vmem:[%s0] sm:$0xff]
    %v23 = vld [vmem:[%s0 + $0x8] sm:$0xf]
    %v24 = vld [vmem:[%s0 + $0xc] sm:$0xff]
    %v25 = vld [vmem:[%s0 + $0x14] sm:$0xf]
    %v26 = vld [vmem:[%s1] sm:$0xff]
    %v27 = vld [vmem:[%s1 + $0x8] sm:$0xff]
    %v28 = vld [vmem:[%s1 + $0x10] sm:$0xff]
    %v29 = vld [vmem:[%s1 + $0x18] sm:$0xff]
    %v30 = vld [vmem:[%s1 + $0x20] sm:$0xff]
    %v31 = vld [vmem:[%s1 + $0x28] sm:$0xff]
    %v32 = vld [vmem:[%s1 + $0x30] sm:$0xff]
    %v33 = vld [vmem:[%s1 + $0x38] sm:$0xff]
    %v34 = vld [vmem:[%s1 + $0x40] sm:$0xff]
    %v35 = vld [vmem:[%s1 + $0x48] sm:$0xff]
    %v36 = vld [vmem:[%s1 + $0x50] sm:$0xff]
    %v37 = vld [vmem:[%s1 + $0x58] sm:$0xff]
    %v38 = vld [vmem:[%s1 + $0x60] sm:$0xff]
    %v39 = vld [vmem:[%s1 + $0x68] sm:$0xff]
    %v40 = vld [vmem:[%s1 + $0x70] sm:$0xff]
    %v41 = vld [vmem:[%s1 + $0x78] sm:$0xff]
    %v42 = vld [vmem:[%s1 + $0x80] sm:$0xff]
    %v43 = vld [vmem:[%s1 + $0x88] sm:$0xff]
    %v44 = vld [vmem:[%s1 + $0x90] sm:$0xff]
    %v45 = vld [vmem:[%s1 + $0x98] sm:$0xff]
    %v46 = vld [vmem:[%s1 + $0xa0] sm:$0xff]
    %v47 = vld [vmem:[%s1 + $0xa8] sm:$0xff]
    %v48 = vld [vmem:[%s1 + $0xb0] sm:$0xff]
    %v49 = vld [vmem:[%s1 + $0xb8] sm:$0xff]
    %v50 = vld [vmem:[%s1 + $0xc0] sm:$0xff]
    %v51 = vld [vmem:[%s1 + $0xc8] sm:$0xff]
    %v52 = vld [vmem:[%s1 + $0xd0] sm:$0xff]
    %v53 = vld [vmem:[%s1 + $0xd8] sm:$0xff]
    %v54 = vld [vmem:[%s1 + $0xe0] sm:$0xff]
    %v55 = vld [vmem:[%s1 + $0xe8] sm:$0xff]
    %v56 = vld [vmem:[%s1 + $0xf0] sm:$0xff]
    %v57 = vld [vmem:[%s1 + $0xf8] sm:$0xff]
    %v58 = vld [vmem:[%s1 + $0x100] sm:$0xff]
    %v59 = vld [vmem:[%s1 + $0x108] sm:$0xff]
    %v60 = vld [vmem:[%s1 + $0x110] sm:$0xff]
    %v61 = vld [vmem:[%s1 + $0x118] sm:$0xff]
    %v62 = vld [vmem:[%s1 + $0x120] sm:$0xff]
    %v63 = vld [vmem:[%s1 + $0x128] sm:$0xff]
    %v64 = vld [vmem:[%s1 + $0x130] sm:$0xff]
    %v65 = vld [vmem:[%s1 + $0x138] sm:$0xff]
    %v66 = vld [vmem:[%s1 + $0x140] sm:$0xff]
    %v67 = vld [vmem:[%s1 + $0x148] sm:$0xff]
    %v68 = vld [vmem:[%s1 + $0x150] sm:$0xff]
    %v69 = vld [vmem:[%s1 + $0x158] sm:$0xff]
    %v70 = vld [vmem:[%s1 + $0x160] sm:$0xff]
    %v71 = vld [vmem:[%s1 + $0x168] sm:$0xff]
    %v72 = vld [vmem:[%s1 + $0x170] sm:$0xff]
    %v73 = vld [vmem:[%s1 + $0x178] sm:$0xff]
    %v74 = vld [vmem:[%s1 + $0x180] sm:$0xff]
    %v75 = vld [vmem:[%s1 + $0x188] sm:$0xff]
    %v76 = vld [vmem:[%s1 + $0x190] sm:$0xff]
    %v77 = vld [vmem:[%s1 + $0x198] sm:$0xff]
    %v78 = vld [vmem:[%s1 + $0x1a0] sm:$0xff]
    %v79 = vld [vmem:[%s1 + $0x1a8] sm:$0xff]
    %v80 = vld [vmem:[%s1 + $0x1b0] sm:$0xff]
    %v81 = vld [vmem:[%s1 + $0x1b8] sm:$0xff]
    %v82 = vld [vmem:[%s1 + $0x1c0] sm:$0xff]
    %v83 = vld [vmem:[%s1 + $0x1c8] sm:$0xff]
    %v84 = vld [vmem:[%s1 + $0x1d0] sm:$0xff]
    %v85 = vld [vmem:[%s1 + $0x1d8] sm:$0xff]
    %v86 = vld [vmem:[%s1 + $0x1e0] sm:$0xff]
    %v87 = vld [vmem:[%s1 + $0x1e8] sm:$0xff]
    %v88 = vld [vmem:[%s1 + $0x1f0] sm:$0xff]
    %v89 = vld [vmem:[%s1 + $0x1f8] sm:$0xff]
    %v90 = vld [vmem:[%s1 + $0x200] sm:$0xff]
    %v91 = vld [vmem:[%s1 + $0x208] sm:$0xff]
    %v92 = vld [vmem:[%s1 + $0x210] sm:$0xff]
    %v93 = vld [vmem:[%s1 + $0x218] sm:$0xff]
    %v94 = vld [vmem:[%s1 + $0x220] sm:$0xff]
    %v95 = vld [vmem:[%s1 + $0x228] sm:$0xff]
    %v96 = vld [vmem:[%s1 + $0x230] sm:$0xff]
    %v97 = vld [vmem:[%s1 + $0x238] sm:$0xff]
    %v98 = vld [vmem:[%s1 + $0x240] sm:$0xff]
    %v99 = vld [vmem:[%s1 + $0x248] sm:$0xff]
    %v100 = vld [vmem:[%s1 + $0x250] sm:$0xff]
    %v101 = vld [vmem:[%s1 + $0x258] sm:$0xff]
    %v102 = vld [vmem:[%s1 + $0x260] sm:$0xff]
    %v103 = vld [vmem:[%s1 + $0x268] sm:$0xff]
    %v104 = vld [vmem:[%s1 + $0x270] sm:$0xff]
    %v105 = vld [vmem:[%s1 + $0x278] sm:$0xff]
    %v106 = vld [vmem:[%s1 + $0x280] sm:$0xff]
    %v107 = vld [vmem:[%s1 + $0x288] sm:$0xff]
    %v108 = vld [vmem:[%s1 + $0x290] sm:$0xff]
    %v109 = vld [vmem:[%s1 + $0x298] sm:$0xff]
    %v110 = vld [vmem:[%s1 + $0x2a0] sm:$0xff]
    %v111 = vld [vmem:[%s1 + $0x2a8] sm:$0xff]
    %v112 = vld [vmem:[%s1 + $0x2b0] sm:$0xff]
    %v113 = vld [vmem:[%s1 + $0x2b8] sm:$0xff]
    %v114 = vld [vmem:[%s1 + $0x2c0] sm:$0xff]
    %v115 = vld [vmem:[%s1 + $0x2c8] sm:$0xff]
    %v116 = vld [vmem:[%s1 + $0x2d0] sm:$0xff]
    %v117 = vld [vmem:[%s1 + $0x2d8] sm:$0xff]
    %v118 = vld [vmem:[%s1 + $0x2e0] sm:$0xff]
    %v119 = vld [vmem:[%s1 + $0x2e8] sm:$0xff]
    %v120 = vld [vmem:[%s1 + $0x2f0] sm:$0xff]
    %v121 = vld [vmem:[%s1 + $0x2f8] sm:$0xff]
    %v122 = vld [vmem:[%s1 + $0x300] sm:$0xff]
    %v123 = vld [vmem:[%s1 + $0x308] sm:$0xff]
    %v124 = vld [vmem:[%s1 + $0x310] sm:$0xff]
    %v125 = vld [vmem:[%s1 + $0x318] sm:$0xff]
    %v126 = vld [vmem:[%s1 + $0x320] sm:$0xff]
    %v127 = vld [vmem:[%s1 + $0x328] sm:$0xff]
    %v128 = vld [vmem:[%s1 + $0x330] sm:$0xff]
    %v129 = vld [vmem:[%s1 + $0x338] sm:$0xff]
    %v130 = vld [vmem:[%s1 + $0x340] sm:$0xff]
    %v131 = vld [vmem:[%s1 + $0x348] sm:$0xff]
    %v132 = vld [vmem:[%s1 + $0x350] sm:$0xff]
    %v133 = vld [vmem:[%s1 + $0x358] sm:$0xff]
    %v134 = vld [vmem:[%s1 + $0x360] sm:$0xff]
    %v135 = vld [vmem:[%s1 + $0x368] sm:$0xff]
    %v136 = vld [vmem:[%s1 + $0x370] sm:$0xff]
    %v137 = vld [vmem:[%s1 + $0x378] sm:$0xff]
    %v138 = vld [vmem:[%s1 + $0x380] sm:$0xff]
    %v139 = vld [vmem:[%s1 + $0x388] sm:$0xff]
    %v140 = vld [vmem:[%s1 + $0x390] sm:$0xff]
    %v141 = vld [vmem:[%s1 + $0x398] sm:$0xff]
    %v142 = vld [vmem:[%s1 + $0x3a0] sm:$0xff]
    %v143 = vld [vmem:[%s1 + $0x3a8] sm:$0xff]
    %v144 = vld [vmem:[%s1 + $0x3b0] sm:$0xff]
    %v145 = vld [vmem:[%s1 + $0x3b8] sm:$0xff]
    %v146 = vld [vmem:[%s1 + $0x3c0] sm:$0xff]
    %v147 = vld [vmem:[%s1 + $0x3c8] sm:$0xff]
    %v148 = vld [vmem:[%s1 + $0x3d0] sm:$0xff]
    %v149 = vld [vmem:[%s1 + $0x3d8] sm:$0xff]
    %v150 = vld [vmem:[%s1 + $0x3e0] sm:$0xff]
    %v151 = vld [vmem:[%s1 + $0x3e8] sm:$0xff]
    %v152 = vld [vmem:[%s1 + $0x3f0] sm:$0xff]
    %v153 = vld [vmem:[%s1 + $0x3f8] sm:$0xff]
    %v154 = vld [vmem:[%s1 + $0x400] sm:$0xff]
    %v155 = vld [vmem:[%s1 + $0x408] sm:$0xff]
    %v156 = vld [vmem:[%s1 + $0x410] sm:$0xff]
    %v157 = vld [vmem:[%s1 + $0x418] sm:$0xff]
    %v158 = vld [vmem:[%s1 + $0x420] sm:$0xff]
    %v159 = vld [vmem:[%s1 + $0x428] sm:$0xff]
    %v160 = vld [vmem:[%s1 + $0x430] sm:$0xff]
    %v161 = vld [vmem:[%s1 + $0x438] sm:$0xff]
    %v162 = vld [vmem:[%s1 + $0x440] sm:$0xff]
    %v163 = vld [vmem:[%s1 + $0x448] sm:$0xff]
    %v164 = vld [vmem:[%s1 + $0x450] sm:$0xff]
    %v165 = vld [vmem:[%s1 + $0x458] sm:$0xff]
    %v166 = vld [vmem:[%s1 + $0x460] sm:$0xff]
    %v167 = vld [vmem:[%s1 + $0x468] sm:$0xff]
    %v168 = vld [vmem:[%s1 + $0x470] sm:$0xff]
    %v169 = vld [vmem:[%s1 + $0x478] sm:$0xff]
    %v170 = vld [vmem:[%s1 + $0x480] sm:$0xff]
    %v171 = vld [vmem:[%s1 + $0x488] sm:$0xff]
    %v172 = vld [vmem:[%s1 + $0x490] sm:$0xff]
    %v173 = vld [vmem:[%s1 + $0x498] sm:$0xff]
    %v174 = vld [vmem:[%s1 + $0x4a0] sm:$0xff]
    %v175 = vld [vmem:[%s1 + $0x4a8] sm:$0xff]
    %v176 = vld [vmem:[%s1 + $0x4b0] sm:$0xff]
    %v177 = vld [vmem:[%s1 + $0x4b8] sm:$0xff]
    %v178 = vld [vmem:[%s1 + $0x4c0] sm:$0xff]
    %v179 = vld [vmem:[%s1 + $0x4c8] sm:$0xff]
    %v180 = vld [vmem:[%s1 + $0x4d0] sm:$0xff]
    %v181 = vld [vmem:[%s1 + $0x4d8] sm:$0xff]
    %v182 = vld [vmem:[%s1 + $0x4e0] sm:$0xff]
    %v183 = vld [vmem:[%s1 + $0x4e8] sm:$0xff]
    %v184 = vld [vmem:[%s1 + $0x4f0] sm:$0xff]
    %v185 = vld [vmem:[%s1 + $0x4f8] sm:$0xff]
    %v186 = vld [vmem:[%s1 + $0x500] sm:$0xff]
    %v187 = vld [vmem:[%s1 + $0x508] sm:$0xff]
    %v188 = vld [vmem:[%s1 + $0x510] sm:$0xff]
    %v189 = vld [vmem:[%s1 + $0x518] sm:$0xff]
    %v190 = vld [vmem:[%s1 + $0x520] sm:$0xff]
    %v191 = vld [vmem:[%s1 + $0x528] sm:$0xff]
    %v192 = vld [vmem:[%s1 + $0x530] sm:$0xff]
    %v193 = vld [vmem:[%s1 + $0x538] sm:$0xff]
    %v194 = vld [vmem:[%s1 + $0x540] sm:$0xff]
    %v195 = vld [vmem:[%s1 + $0x548] sm:$0xff]
    %v196 = vld [vmem:[%s1 + $0x550] sm:$0xff]
    %v197 = vld [vmem:[%s1 + $0x558] sm:$0xff]
    %v198 = vld [vmem:[%s1 + $0x560] sm:$0xff]
    %v199 = vld [vmem:[%s1 + $0x568] sm:$0xff]
    %v200 = vld [vmem:[%s1 + $0x570] sm:$0xff]
    %v201 = vld [vmem:[%s1 + $0x578] sm:$0xff]
    %v202 = vld [vmem:[%s1 + $0x580] sm:$0xff]
    %v203 = vld [vmem:[%s1 + $0x588] sm:$0xff]
    %v204 = vld [vmem:[%s1 + $0x590] sm:$0xff]
    %v205 = vld [vmem:[%s1 + $0x598] sm:$0xff]
    %v206 = vld [vmem:[%s1 + $0x5a0] sm:$0xff]
    %v207 = vld [vmem:[%s1 + $0x5a8] sm:$0xff]
    %v208 = vld [vmem:[%s1 + $0x5b0] sm:$0xff]
    %v209 = vld [vmem:[%s1 + $0x5b8] sm:$0xff]
    %v210 = vld [vmem:[%s1 + $0x5c0] sm:$0xff]
    %v211 = vld [vmem:[%s1 + $0x5c8] sm:$0xff]
    %v212 = vld [vmem:[%s1 + $0x5d0] sm:$0xff]
    %v213 = vld [vmem:[%s1 + $0x5d8] sm:$0xff]
    %v214 = vld [vmem:[%s1 + $0x5e0] sm:$0xff]
    %v215 = vld [vmem:[%s1 + $0x5e8] sm:$0xff]
    %v216 = vld [vmem:[%s1 + $0x5f0] sm:$0xff]
    %v217 = vld [vmem:[%s1 + $0x5f8] sm:$0xff]
    %v218 = vld [vmem:[%s1 + $0x600] sm:$0xff]
    %v219 = vld [vmem:[%s1 + $0x608] sm:$0xff]
    %v220 = vld [vmem:[%s1 + $0x610] sm:$0xff]
    %v221 = vld [vmem:[%s1 + $0x618] sm:$0xff]
    %v222 = vld [vmem:[%s1 + $0x620] sm:$0xff]
    %v223 = vld [vmem:[%s1 + $0x628] sm:$0xff]
    %v224 = vld [vmem:[%s1 + $0x630] sm:$0xff]
    %v225 = vld [vmem:[%s1 + $0x638] sm:$0xff]
    %v226 = vld [vmem:[%s1 + $0x640] sm:$0xff]
    %v227 = vld [vmem:[%s1 + $0x648] sm:$0xff]
    %v228 = vld [vmem:[%s1 + $0x650] sm:$0xff]
    %v229 = vld [vmem:[%s1 + $0x658] sm:$0xff]
    %v230 = vld [vmem:[%s1 + $0x660] sm:$0xff]
    %v231 = vld [vmem:[%s1 + $0x668] sm:$0xff]
    %v232 = vld [vmem:[%s1 + $0x670] sm:$0xff]
    %v233 = vld [vmem:[%s1 + $0x678] sm:$0xff]
    %v234 = vld [vmem:[%s1 + $0x680] sm:$0xff]
    %v235 = vld [vmem:[%s1 + $0x688] sm:$0xff]
    %v236 = vld [vmem:[%s1 + $0x690] sm:$0xff]
    %v237 = vld [vmem:[%s1 + $0x698] sm:$0xff]
    %v238 = vld [vmem:[%s1 + $0x6a0] sm:$0xff]
    %v239 = vld [vmem:[%s1 + $0x6a8] sm:$0xff]
    %v240 = vld [vmem:[%s1 + $0x6b0] sm:$0xff]
    %v241 = vld [vmem:[%s1 + $0x6b8] sm:$0xff]
    %v242 = vld [vmem:[%s1 + $0x6c0] sm:$0xff]
    %v243 = vld [vmem:[%s1 + $0x6c8] sm:$0xff]
    %v244 = vld [vmem:[%s1 + $0x6d0] sm:$0xff]
    %v245 = vld [vmem:[%s1 + $0x6d8] sm:$0xff]
    %v246 = vld [vmem:[%s1 + $0x6e0] sm:$0xff]
    %v247 = vld [vmem:[%s1 + $0x6e8] sm:$0xff]
    %v248 = vld [vmem:[%s1 + $0x6f0] sm:$0xff]
    %v249 = vld [vmem:[%s1 + $0x6f8] sm:$0xff]
    %v250 = vld [vmem:[%s1 + $0x700] sm:$0xff]
    %v251 = vld [vmem:[%s1 + $0x708] sm:$0xff]
    %v252 = vld [vmem:[%s1 + $0x710] sm:$0xff]
    %v253 = vld [vmem:[%s1 + $0x718] sm:$0xff]
    %v254 = vld [vmem:[%s1 + $0x720] sm:$0xff]
    %v255 = vld [vmem:[%s1 + $0x728] sm:$0xff]
    %v256 = vld [vmem:[%s1 + $0x730] sm:$0xff]
    %v257 = vld [vmem:[%s1 + $0x738] sm:$0xff]
    %v258 = vld [vmem:[%s1 + $0x740] sm:$0xff]
    %v259 = vld [vmem:[%s1 + $0x748] sm:$0xff]
    %v260 = vld [vmem:[%s1 + $0x750] sm:$0xff]
    %v261 = vld [vmem:[%s1 + $0x758] sm:$0xff]
    %v262 = vld [vmem:[%s1 + $0x760] sm:$0xff]
    %v263 = vld [vmem:[%s1 + $0x768] sm:$0xff]
    %v264 = vld [vmem:[%s1 + $0x770] sm:$0xff]
    %v265 = vld [vmem:[%s1 + $0x778] sm:$0xff]
    %v266 = vld [vmem:[%s1 + $0x780] sm:$0xff]
    %v267 = vld [vmem:[%s1 + $0x788] sm:$0xff]
    %v268 = vld [vmem:[%s1 + $0x790] sm:$0xff]
    %v269 = vld [vmem:[%s1 + $0x798] sm:$0xff]
    %v270 = vld [vmem:[%s1 + $0x7a0] sm:$0xff]
    %v271 = vld [vmem:[%s1 + $0x7a8] sm:$0xff]
    %v272 = vld [vmem:[%s1 + $0x7b0] sm:$0xff]
    %v273 = vld [vmem:[%s1 + $0x7b8] sm:$0xff]
    %v274 = vld [vmem:[%s1 + $0x7c0] sm:$0xff]
    %v275 = vld [vmem:[%s1 + $0x7c8] sm:$0xff]
    %v276 = vld [vmem:[%s1 + $0x7d0] sm:$0xff]
    %v277 = vld [vmem:[%s1 + $0x7d8] sm:$0xff]
    %v278 = vld [vmem:[%s1 + $0x7e0] sm:$0xff]
    %v279 = vld [vmem:[%s1 + $0x7e8] sm:$0xff]
    %v280 = vld [vmem:[%s1 + $0x7f0] sm:$0xff]
    %v281 = vld [vmem:[%s1 + $0x7f8] sm:$0xff]
    %v282 = vld [vmem:[%s1 + $0x800] sm:$0xff]
    %v283 = vld [vmem:[%s1 + $0x808] sm:$0xff]
    %v284 = vld [vmem:[%s1 + $0x810] sm:$0xff]
    %v285 = vld [vmem:[%s1 + $0x818] sm:$0xff]
    %v286 = vld [vmem:[%s1 + $0x820] sm:$0xff]
    %v287 = vld [vmem:[%s1 + $0x828] sm:$0xff]
    %v288 = vld [vmem:[%s1 + $0x830] sm:$0xff]
    %v289 = vld [vmem:[%s1 + $0x838] sm:$0xff]
    %v290 = vld [vmem:[%s1 + $0x840] sm:$0xff]
    %v291 = vld [vmem:[%s1 + $0x848] sm:$0xff]
    %v292 = vld [vmem:[%s1 + $0x850] sm:$0xff]
    %v293 = vld [vmem:[%s1 + $0x858] sm:$0xff]
    %v294 = vld [vmem:[%s1 + $0x860] sm:$0xff]
    %v295 = vld [vmem:[%s1 + $0x868] sm:$0xff]
    %v296 = vld [vmem:[%s1 + $0x870] sm:$0xff]
    %v297 = vld [vmem:[%s1 + $0x878] sm:$0xff]
    %v298 = vld [vmem:[%s1 + $0x880] sm:$0xff]
    %v299 = vld [vmem:[%s1 + $0x888] sm:$0xff]
    %v300 = vld [vmem:[%s1 + $0x890] sm:$0xff]
    %v301 = vld [vmem:[%s1 + $0x898] sm:$0xff]
    %v302 = vld [vmem:[%s1 + $0x8a0] sm:$0xff]
    %v303 = vld [vmem:[%s1 + $0x8a8] sm:$0xff]
    %v304 = vld [vmem:[%s1 + $0x8b0] sm:$0xff]
    %v305 = vld [vmem:[%s1 + $0x8b8] sm:$0xff]
    %v306 = vld [vmem:[%s1 + $0x8c0] sm:$0xff]
    %v307 = vld [vmem:[%s1 + $0x8c8] sm:$0xff]
    %v308 = vld [vmem:[%s1 + $0x8d0] sm:$0xff]
    %v309 = vld [vmem:[%s1 + $0x8d8] sm:$0xff]
    %v310 = vld [vmem:[%s1 + $0x8e0] sm:$0xff]
    %v311 = vld [vmem:[%s1 + $0x8e8] sm:$0xff]
    %v312 = vld [vmem:[%s1 + $0x8f0] sm:$0xff]
    %v313 = vld [vmem:[%s1 + $0x8f8] sm:$0xff]
    %v314 = vld [vmem:[%s2] sm:$0xff]
    %v315 = vld [vmem:[%s2 + $0x8] sm:$0xf]
    %v318 = vlaneseq
    %v319 = vshrl.u32 %v318, 7
    %v320 = vsub.s32 0, %v319
    %v321 = vrot.slane %v314, %v320
    %v322 = vlaneseq
    %v323 = vshrl.u32 %v322, 7
    %v324 = vsub.s32 1, %v323
    %v325 = vrot.slane %v314, %v324
    %v326 = vlaneseq
    %v327 = vshrl.u32 %v326, 7
    %v328 = vsub.s32 2, %v327
    %v329 = vrot.slane %v314, %v328
    %v330 = vlaneseq
    %v331 = vshrl.u32 %v330, 7
    %v332 = vsub.s32 3, %v331
    %v333 = vrot.slane %v314, %v332
    %v334 = vlaneseq
    %v335 = vshrl.u32 %v334, 7
    %v336 = vsub.s32 4, %v335
    %v337 = vrot.slane %v314, %v336
    %v338 = vlaneseq
    %v339 = vshrl.u32 %v338, 7
    %v340 = vsub.s32 5, %v339
    %v341 = vrot.slane %v314, %v340
    %v342 = vlaneseq
    %v343 = vshrl.u32 %v342, 7
    %v344 = vsub.s32 6, %v343
    %v345 = vrot.slane %v314, %v344
    %v346 = vlaneseq
    %v347 = vshrl.u32 %v346, 7
    %v348 = vsub.s32 7, %v347
    %v349 = vrot.slane %v314, %v348
    %v350 = vlaneseq
    %v351 = vshrl.u32 %v350, 7
    %v352 = vsub.s32 0, %v351
    %v353 = vrot.slane %v315, %v352
    %v354 = vlaneseq
    %v355 = vshrl.u32 %v354, 7
    %v356 = vsub.s32 1, %v355
    %v357 = vrot.slane %v315, %v356
    %v358 = vlaneseq
    %v359 = vshrl.u32 %v358, 7
    %v360 = vsub.s32 2, %v359
    %v361 = vrot.slane %v315, %v360
    %v362 = vlaneseq
    %v363 = vshrl.u32 %v362, 7
    %v364 = vsub.s32 3, %v363
    %v365 = vrot.slane %v315, %v364
    %v382 = vunpack.c.l.b16 %v22
    %v383 = vunpack.c.h.b16 %v22
    %v384 = vunpack.c.l.b16 %v23
    %v385 = vunpack.c.l.b16 %v24
    %v386 = vunpack.c.h.b16 %v24
    %v387 = vunpack.c.l.b16 %v25
    %v388 = vpack.c.b16 %v385, %v382
    %v389 = vpack.c.b16 %v386, %v383
    %v390 = vpack.c.b16 %v387, %v384
    %v682 = vunpack.c.l.b16 %v26
    %v683 = vunpack.c.h.b16 %v26
    %v684 = vunpack.c.l.b16 %v27
    %v685 = vunpack.c.h.b16 %v27
    %v686 = vunpack.c.l.b16 %v28
    %v687 = vunpack.c.h.b16 %v28
    %v688 = vunpack.c.l.b16 %v29
    %v689 = vunpack.c.h.b16 %v29
    %v690 = vunpack.c.l.b16 %v30
    %v691 = vunpack.c.h.b16 %v30
    %v692 = vunpack.c.l.b16 %v31
    %v693 = vunpack.c.h.b16 %v31
    %v694 = vunpack.c.l.b16 %v32
    %v695 = vunpack.c.h.b16 %v32
    %v696 = vunpack.c.l.b16 %v33
    %v697 = vunpack.c.h.b16 %v33
    %v698 = vunpack.c.l.b16 %v34
    %v699 = vunpack.c.h.b16 %v34
    %v700 = vunpack.c.l.b16 %v35
    %v701 = vunpack.c.h.b16 %v35
    %v702 = vunpack.c.l.b16 %v36
    %v703 = vunpack.c.h.b16 %v36
    %v704 = vunpack.c.l.b16 %v37
    %v705 = vunpack.c.h.b16 %v37
    %v706 = vunpack.c.l.b16 %v38
    %v707 = vunpack.c.h.b16 %v38
    %v708 = vunpack.c.l.b16 %v39
    %v709 = vunpack.c.h.b16 %v39
    %v710 = vunpack.c.l.b16 %v40
    %v711 = vunpack.c.h.b16 %v40
    %v712 = vunpack.c.l.b16 %v41
    %v713 = vunpack.c.h.b16 %v41
    %v714 = vunpack.c.l.b16 %v42
    %v715 = vunpack.c.h.b16 %v42
    %v716 = vunpack.c.l.b16 %v43
    %v717 = vunpack.c.h.b16 %v43
    %v718 = vunpack.c.l.b16 %v44
    %v719 = vunpack.c.h.b16 %v44
    %v720 = vunpack.c.l.b16 %v45
    %v721 = vunpack.c.h.b16 %v45
    %v722 = vunpack.c.l.b16 %v46
    %v723 = vunpack.c.h.b16 %v46
    %v724 = vunpack.c.l.b16 %v47
    %v725 = vunpack.c.h.b16 %v47
    %v726 = vunpack.c.l.b16 %v48
    %v727 = vunpack.c.h.b16 %v48
    %v728 = vunpack.c.l.b16 %v49
    %v729 = vunpack.c.h.b16 %v49
    %v730 = vunpack.c.l.b16 %v50
    %v731 = vunpack.c.h.b16 %v50
    %v732 = vunpack.c.l.b16 %v51
    %v733 = vunpack.c.h.b16 %v51
    %v734 = vunpack.c.l.b16 %v52
    %v735 = vunpack.c.h.b16 %v52
    %v736 = vunpack.c.l.b16 %v53
    %v737 = vunpack.c.h.b16 %v53
    %v738 = vunpack.c.l.b16 %v54
    %v739 = vunpack.c.h.b16 %v54
    %v740 = vunpack.c.l.b16 %v55
    %v741 = vunpack.c.h.b16 %v55
    %v742 = vunpack.c.l.b16 %v56
    %v743 = vunpack.c.h.b16 %v56
    %v744 = vunpack.c.l.b16 %v57
    %v745 = vunpack.c.h.b16 %v57
    %v746 = vunpack.c.l.b16 %v58
    %v747 = vunpack.c.h.b16 %v58
    %v748 = vunpack.c.l.b16 %v59
    %v749 = vunpack.c.h.b16 %v59
    %v750 = vunpack.c.l.b16 %v60
    %v751 = vunpack.c.h.b16 %v60
    %v752 = vunpack.c.l.b16 %v61
    %v753 = vunpack.c.h.b16 %v61
    %v754 = vunpack.c.l.b16 %v62
    %v755 = vunpack.c.h.b16 %v62
    %v756 = vunpack.c.l.b16 %v63
    %v757 = vunpack.c.h.b16 %v63
    %v758 = vunpack.c.l.b16 %v64
    %v759 = vunpack.c.h.b16 %v64
    %v760 = vunpack.c.l.b16 %v65
    %v761 = vunpack.c.h.b16 %v65
    %v762 = vunpack.c.l.b16 %v66
    %v763 = vunpack.c.h.b16 %v66
    %v764 = vunpack.c.l.b16 %v67
    %v765 = vunpack.c.h.b16 %v67
    %v766 = vunpack.c.l.b16 %v68
    %v767 = vunpack.c.h.b16 %v68
    %v768 = vunpack.c.l.b16 %v69
    %v769 = vunpack.c.h.b16 %v69
    %v770 = vunpack.c.l.b16 %v70
    %v771 = vunpack.c.h.b16 %v70
    %v772 = vunpack.c.l.b16 %v71
    %v773 = vunpack.c.h.b16 %v71
    %v774 = vunpack.c.l.b16 %v72
    %v775 = vunpack.c.h.b16 %v72
    %v776 = vunpack.c.l.b16 %v73
    %v777 = vunpack.c.h.b16 %v73
    %v778 = vunpack.c.l.b16 %v74
    %v779 = vunpack.c.h.b16 %v74
    %v780 = vunpack.c.l.b16 %v75
    %v781 = vunpack.c.h.b16 %v75
    %v782 = vunpack.c.l.b16 %v76
    %v783 = vunpack.c.h.b16 %v76
    %v784 = vunpack.c.l.b16 %v77
    %v785 = vunpack.c.h.b16 %v77
    %v786 = vunpack.c.l.b16 %v78
    %v787 = vunpack.c.h.b16 %v78
    %v788 = vunpack.c.l.b16 %v79
    %v789 = vunpack.c.h.b16 %v79
    %v790 = vunpack.c.l.b16 %v80
    %v791 = vunpack.c.h.b16 %v80
    %v792 = vunpack.c.l.b16 %v81
    %v793 = vunpack.c.h.b16 %v81
    %v794 = vunpack.c.l.b16 %v82
    %v795 = vunpack.c.h.b16 %v82
    %v796 = vunpack.c.l.b16 %v83
    %v797 = vunpack.c.h.b16 %v83
    %v798 = vunpack.c.l.b16 %v84
    %v799 = vunpack.c.h.b16 %v84
    %v800 = vunpack.c.l.b16 %v85
    %v801 = vunpack.c.h.b16 %v85
    %v802 = vunpack.c.l.b16 %v86
    %v803 = vunpack.c.h.b16 %v86
    %v804 = vunpack.c.l.b16 %v87
    %v805 = vunpack.c.h.b16 %v87
    %v806 = vunpack.c.l.b16 %v88
    %v807 = vunpack.c.h.b16 %v88
    %v808 = vunpack.c.l.b16 %v89
    %v809 = vunpack.c.h.b16 %v89
    %v810 = vunpack.c.l.b16 %v90
    %v811 = vunpack.c.h.b16 %v90
    %v812 = vunpack.c.l.b16 %v91
    %v813 = vunpack.c.h.b16 %v91
    %v814 = vunpack.c.l.b16 %v92
    %v815 = vunpack.c.h.b16 %v92
    %v816 = vunpack.c.l.b16 %v93
    %v817 = vunpack.c.h.b16 %v93
    %v818 = vunpack.c.l.b16 %v94
    %v819 = vunpack.c.h.b16 %v94
    %v820 = vunpack.c.l.b16 %v95
    %v821 = vunpack.c.h.b16 %v95
    %v822 = vunpack.c.l.b16 %v96
    %v823 = vunpack.c.h.b16 %v96
    %v824 = vunpack.c.l.b16 %v97
    %v825 = vunpack.c.h.b16 %v97
    %v826 = vunpack.c.l.b16 %v98
    %v827 = vunpack.c.h.b16 %v98
    %v828 = vunpack.c.l.b16 %v99
    %v829 = vunpack.c.h.b16 %v99
    %v830 = vunpack.c.l.b16 %v100
    %v831 = vunpack.c.h.b16 %v100
    %v832 = vunpack.c.l.b16 %v101
    %v833 = vunpack.c.h.b16 %v101
    %v834 = vunpack.c.l.b16 %v102
    %v835 = vunpack.c.h.b16 %v102
    %v836 = vunpack.c.l.b16 %v103
    %v837 = vunpack.c.h.b16 %v103
    %v838 = vunpack.c.l.b16 %v104
    %v839 = vunpack.c.h.b16 %v104
    %v840 = vunpack.c.l.b16 %v105
    %v841 = vunpack.c.h.b16 %v105
    %v842 = vunpack.c.l.b16 %v106
    %v843 = vunpack.c.h.b16 %v106
    %v844 = vunpack.c.l.b16 %v107
    %v845 = vunpack.c.h.b16 %v107
    %v846 = vunpack.c.l.b16 %v108
    %v847 = vunpack.c.h.b16 %v108
    %v848 = vunpack.c.l.b16 %v109
    %v849 = vunpack.c.h.b16 %v109
    %v850 = vunpack.c.l.b16 %v110
    %v851 = vunpack.c.h.b16 %v110
    %v852 = vunpack.c.l.b16 %v111
    %v853 = vunpack.c.h.b16 %v111
    %v854 = vunpack.c.l.b16 %v112
    %v855 = vunpack.c.h.b16 %v112
    %v856 = vunpack.c.l.b16 %v113
    %v857 = vunpack.c.h.b16 %v113
    %v858 = vunpack.c.l.b16 %v114
    %v859 = vunpack.c.h.b16 %v114
    %v860 = vunpack.c.l.b16 %v115
    %v861 = vunpack.c.h.b16 %v115
    %v862 = vunpack.c.l.b16 %v116
    %v863 = vunpack.c.h.b16 %v116
    %v864 = vunpack.c.l.b16 %v117
    %v865 = vunpack.c.h.b16 %v117
    %v866 = vunpack.c.l.b16 %v118
    %v867 = vunpack.c.h.b16 %v118
    %v868 = vunpack.c.l.b16 %v119
    %v869 = vunpack.c.h.b16 %v119
    %v870 = vunpack.c.l.b16 %v120
    %v871 = vunpack.c.h.b16 %v120
    %v872 = vunpack.c.l.b16 %v121
    %v873 = vunpack.c.h.b16 %v121
    %v874 = vunpack.c.l.b16 %v122
    %v875 = vunpack.c.h.b16 %v122
    %v876 = vunpack.c.l.b16 %v123
    %v877 = vunpack.c.h.b16 %v123
    %v878 = vunpack.c.l.b16 %v124
    %v879 = vunpack.c.h.b16 %v124
    %v880 = vunpack.c.l.b16 %v125
    %v881 = vunpack.c.h.b16 %v125
    %v882 = vunpack.c.l.b16 %v126
    %v883 = vunpack.c.h.b16 %v126
    %v884 = vunpack.c.l.b16 %v127
    %v885 = vunpack.c.h.b16 %v127
    %v886 = vunpack.c.l.b16 %v128
    %v887 = vunpack.c.h.b16 %v128
    %v888 = vunpack.c.l.b16 %v129
    %v889 = vunpack.c.h.b16 %v129
    %v890 = vunpack.c.l.b16 %v130
    %v891 = vunpack.c.h.b16 %v130
    %v892 = vunpack.c.l.b16 %v131
    %v893 = vunpack.c.h.b16 %v131
    %v894 = vunpack.c.l.b16 %v132
    %v895 = vunpack.c.h.b16 %v132
    %v896 = vunpack.c.l.b16 %v133
    %v897 = vunpack.c.h.b16 %v133
    %v898 = vunpack.c.l.b16 %v134
    %v899 = vunpack.c.h.b16 %v134
    %v900 = vunpack.c.l.b16 %v135
    %v901 = vunpack.c.h.b16 %v135
    %v902 = vunpack.c.l.b16 %v136
    %v903 = vunpack.c.h.b16 %v136
    %v904 = vunpack.c.l.b16 %v137
    %v905 = vunpack.c.h.b16 %v137
    %v906 = vunpack.c.l.b16 %v138
    %v907 = vunpack.c.h.b16 %v138
    %v908 = vunpack.c.l.b16 %v139
    %v909 = vunpack.c.h.b16 %v139
    %v910 = vunpack.c.l.b16 %v140
    %v911 = vunpack.c.h.b16 %v140
    %v912 = vunpack.c.l.b16 %v141
    %v913 = vunpack.c.h.b16 %v141
    %v914 = vunpack.c.l.b16 %v142
    %v915 = vunpack.c.h.b16 %v142
    %v916 = vunpack.c.l.b16 %v143
    %v917 = vunpack.c.h.b16 %v143
    %v918 = vunpack.c.l.b16 %v144
    %v919 = vunpack.c.h.b16 %v144
    %v920 = vunpack.c.l.b16 %v145
    %v921 = vunpack.c.h.b16 %v145
    %v922 = vunpack.c.l.b16 %v146
    %v923 = vunpack.c.h.b16 %v146
    %v924 = vunpack.c.l.b16 %v147
    %v925 = vunpack.c.h.b16 %v147
    %v926 = vunpack.c.l.b16 %v148
    %v927 = vunpack.c.h.b16 %v148
    %v928 = vunpack.c.l.b16 %v149
    %v929 = vunpack.c.h.b16 %v149
    %v930 = vunpack.c.l.b16 %v150
    %v931 = vunpack.c.h.b16 %v150
    %v932 = vunpack.c.l.b16 %v151
    %v933 = vunpack.c.h.b16 %v151
    %v934 = vunpack.c.l.b16 %v152
    %v935 = vunpack.c.h.b16 %v152
    %v936 = vunpack.c.l.b16 %v153
    %v937 = vunpack.c.h.b16 %v153
    %v938 = vunpack.c.l.b16 %v154
    %v939 = vunpack.c.h.b16 %v154
    %v940 = vunpack.c.l.b16 %v155
    %v941 = vunpack.c.h.b16 %v155
    %v942 = vunpack.c.l.b16 %v156
    %v943 = vunpack.c.h.b16 %v156
    %v944 = vunpack.c.l.b16 %v157
    %v945 = vunpack.c.h.b16 %v157
    %v946 = vunpack.c.l.b16 %v158
    %v947 = vunpack.c.h.b16 %v158
    %v948 = vunpack.c.l.b16 %v159
    %v949 = vunpack.c.h.b16 %v159
    %v950 = vunpack.c.l.b16 %v160
    %v951 = vunpack.c.h.b16 %v160
    %v952 = vunpack.c.l.b16 %v161
    %v953 = vunpack.c.h.b16 %v161
    %v954 = vunpack.c.l.b16 %v162
    %v955 = vunpack.c.h.b16 %v162
    %v956 = vunpack.c.l.b16 %v163
    %v957 = vunpack.c.h.b16 %v163
    %v958 = vunpack.c.l.b16 %v164
    %v959 = vunpack.c.h.b16 %v164
    %v960 = vunpack.c.l.b16 %v165
    %v961 = vunpack.c.h.b16 %v165
    %v962 = vunpack.c.l.b16 %v166
    %v963 = vunpack.c.h.b16 %v166
    %v964 = vunpack.c.l.b16 %v167
    %v965 = vunpack.c.h.b16 %v167
    %v966 = vunpack.c.l.b16 %v168
    %v967 = vunpack.c.h.b16 %v168
    %v968 = vunpack.c.l.b16 %v169
    %v969 = vunpack.c.h.b16 %v169
    %v970 = vunpack.c.l.b16 %v170
    %v971 = vunpack.c.h.b16 %v170
    %v972 = vunpack.c.l.b16 %v171
    %v973 = vunpack.c.h.b16 %v171
    %v974 = vunpack.c.l.b16 %v172
    %v975 = vunpack.c.h.b16 %v172
    %v976 = vunpack.c.l.b16 %v173
    %v977 = vunpack.c.h.b16 %v173
    %v978 = vunpack.c.l.b16 %v174
    %v979 = vunpack.c.h.b16 %v174
    %v980 = vunpack.c.l.b16 %v175
    %v981 = vunpack.c.h.b16 %v175
    %v982 = vunpack.c.l.b16 %v176
    %v983 = vunpack.c.h.b16 %v176
    %v984 = vunpack.c.l.b16 %v177
    %v985 = vunpack.c.h.b16 %v177
    %v986 = vunpack.c.l.b16 %v178
    %v987 = vunpack.c.h.b16 %v178
    %v988 = vunpack.c.l.b16 %v179
    %v989 = vunpack.c.h.b16 %v179
    %v990 = vunpack.c.l.b16 %v180
    %v991 = vunpack.c.h.b16 %v180
    %v992 = vunpack.c.l.b16 %v181
    %v993 = vunpack.c.h.b16 %v181
    %v994 = vunpack.c.l.b16 %v182
    %v995 = vunpack.c.h.b16 %v182
    %v996 = vunpack.c.l.b16 %v183
    %v997 = vunpack.c.h.b16 %v183
    %v998 = vunpack.c.l.b16 %v184
    %v999 = vunpack.c.h.b16 %v184
    %v1000 = vunpack.c.l.b16 %v185
    %v1001 = vunpack.c.h.b16 %v185
    %v1002 = vunpack.c.l.b16 %v186
    %v1003 = vunpack.c.h.b16 %v186
    %v1004 = vunpack.c.l.b16 %v187
    %v1005 = vunpack.c.h.b16 %v187
    %v1006 = vunpack.c.l.b16 %v188
    %v1007 = vunpack.c.h.b16 %v188
    %v1008 = vunpack.c.l.b16 %v189
    %v1009 = vunpack.c.h.b16 %v189
    %v1010 = vunpack.c.l.b16 %v190
    %v1011 = vunpack.c.h.b16 %v190
    %v1012 = vunpack.c.l.b16 %v191
    %v1013 = vunpack.c.h.b16 %v191
    %v1014 = vunpack.c.l.b16 %v192
    %v1015 = vunpack.c.h.b16 %v192
    %v1016 = vunpack.c.l.b16 %v193
    %v1017 = vunpack.c.h.b16 %v193
    %v1018 = vunpack.c.l.b16 %v194
    %v1019 = vunpack.c.h.b16 %v194
    %v1020 = vunpack.c.l.b16 %v195
    %v1021 = vunpack.c.h.b16 %v195
    %v1022 = vunpack.c.l.b16 %v196
    %v1023 = vunpack.c.h.b16 %v196
    %v1024 = vunpack.c.l.b16 %v197
    %v1025 = vunpack.c.h.b16 %v197
    %v1026 = vunpack.c.l.b16 %v198
    %v1027 = vunpack.c.h.b16 %v198
    %v1028 = vunpack.c.l.b16 %v199
    %v1029 = vunpack.c.h.b16 %v199
    %v1030 = vunpack.c.l.b16 %v200
    %v1031 = vunpack.c.h.b16 %v200
    %v1032 = vunpack.c.l.b16 %v201
    %v1033 = vunpack.c.h.b16 %v201
    %v1034 = vunpack.c.l.b16 %v202
    %v1035 = vunpack.c.h.b16 %v202
    %v1036 = vunpack.c.l.b16 %v203
    %v1037 = vunpack.c.h.b16 %v203
    %v1038 = vunpack.c.l.b16 %v204
    %v1039 = vunpack.c.h.b16 %v204
    %v1040 = vunpack.c.l.b16 %v205
    %v1041 = vunpack.c.h.b16 %v205
    %v1042 = vunpack.c.l.b16 %v206
    %v1043 = vunpack.c.h.b16 %v206
    %v1044 = vunpack.c.l.b16 %v207
    %v1045 = vunpack.c.h.b16 %v207
    %v1046 = vunpack.c.l.b16 %v208
    %v1047 = vunpack.c.h.b16 %v208
    %v1048 = vunpack.c.l.b16 %v209
    %v1049 = vunpack.c.h.b16 %v209
    %v1050 = vunpack.c.l.b16 %v210
    %v1051 = vunpack.c.h.b16 %v210
    %v1052 = vunpack.c.l.b16 %v211
    %v1053 = vunpack.c.h.b16 %v211
    %v1054 = vunpack.c.l.b16 %v212
    %v1055 = vunpack.c.h.b16 %v212
    %v1056 = vunpack.c.l.b16 %v213
    %v1057 = vunpack.c.h.b16 %v213
    %v1058 = vunpack.c.l.b16 %v214
    %v1059 = vunpack.c.h.b16 %v214
    %v1060 = vunpack.c.l.b16 %v215
    %v1061 = vunpack.c.h.b16 %v215
    %v1062 = vunpack.c.l.b16 %v216
    %v1063 = vunpack.c.h.b16 %v216
    %v1064 = vunpack.c.l.b16 %v217
    %v1065 = vunpack.c.h.b16 %v217
    %v1066 = vunpack.c.l.b16 %v218
    %v1067 = vunpack.c.h.b16 %v218
    %v1068 = vunpack.c.l.b16 %v219
    %v1069 = vunpack.c.h.b16 %v219
    %v1070 = vunpack.c.l.b16 %v220
    %v1071 = vunpack.c.h.b16 %v220
    %v1072 = vunpack.c.l.b16 %v221
    %v1073 = vunpack.c.h.b16 %v221
    %v1074 = vunpack.c.l.b16 %v222
    %v1075 = vunpack.c.h.b16 %v222
    %v1076 = vunpack.c.l.b16 %v223
    %v1077 = vunpack.c.h.b16 %v223
    %v1078 = vunpack.c.l.b16 %v224
    %v1079 = vunpack.c.h.b16 %v224
    %v1080 = vunpack.c.l.b16 %v225
    %v1081 = vunpack.c.h.b16 %v225
    %v1082 = vunpack.c.l.b16 %v226
    %v1083 = vunpack.c.h.b16 %v226
    %v1084 = vunpack.c.l.b16 %v227
    %v1085 = vunpack.c.h.b16 %v227
    %v1086 = vunpack.c.l.b16 %v228
    %v1087 = vunpack.c.h.b16 %v228
    %v1088 = vunpack.c.l.b16 %v229
    %v1089 = vunpack.c.h.b16 %v229
    %v1090 = vunpack.c.l.b16 %v230
    %v1091 = vunpack.c.h.b16 %v230
    %v1092 = vunpack.c.l.b16 %v231
    %v1093 = vunpack.c.h.b16 %v231
    %v1094 = vunpack.c.l.b16 %v232
    %v1095 = vunpack.c.h.b16 %v232
    %v1096 = vunpack.c.l.b16 %v233
    %v1097 = vunpack.c.h.b16 %v233
    %v1098 = vunpack.c.l.b16 %v234
    %v1099 = vunpack.c.h.b16 %v234
    %v1100 = vunpack.c.l.b16 %v235
    %v1101 = vunpack.c.h.b16 %v235
    %v1102 = vunpack.c.l.b16 %v236
    %v1103 = vunpack.c.h.b16 %v236
    %v1104 = vunpack.c.l.b16 %v237
    %v1105 = vunpack.c.h.b16 %v237
    %v1106 = vunpack.c.l.b16 %v238
    %v1107 = vunpack.c.h.b16 %v238
    %v1108 = vunpack.c.l.b16 %v239
    %v1109 = vunpack.c.h.b16 %v239
    %v1110 = vunpack.c.l.b16 %v240
    %v1111 = vunpack.c.h.b16 %v240
    %v1112 = vunpack.c.l.b16 %v241
    %v1113 = vunpack.c.h.b16 %v241
    %v1114 = vunpack.c.l.b16 %v242
    %v1115 = vunpack.c.h.b16 %v242
    %v1116 = vunpack.c.l.b16 %v243
    %v1117 = vunpack.c.h.b16 %v243
    %v1118 = vunpack.c.l.b16 %v244
    %v1119 = vunpack.c.h.b16 %v244
    %v1120 = vunpack.c.l.b16 %v245
    %v1121 = vunpack.c.h.b16 %v245
    %v1122 = vunpack.c.l.b16 %v246
    %v1123 = vunpack.c.h.b16 %v246
    %v1124 = vunpack.c.l.b16 %v247
    %v1125 = vunpack.c.h.b16 %v247
    %v1126 = vunpack.c.l.b16 %v248
    %v1127 = vunpack.c.h.b16 %v248
    %v1128 = vunpack.c.l.b16 %v249
    %v1129 = vunpack.c.h.b16 %v249
    %v1130 = vunpack.c.l.b16 %v250
    %v1131 = vunpack.c.h.b16 %v250
    %v1132 = vunpack.c.l.b16 %v251
    %v1133 = vunpack.c.h.b16 %v251
    %v1134 = vunpack.c.l.b16 %v252
    %v1135 = vunpack.c.h.b16 %v252
    %v1136 = vunpack.c.l.b16 %v253
    %v1137 = vunpack.c.h.b16 %v253
    %v1138 = vunpack.c.l.b16 %v254
    %v1139 = vunpack.c.h.b16 %v254
    %v1140 = vunpack.c.l.b16 %v255
    %v1141 = vunpack.c.h.b16 %v255
    %v1142 = vunpack.c.l.b16 %v256
    %v1143 = vunpack.c.h.b16 %v256
    %v1144 = vunpack.c.l.b16 %v257
    %v1145 = vunpack.c.h.b16 %v257
    %v1146 = vunpack.c.l.b16 %v258
    %v1147 = vunpack.c.h.b16 %v258
    %v1148 = vunpack.c.l.b16 %v259
    %v1149 = vunpack.c.h.b16 %v259
    %v1150 = vunpack.c.l.b16 %v260
    %v1151 = vunpack.c.h.b16 %v260
    %v1152 = vunpack.c.l.b16 %v261
    %v1153 = vunpack.c.h.b16 %v261
    %v1154 = vunpack.c.l.b16 %v262
    %v1155 = vunpack.c.h.b16 %v262
    %v1156 = vunpack.c.l.b16 %v263
    %v1157 = vunpack.c.h.b16 %v263
    %v1158 = vunpack.c.l.b16 %v264
    %v1159 = vunpack.c.h.b16 %v264
    %v1160 = vunpack.c.l.b16 %v265
    %v1161 = vunpack.c.h.b16 %v265
    %v1162 = vunpack.c.l.b16 %v266
    %v1163 = vunpack.c.h.b16 %v266
    %v1164 = vunpack.c.l.b16 %v267
    %v1165 = vunpack.c.h.b16 %v267
    %v1166 = vunpack.c.l.b16 %v268
    %v1167 = vunpack.c.h.b16 %v268
    %v1168 = vunpack.c.l.b16 %v269
    %v1169 = vunpack.c.h.b16 %v269
    %v1170 = vunpack.c.l.b16 %v270
    %v1171 = vunpack.c.h.b16 %v270
    %v1172 = vunpack.c.l.b16 %v271
    %v1173 = vunpack.c.h.b16 %v271
    %v1174 = vunpack.c.l.b16 %v272
    %v1175 = vunpack.c.h.b16 %v272
    %v1176 = vunpack.c.l.b16 %v273
    %v1177 = vunpack.c.h.b16 %v273
    %v1178 = vunpack.c.l.b16 %v274
    %v1179 = vunpack.c.h.b16 %v274
    %v1180 = vunpack.c.l.b16 %v275
    %v1181 = vunpack.c.h.b16 %v275
    %v1182 = vunpack.c.l.b16 %v276
    %v1183 = vunpack.c.h.b16 %v276
    %v1184 = vunpack.c.l.b16 %v277
    %v1185 = vunpack.c.h.b16 %v277
    %v1186 = vunpack.c.l.b16 %v278
    %v1187 = vunpack.c.h.b16 %v278
    %v1188 = vunpack.c.l.b16 %v279
    %v1189 = vunpack.c.h.b16 %v279
    %v1190 = vunpack.c.l.b16 %v280
    %v1191 = vunpack.c.h.b16 %v280
    %v1192 = vunpack.c.l.b16 %v281
    %v1193 = vunpack.c.h.b16 %v281
    %v1194 = vunpack.c.l.b16 %v282
    %v1195 = vunpack.c.h.b16 %v282
    %v1196 = vunpack.c.l.b16 %v283
    %v1197 = vunpack.c.h.b16 %v283
    %v1198 = vunpack.c.l.b16 %v284
    %v1199 = vunpack.c.h.b16 %v284
    %v1200 = vunpack.c.l.b16 %v285
    %v1201 = vunpack.c.h.b16 %v285
    %v1202 = vunpack.c.l.b16 %v286
    %v1203 = vunpack.c.h.b16 %v286
    %v1204 = vunpack.c.l.b16 %v287
    %v1205 = vunpack.c.h.b16 %v287
    %v1206 = vunpack.c.l.b16 %v288
    %v1207 = vunpack.c.h.b16 %v288
    %v1208 = vunpack.c.l.b16 %v289
    %v1209 = vunpack.c.h.b16 %v289
    %v1210 = vunpack.c.l.b16 %v290
    %v1211 = vunpack.c.h.b16 %v290
    %v1212 = vunpack.c.l.b16 %v291
    %v1213 = vunpack.c.h.b16 %v291
    %v1214 = vunpack.c.l.b16 %v292
    %v1215 = vunpack.c.h.b16 %v292
    %v1216 = vunpack.c.l.b16 %v293
    %v1217 = vunpack.c.h.b16 %v293
    %v1218 = vunpack.c.l.b16 %v294
    %v1219 = vunpack.c.h.b16 %v294
    %v1220 = vunpack.c.l.b16 %v295
    %v1221 = vunpack.c.h.b16 %v295
    %v1222 = vunpack.c.l.b16 %v296
    %v1223 = vunpack.c.h.b16 %v296
    %v1224 = vunpack.c.l.b16 %v297
    %v1225 = vunpack.c.h.b16 %v297
    %v1226 = vunpack.c.l.b16 %v298
    %v1227 = vunpack.c.h.b16 %v298
    %v1228 = vunpack.c.l.b16 %v299
    %v1229 = vunpack.c.h.b16 %v299
    %v1230 = vunpack.c.l.b16 %v300
    %v1231 = vunpack.c.h.b16 %v300
    %v1232 = vunpack.c.l.b16 %v301
    %v1233 = vunpack.c.h.b16 %v301
    %v1234 = vunpack.c.l.b16 %v302
    %v1235 = vunpack.c.h.b16 %v302
    %v1236 = vunpack.c.l.b16 %v303
    %v1237 = vunpack.c.h.b16 %v303
    %v1238 = vunpack.c.l.b16 %v304
    %v1239 = vunpack.c.h.b16 %v304
    %v1240 = vunpack.c.l.b16 %v305
    %v1241 = vunpack.c.h.b16 %v305
    %v1242 = vunpack.c.l.b16 %v306
    %v1243 = vunpack.c.h.b16 %v306
    %v1244 = vunpack.c.l.b16 %v307
    %v1245 = vunpack.c.h.b16 %v307
    %v1246 = vunpack.c.l.b16 %v308
    %v1247 = vunpack.c.h.b16 %v308
    %v1248 = vunpack.c.l.b16 %v309
    %v1249 = vunpack.c.h.b16 %v309
    %v1250 = vunpack.c.l.b16 %v310
    %v1251 = vunpack.c.h.b16 %v310
    %v1252 = vunpack.c.l.b16 %v311
    %v1253 = vunpack.c.h.b16 %v311
    %v1254 = vunpack.c.l.b16 %v312
    %v1255 = vunpack.c.h.b16 %v312
    %v1256 = vunpack.c.l.b16 %v313
    %v1257 = vunpack.c.h.b16 %v313
    %v1258 = vpack.c.b16 %v694, %v682
    %v1259 = vpack.c.b16 %v695, %v683
    %v1260 = vpack.c.b16 %v696, %v684
    %v1261 = vpack.c.b16 %v697, %v685
    %v1262 = vpack.c.b16 %v698, %v686
    %v1263 = vpack.c.b16 %v699, %v687
    %v1264 = vpack.c.b16 %v700, %v688
    %v1265 = vpack.c.b16 %v701, %v689
    %v1266 = vpack.c.b16 %v702, %v690
    %v1267 = vpack.c.b16 %v703, %v691
    %v1268 = vpack.c.b16 %v704, %v692
    %v1269 = vpack.c.b16 %v705, %v693
    %v1270 = vpack.c.b16 %v718, %v706
    %v1271 = vpack.c.b16 %v719, %v707
    %v1272 = vpack.c.b16 %v720, %v708
    %v1273 = vpack.c.b16 %v721, %v709
    %v1274 = vpack.c.b16 %v722, %v710
    %v1275 = vpack.c.b16 %v723, %v711
    %v1276 = vpack.c.b16 %v724, %v712
    %v1277 = vpack.c.b16 %v725, %v713
    %v1278 = vpack.c.b16 %v726, %v714
    %v1279 = vpack.c.b16 %v727, %v715
    %v1280 = vpack.c.b16 %v728, %v716
    %v1281 = vpack.c.b16 %v729, %v717
    %v1282 = vpack.c.b16 %v742, %v730
    %v1283 = vpack.c.b16 %v743, %v731
    %v1284 = vpack.c.b16 %v744, %v732
    %v1285 = vpack.c.b16 %v745, %v733
    %v1286 = vpack.c.b16 %v746, %v734
    %v1287 = vpack.c.b16 %v747, %v735
    %v1288 = vpack.c.b16 %v748, %v736
    %v1289 = vpack.c.b16 %v749, %v737
    %v1290 = vpack.c.b16 %v750, %v738
    %v1291 = vpack.c.b16 %v751, %v739
    %v1292 = vpack.c.b16 %v752, %v740
    %v1293 = vpack.c.b16 %v753, %v741
    %v1294 = vpack.c.b16 %v766, %v754
    %v1295 = vpack.c.b16 %v767, %v755
    %v1296 = vpack.c.b16 %v768, %v756
    %v1297 = vpack.c.b16 %v769, %v757
    %v1298 = vpack.c.b16 %v770, %v758
    %v1299 = vpack.c.b16 %v771, %v759
    %v1300 = vpack.c.b16 %v772, %v760
    %v1301 = vpack.c.b16 %v773, %v761
    %v1302 = vpack.c.b16 %v774, %v762
    %v1303 = vpack.c.b16 %v775, %v763
    %v1304 = vpack.c.b16 %v776, %v764
    %v1305 = vpack.c.b16 %v777, %v765
    %v1306 = vpack.c.b16 %v790, %v778
    %v1307 = vpack.c.b16 %v791, %v779
    %v1308 = vpack.c.b16 %v792, %v780
    %v1309 = vpack.c.b16 %v793, %v781
    %v1310 = vpack.c.b16 %v794, %v782
    %v1311 = vpack.c.b16 %v795, %v783
    %v1312 = vpack.c.b16 %v796, %v784
    %v1313 = vpack.c.b16 %v797, %v785
    %v1314 = vpack.c.b16 %v798, %v786
    %v1315 = vpack.c.b16 %v799, %v787
    %v1316 = vpack.c.b16 %v800, %v788
    %v1317 = vpack.c.b16 %v801, %v789
    %v1318 = vpack.c.b16 %v814, %v802
    %v1319 = vpack.c.b16 %v815, %v803
    %v1320 = vpack.c.b16 %v816, %v804
    %v1321 = vpack.c.b16 %v817, %v805
    %v1322 = vpack.c.b16 %v818, %v806
    %v1323 = vpack.c.b16 %v819, %v807
    %v1324 = vpack.c.b16 %v820, %v808
    %v1325 = vpack.c.b16 %v821, %v809
    %v1326 = vpack.c.b16 %v822, %v810
    %v1327 = vpack.c.b16 %v823, %v811
    %v1328 = vpack.c.b16 %v824, %v812
    %v1329 = vpack.c.b16 %v825, %v813
    %v1330 = vpack.c.b16 %v838, %v826
    %v1331 = vpack.c.b16 %v839, %v827
    %v1332 = vpack.c.b16 %v840, %v828
    %v1333 = vpack.c.b16 %v841, %v829
    %v1334 = vpack.c.b16 %v842, %v830
    %v1335 = vpack.c.b16 %v843, %v831
    %v1336 = vpack.c.b16 %v844, %v832
    %v1337 = vpack.c.b16 %v845, %v833
    %v1338 = vpack.c.b16 %v846, %v834
    %v1339 = vpack.c.b16 %v847, %v835
    %v1340 = vpack.c.b16 %v848, %v836
    %v1341 = vpack.c.b16 %v849, %v837
    %v1342 = vpack.c.b16 %v862, %v850
    %v1343 = vpack.c.b16 %v863, %v851
    %v1344 = vpack.c.b16 %v864, %v852
    %v1345 = vpack.c.b16 %v865, %v853
    %v1346 = vpack.c.b16 %v866, %v854
    %v1347 = vpack.c.b16 %v867, %v855
    %v1348 = vpack.c.b16 %v868, %v856
    %v1349 = vpack.c.b16 %v869, %v857
    %v1350 = vpack.c.b16 %v870, %v858
    %v1351 = vpack.c.b16 %v871, %v859
    %v1352 = vpack.c.b16 %v872, %v860
    %v1353 = vpack.c.b16 %v873, %v861
    %v1354 = vpack.c.b16 %v886, %v874
    %v1355 = vpack.c.b16 %v887, %v875
    %v1356 = vpack.c.b16 %v888, %v876
    %v1357 = vpack.c.b16 %v889, %v877
    %v1358 = vpack.c.b16 %v890, %v878
    %v1359 = vpack.c.b16 %v891, %v879
    %v1360 = vpack.c.b16 %v892, %v880
    %v1361 = vpack.c.b16 %v893, %v881
    %v1362 = vpack.c.b16 %v894, %v882
    %v1363 = vpack.c.b16 %v895, %v883
    %v1364 = vpack.c.b16 %v896, %v884
    %v1365 = vpack.c.b16 %v897, %v885
    %v1366 = vpack.c.b16 %v910, %v898
    %v1367 = vpack.c.b16 %v911, %v899
    %v1368 = vpack.c.b16 %v912, %v900
    %v1369 = vpack.c.b16 %v913, %v901
    %v1370 = vpack.c.b16 %v914, %v902
    %v1371 = vpack.c.b16 %v915, %v903
    %v1372 = vpack.c.b16 %v916, %v904
    %v1373 = vpack.c.b16 %v917, %v905
    %v1374 = vpack.c.b16 %v918, %v906
    %v1375 = vpack.c.b16 %v919, %v907
    %v1376 = vpack.c.b16 %v920, %v908
    %v1377 = vpack.c.b16 %v921, %v909
    %v1378 = vpack.c.b16 %v934, %v922
    %v1379 = vpack.c.b16 %v935, %v923
    %v1380 = vpack.c.b16 %v936, %v924
    %v1381 = vpack.c.b16 %v937, %v925
    %v1382 = vpack.c.b16 %v938, %v926
    %v1383 = vpack.c.b16 %v939, %v927
    %v1384 = vpack.c.b16 %v940, %v928
    %v1385 = vpack.c.b16 %v941, %v929
    %v1386 = vpack.c.b16 %v942, %v930
    %v1387 = vpack.c.b16 %v943, %v931
    %v1388 = vpack.c.b16 %v944, %v932
    %v1389 = vpack.c.b16 %v945, %v933
    %v1390 = vpack.c.b16 %v958, %v946
    %v1391 = vpack.c.b16 %v959, %v947
    %v1392 = vpack.c.b16 %v960, %v948
    %v1393 = vpack.c.b16 %v961, %v949
    %v1394 = vpack.c.b16 %v962, %v950
    %v1395 = vpack.c.b16 %v963, %v951
    %v1396 = vpack.c.b16 %v964, %v952
    %v1397 = vpack.c.b16 %v965, %v953
    %v1398 = vpack.c.b16 %v966, %v954
    %v1399 = vpack.c.b16 %v967, %v955
    %v1400 = vpack.c.b16 %v968, %v956
    %v1401 = vpack.c.b16 %v969, %v957
    %v1402 = vpack.c.b16 %v982, %v970
    %v1403 = vpack.c.b16 %v983, %v971
    %v1404 = vpack.c.b16 %v984, %v972
    %v1405 = vpack.c.b16 %v985, %v973
    %v1406 = vpack.c.b16 %v986, %v974
    %v1407 = vpack.c.b16 %v987, %v975
    %v1408 = vpack.c.b16 %v988, %v976
    %v1409 = vpack.c.b16 %v989, %v977
    %v1410 = vpack.c.b16 %v990, %v978
    %v1411 = vpack.c.b16 %v991, %v979
    %v1412 = vpack.c.b16 %v992, %v980
    %v1413 = vpack.c.b16 %v993, %v981
    %v1414 = vpack.c.b16 %v1006, %v994
    %v1415 = vpack.c.b16 %v1007, %v995
    %v1416 = vpack.c.b16 %v1008, %v996
    %v1417 = vpack.c.b16 %v1009, %v997
    %v1418 = vpack.c.b16 %v1010, %v998
    %v1419 = vpack.c.b16 %v1011, %v999
    %v1420 = vpack.c.b16 %v1012, %v1000
    %v1421 = vpack.c.b16 %v1013, %v1001
    %v1422 = vpack.c.b16 %v1014, %v1002
    %v1423 = vpack.c.b16 %v1015, %v1003
    %v1424 = vpack.c.b16 %v1016, %v1004
    %v1425 = vpack.c.b16 %v1017, %v1005
    %v1426 = vpack.c.b16 %v1030, %v1018
    %v1427 = vpack.c.b16 %v1031, %v1019
    %v1428 = vpack.c.b16 %v1032, %v1020
    %v1429 = vpack.c.b16 %v1033, %v1021
    %v1430 = vpack.c.b16 %v1034, %v1022
    %v1431 = vpack.c.b16 %v1035, %v1023
    %v1432 = vpack.c.b16 %v1036, %v1024
    %v1433 = vpack.c.b16 %v1037, %v1025
    %v1434 = vpack.c.b16 %v1038, %v1026
    %v1435 = vpack.c.b16 %v1039, %v1027
    %v1436 = vpack.c.b16 %v1040, %v1028
    %v1437 = vpack.c.b16 %v1041, %v1029
    %v1438 = vpack.c.b16 %v1054, %v1042
    %v1439 = vpack.c.b16 %v1055, %v1043
    %v1440 = vpack.c.b16 %v1056, %v1044
    %v1441 = vpack.c.b16 %v1057, %v1045
    %v1442 = vpack.c.b16 %v1058, %v1046
    %v1443 = vpack.c.b16 %v1059, %v1047
    %v1444 = vpack.c.b16 %v1060, %v1048
    %v1445 = vpack.c.b16 %v1061, %v1049
    %v1446 = vpack.c.b16 %v1062, %v1050
    %v1447 = vpack.c.b16 %v1063, %v1051
    %v1448 = vpack.c.b16 %v1064, %v1052
    %v1449 = vpack.c.b16 %v1065, %v1053
    %v1450 = vpack.c.b16 %v1078, %v1066
    %v1451 = vpack.c.b16 %v1079, %v1067
    %v1452 = vpack.c.b16 %v1080, %v1068
    %v1453 = vpack.c.b16 %v1081, %v1069
    %v1454 = vpack.c.b16 %v1082, %v1070
    %v1455 = vpack.c.b16 %v1083, %v1071
    %v1456 = vpack.c.b16 %v1084, %v1072
    %v1457 = vpack.c.b16 %v1085, %v1073
    %v1458 = vpack.c.b16 %v1086, %v1074
    %v1459 = vpack.c.b16 %v1087, %v1075
    %v1460 = vpack.c.b16 %v1088, %v1076
    %v1461 = vpack.c.b16 %v1089, %v1077
    %v1462 = vpack.c.b16 %v1102, %v1090
    %v1463 = vpack.c.b16 %v1103, %v1091
    %v1464 = vpack.c.b16 %v1104, %v1092
    %v1465 = vpack.c.b16 %v1105, %v1093
    %v1466 = vpack.c.b16 %v1106, %v1094
    %v1467 = vpack.c.b16 %v1107, %v1095
    %v1468 = vpack.c.b16 %v1108, %v1096
    %v1469 = vpack.c.b16 %v1109, %v1097
    %v1470 = vpack.c.b16 %v1110, %v1098
    %v1471 = vpack.c.b16 %v1111, %v1099
    %v1472 = vpack.c.b16 %v1112, %v1100
    %v1473 = vpack.c.b16 %v1113, %v1101
    %v1474 = vpack.c.b16 %v1126, %v1114
    %v1475 = vpack.c.b16 %v1127, %v1115
    %v1476 = vpack.c.b16 %v1128, %v1116
    %v1477 = vpack.c.b16 %v1129, %v1117
    %v1478 = vpack.c.b16 %v1130, %v1118
    %v1479 = vpack.c.b16 %v1131, %v1119
    %v1480 = vpack.c.b16 %v1132, %v1120
    %v1481 = vpack.c.b16 %v1133, %v1121
    %v1482 = vpack.c.b16 %v1134, %v1122
    %v1483 = vpack.c.b16 %v1135, %v1123
    %v1484 = vpack.c.b16 %v1136, %v1124
    %v1485 = vpack.c.b16 %v1137, %v1125
    %v1486 = vpack.c.b16 %v1150, %v1138
    %v1487 = vpack.c.b16 %v1151, %v1139
    %v1488 = vpack.c.b16 %v1152, %v1140
    %v1489 = vpack.c.b16 %v1153, %v1141
    %v1490 = vpack.c.b16 %v1154, %v1142
    %v1491 = vpack.c.b16 %v1155, %v1143
    %v1492 = vpack.c.b16 %v1156, %v1144
    %v1493 = vpack.c.b16 %v1157, %v1145
    %v1494 = vpack.c.b16 %v1158, %v1146
    %v1495 = vpack.c.b16 %v1159, %v1147
    %v1496 = vpack.c.b16 %v1160, %v1148
    %v1497 = vpack.c.b16 %v1161, %v1149
    %v1498 = vpack.c.b16 %v1174, %v1162
    %v1499 = vpack.c.b16 %v1175, %v1163
    %v1500 = vpack.c.b16 %v1176, %v1164
    %v1501 = vpack.c.b16 %v1177, %v1165
    %v1502 = vpack.c.b16 %v1178, %v1166
    %v1503 = vpack.c.b16 %v1179, %v1167
    %v1504 = vpack.c.b16 %v1180, %v1168
    %v1505 = vpack.c.b16 %v1181, %v1169
    %v1506 = vpack.c.b16 %v1182, %v1170
    %v1507 = vpack.c.b16 %v1183, %v1171
    %v1508 = vpack.c.b16 %v1184, %v1172
    %v1509 = vpack.c.b16 %v1185, %v1173
    %v1510 = vpack.c.b16 %v1198, %v1186
    %v1511 = vpack.c.b16 %v1199, %v1187
    %v1512 = vpack.c.b16 %v1200, %v1188
    %v1513 = vpack.c.b16 %v1201, %v1189
    %v1514 = vpack.c.b16 %v1202, %v1190
    %v1515 = vpack.c.b16 %v1203, %v1191
    %v1516 = vpack.c.b16 %v1204, %v1192
    %v1517 = vpack.c.b16 %v1205, %v1193
    %v1518 = vpack.c.b16 %v1206, %v1194
    %v1519 = vpack.c.b16 %v1207, %v1195
    %v1520 = vpack.c.b16 %v1208, %v1196
    %v1521 = vpack.c.b16 %v1209, %v1197
    %v1522 = vpack.c.b16 %v1222, %v1210
    %v1523 = vpack.c.b16 %v1223, %v1211
    %v1524 = vpack.c.b16 %v1224, %v1212
    %v1525 = vpack.c.b16 %v1225, %v1213
    %v1526 = vpack.c.b16 %v1226, %v1214
    %v1527 = vpack.c.b16 %v1227, %v1215
    %v1528 = vpack.c.b16 %v1228, %v1216
    %v1529 = vpack.c.b16 %v1229, %v1217
    %v1530 = vpack.c.b16 %v1230, %v1218
    %v1531 = vpack.c.b16 %v1231, %v1219
    %v1532 = vpack.c.b16 %v1232, %v1220
    %v1533 = vpack.c.b16 %v1233, %v1221
    %v1534 = vpack.c.b16 %v1246, %v1234
    %v1535 = vpack.c.b16 %v1247, %v1235
    %v1536 = vpack.c.b16 %v1248, %v1236
    %v1537 = vpack.c.b16 %v1249, %v1237
    %v1538 = vpack.c.b16 %v1250, %v1238
    %v1539 = vpack.c.b16 %v1251, %v1239
    %v1540 = vpack.c.b16 %v1252, %v1240
    %v1541 = vpack.c.b16 %v1253, %v1241
    %v1542 = vpack.c.b16 %v1254, %v1242
    %v1543 = vpack.c.b16 %v1255, %v1243
    %v1544 = vpack.c.b16 %v1256, %v1244
    %v1545 = vpack.c.b16 %v1257, %v1245
    %1834 = vmatprep.subr.bf16.mxu0 %v1259
    %1835 = vmatpush1.bf16.msra.mxu0 %v1258
    %1836 = vmatprep.subr.bf16.mxu0 %v1271
    %1837 = vmatpush1.bf16.msra.mxu0 %v1270
    %1838 = vmatprep.subr.bf16.mxu0 %v1283
    %1839 = vmatpush1.bf16.msra.mxu0 %v1282
    %1840 = vmatprep.subr.bf16.mxu0 %v1295
    %1841 = vmatpush1.bf16.msra.mxu0 %v1294
    %1842 = vmatprep.subr.bf16.mxu0 %v1307
    %1843 = vmatpush1.bf16.msra.mxu0 %v1306
    %1844 = vmatprep.subr.bf16.mxu0 %v1319
    %1845 = vmatpush1.bf16.msra.mxu0 %v1318
    %1846 = vmatprep.subr.bf16.mxu0 %v1331
    %1847 = vmatpush1.bf16.msra.mxu0 %v1330
    %1848 = vmatprep.subr.bf16.mxu0 %v1343
    %1849 = vmatpush1.bf16.msra.mxu0 %v1342
    %1850 = vmatprep.subr.bf16.mxu0 %v1355
    %1851 = vmatpush1.bf16.msra.mxu0 %v1354
    %1852 = vmatprep.subr.bf16.mxu0 %v1367
    %1853 = vmatpush1.bf16.msra.mxu0 %v1366
    %1854 = vmatprep.subr.bf16.mxu0 %v1379
    %1855 = vmatpush1.bf16.msra.mxu0 %v1378
    %1856 = vmatprep.subr.bf16.mxu0 %v1391
    %1857 = vmatpush1.bf16.msra.mxu0 %v1390
    %1858 = vmatprep.subr.bf16.mxu0 %v1403
    %1859 = vmatpush1.bf16.msra.mxu0 %v1402
    %1860 = vmatprep.subr.bf16.mxu0 %v1415
    %1861 = vmatpush1.bf16.msra.mxu0 %v1414
    %1862 = vmatprep.subr.bf16.mxu0 %v1427
    %1863 = vmatpush1.bf16.msra.mxu0 %v1426
    %1864 = vmatprep.subr.bf16.mxu0 %v1439
    %1865 = vmatpush1.bf16.msra.mxu0 %v1438
    %1866 = vmatprep.mubr.bf16.mxu0 %v389
    %1867 = vmatmul.mubr.bf16.gmra.mrb[0].mxu0 %v388
    %v1868 = vpop.f32.mrb[0].mxu0
    %v1869 = vadd.f32 %v321, %v1868
    %v1870 = vpop.f32.mrb[0].mxu0
    %v1871 = vadd.f32 %v325, %v1870
    %v1872 = vpop.f32.mrb[0].mxu0
    %v1873 = vadd.f32 %v321, %v1872
    %v1874 = vpop.f32.mrb[0].mxu0
    %v1875 = vadd.f32 %v325, %v1874
    %1876 = vdwg.mxu0
    %1877 = vmatprep.subr.bf16.mxu0 %v1451
    %1878 = vmatpush1.bf16.msra.mxu0 %v1450
    %1879 = vmatprep.subr.bf16.mxu0 %v1463
    %1880 = vmatpush1.bf16.msra.mxu0 %v1462
    %1881 = vmatprep.subr.bf16.mxu0 %v1475
    %1882 = vmatpush1.bf16.msra.mxu0 %v1474
    %1883 = vmatprep.subr.bf16.mxu0 %v1487
    %1884 = vmatpush1.bf16.msra.mxu0 %v1486
    %1885 = vmatprep.subr.bf16.mxu0 %v1499
    %1886 = vmatpush1.bf16.msra.mxu0 %v1498
    %1887 = vmatprep.subr.bf16.mxu0 %v1511
    %1888 = vmatpush1.bf16.msra.mxu0 %v1510
    %1889 = vmatprep.subr.bf16.mxu0 %v1523
    %1890 = vmatpush1.bf16.msra.mxu0 %v1522
    %1891 = vmatprep.subr.bf16.mxu0 %v1535
    %1892 = vmatpush1.bf16.msra.mxu0 %v1534
    %1893 = vmatprep.subr.bf16.mxu0 0
    %1894 = vmatpush1.bf16.msra.mxu0 0
    %1895 = vmatprep.subr.bf16.mxu0 0
    %1896 = vmatpush1.bf16.msra.mxu0 0
    %1897 = vmatprep.subr.bf16.mxu0 0
    %1898 = vmatpush1.bf16.msra.mxu0 0
    %1899 = vmatprep.subr.bf16.mxu0 0
    %1900 = vmatpush1.bf16.msra.mxu0 0
    %1901 = vmatprep.subr.bf16.mxu0 0
    %1902 = vmatpush1.bf16.msra.mxu0 0
    %1903 = vmatprep.subr.bf16.mxu0 0
    %1904 = vmatpush1.bf16.msra.mxu0 0
    %1905 = vmatprep.subr.bf16.mxu0 0
    %1906 = vmatpush1.bf16.msra.mxu0 0
    %1907 = vmatprep.subr.bf16.mxu0 0
    %1908 = vmatpush1.bf16.msra.mxu0 0
    %1909 = vmatprep.mubr.bf16.mxu0 0
    %1910 = vmatmul.mubr.bf16.gmra.mrb[0].mxu0 %v390
    %v1911 = vpop.f32.mrb[0].mxu0
    %v1912 = vadd.f32 %v1869, %v1911
    %v1913 = vpop.f32.mrb[0].mxu0
    %v1914 = vadd.f32 %v1871, %v1913
    %v1915 = vpop.f32.mrb[0].mxu0
    %v1916 = vadd.f32 %v1873, %v1915
    %v1917 = vpop.f32.mrb[0].mxu0
    %v1918 = vadd.f32 %v1875, %v1917
    %1919 = vdwg.mxu0
    %1920 = vmatprep.subr.bf16.mxu0 %v1261
    %1921 = vmatpush1.bf16.msra.mxu0 %v1260
    %1922 = vmatprep.subr.bf16.mxu0 %v1273
    %1923 = vmatpush1.bf16.msra.mxu0 %v1272
    %1924 = vmatprep.subr.bf16.mxu0 %v1285
    %1925 = vmatpush1.bf16.msra.mxu0 %v1284
    %1926 = vmatprep.subr.bf16.mxu0 %v1297
    %1927 = vmatpush1.bf16.msra.mxu0 %v1296
    %1928 = vmatprep.subr.bf16.mxu0 %v1309
    %1929 = vmatpush1.bf16.msra.mxu0 %v1308
    %1930 = vmatprep.subr.bf16.mxu0 %v1321
    %1931 = vmatpush1.bf16.msra.mxu0 %v1320
    %1932 = vmatprep.subr.bf16.mxu0 %v1333
    %1933 = vmatpush1.bf16.msra.mxu0 %v1332
    %1934 = vmatprep.subr.bf16.mxu0 %v1345
    %1935 = vmatpush1.bf16.msra.mxu0 %v1344
    %1936 = vmatprep.subr.bf16.mxu0 %v1357
    %1937 = vmatpush1.bf16.msra.mxu0 %v1356
    %1938 = vmatprep.subr.bf16.mxu0 %v1369
    %1939 = vmatpush1.bf16.msra.mxu0 %v1368
    %1940 = vmatprep.subr.bf16.mxu0 %v1381
    %1941 = vmatpush1.bf16.msra.mxu0 %v1380
    %1942 = vmatprep.subr.bf16.mxu0 %v1393
    %1943 = vmatpush1.bf16.msra.mxu0 %v1392
    %1944 = vmatprep.subr.bf16.mxu0 %v1405
    %1945 = vmatpush1.bf16.msra.mxu0 %v1404
    %1946 = vmatprep.subr.bf16.mxu0 %v1417
    %1947 = vmatpush1.bf16.msra.mxu0 %v1416
    %1948 = vmatprep.subr.bf16.mxu0 %v1429
    %1949 = vmatpush1.bf16.msra.mxu0 %v1428
    %1950 = vmatprep.subr.bf16.mxu0 %v1441
    %1951 = vmatpush1.bf16.msra.mxu0 %v1440
    %1952 = vmatprep.mubr.bf16.mxu0 %v389
    %1953 = vmatmul.mubr.bf16.gmra.mrb[0].mxu0 %v388
    %v1954 = vpop.f32.mrb[0].mxu0
    %v1955 = vadd.f32 %v329, %v1954
    %v1956 = vpop.f32.mrb[0].mxu0
    %v1957 = vadd.f32 %v333, %v1956
    %v1958 = vpop.f32.mrb[0].mxu0
    %v1959 = vadd.f32 %v329, %v1958
    %v1960 = vpop.f32.mrb[0].mxu0
    %v1961 = vadd.f32 %v333, %v1960
    %1962 = vdwg.mxu0
    %1963 = vmatprep.subr.bf16.mxu0 %v1453
    %1964 = vmatpush1.bf16.msra.mxu0 %v1452
    %1965 = vmatprep.subr.bf16.mxu0 %v1465
    %1966 = vmatpush1.bf16.msra.mxu0 %v1464
    %1967 = vmatprep.subr.bf16.mxu0 %v1477
    %1968 = vmatpush1.bf16.msra.mxu0 %v1476
    %1969 = vmatprep.subr.bf16.mxu0 %v1489
    %1970 = vmatpush1.bf16.msra.mxu0 %v1488
    %1971 = vmatprep.subr.bf16.mxu0 %v1501
    %1972 = vmatpush1.bf16.msra.mxu0 %v1500
    %1973 = vmatprep.subr.bf16.mxu0 %v1513
    %1974 = vmatpush1.bf16.msra.mxu0 %v1512
    %1975 = vmatprep.subr.bf16.mxu0 %v1525
    %1976 = vmatpush1.bf16.msra.mxu0 %v1524
    %1977 = vmatprep.subr.bf16.mxu0 %v1537
    %1978 = vmatpush1.bf16.msra.mxu0 %v1536
    %1979 = vmatprep.subr.bf16.mxu0 0
    %1980 = vmatpush1.bf16.msra.mxu0 0
    %1981 = vmatprep.subr.bf16.mxu0 0
    %1982 = vmatpush1.bf16.msra.mxu0 0
    %1983 = vmatprep.subr.bf16.mxu0 0
    %1984 = vmatpush1.bf16.msra.mxu0 0
    %1985 = vmatprep.subr.bf16.mxu0 0
    %1986 = vmatpush1.bf16.msra.mxu0 0
    %1987 = vmatprep.subr.bf16.mxu0 0
    %1988 = vmatpush1.bf16.msra.mxu0 0
    %1989 = vmatprep.subr.bf16.mxu0 0
    %1990 = vmatpush1.bf16.msra.mxu0 0
    %1991 = vmatprep.subr.bf16.mxu0 0
    %1992 = vmatpush1.bf16.msra.mxu0 0
    %1993 = vmatprep.subr.bf16.mxu0 0
    %1994 = vmatpush1.bf16.msra.mxu0 0
    %1995 = vmatprep.mubr.bf16.mxu0 0
    %1996 = vmatmul.mubr.bf16.gmra.mrb[0].mxu0 %v390
    %v1997 = vpop.f32.mrb[0].mxu0
    %v1998 = vadd.f32 %v1955, %v1997
    %v1999 = vpop.f32.mrb[0].mxu0
    %v2000 = vadd.f32 %v1957, %v1999
    %v2001 = vpop.f32.mrb[0].mxu0
    %v2002 = vadd.f32 %v1959, %v2001
    %v2003 = vpop.f32.mrb[0].mxu0
    %v2004 = vadd.f32 %v1961, %v2003
    %2005 = vdwg.mxu0
    %2006 = vmatprep.subr.bf16.mxu0 %v1263
    %2007 = vmatpush1.bf16.msra.mxu0 %v1262
    %2008 = vmatprep.subr.bf16.mxu0 %v1275
    %2009 = vmatpush1.bf16.msra.mxu0 %v1274
    %2010 = vmatprep.subr.bf16.mxu0 %v1287
    %2011 = vmatpush1.bf16.msra.mxu0 %v1286
    %2012 = vmatprep.subr.bf16.mxu0 %v1299
    %2013 = vmatpush1.bf16.msra.mxu0 %v1298
    %2014 = vmatprep.subr.bf16.mxu0 %v1311
    %2015 = vmatpush1.bf16.msra.mxu0 %v1310
    %2016 = vmatprep.subr.bf16.mxu0 %v1323
    %2017 = vmatpush1.bf16.msra.mxu0 %v1322
    %2018 = vmatprep.subr.bf16.mxu0 %v1335
    %2019 = vmatpush1.bf16.msra.mxu0 %v1334
    %2020 = vmatprep.subr.bf16.mxu0 %v1347
    %2021 = vmatpush1.bf16.msra.mxu0 %v1346
    %2022 = vmatprep.subr.bf16.mxu0 %v1359
    %2023 = vmatpush1.bf16.msra.mxu0 %v1358
    %2024 = vmatprep.subr.bf16.mxu0 %v1371
    %2025 = vmatpush1.bf16.msra.mxu0 %v1370
    %2026 = vmatprep.subr.bf16.mxu0 %v1383
    %2027 = vmatpush1.bf16.msra.mxu0 %v1382
    %2028 = vmatprep.subr.bf16.mxu0 %v1395
    %2029 = vmatpush1.bf16.msra.mxu0 %v1394
    %2030 = vmatprep.subr.bf16.mxu0 %v1407
    %2031 = vmatpush1.bf16.msra.mxu0 %v1406
    %2032 = vmatprep.subr.bf16.mxu0 %v1419
    %2033 = vmatpush1.bf16.msra.mxu0 %v1418
    %2034 = vmatprep.subr.bf16.mxu0 %v1431
    %2035 = vmatpush1.bf16.msra.mxu0 %v1430
    %2036 = vmatprep.subr.bf16.mxu0 %v1443
    %2037 = vmatpush1.bf16.msra.mxu0 %v1442
    %2038 = vmatprep.mubr.bf16.mxu0 %v389
    %2039 = vmatmul.mubr.bf16.gmra.mrb[0].mxu0 %v388
    %v2040 = vpop.f32.mrb[0].mxu0
    %v2041 = vadd.f32 %v337, %v2040
    %v2042 = vpop.f32.mrb[0].mxu0
    %v2043 = vadd.f32 %v341, %v2042
    %v2044 = vpop.f32.mrb[0].mxu0
    %v2045 = vadd.f32 %v337, %v2044
    %v2046 = vpop.f32.mrb[0].mxu0
    %v2047 = vadd.f32 %v341, %v2046
    %2048 = vdwg.mxu0
    %2049 = vmatprep.subr.bf16.mxu0 %v1455
    %2050 = vmatpush1.bf16.msra.mxu0 %v1454
    %2051 = vmatprep.subr.bf16.mxu0 %v1467
    %2052 = vmatpush1.bf16.msra.mxu0 %v1466
    %2053 = vmatprep.subr.bf16.mxu0 %v1479
    %2054 = vmatpush1.bf16.msra.mxu0 %v1478
    %2055 = vmatprep.subr.bf16.mxu0 %v1491
    %2056 = vmatpush1.bf16.msra.mxu0 %v1490
    %2057 = vmatprep.subr.bf16.mxu0 %v1503
    %2058 = vmatpush1.bf16.msra.mxu0 %v1502
    %2059 = vmatprep.subr.bf16.mxu0 %v1515
    %2060 = vmatpush1.bf16.msra.mxu0 %v1514
    %2061 = vmatprep.subr.bf16.mxu0 %v1527
    %2062 = vmatpush1.bf16.msra.mxu0 %v1526
    %2063 = vmatprep.subr.bf16.mxu0 %v1539
    %2064 = vmatpush1.bf16.msra.mxu0 %v1538
    %2065 = vmatprep.subr.bf16.mxu0 0
    %2066 = vmatpush1.bf16.msra.mxu0 0
    %2067 = vmatprep.subr.bf16.mxu0 0
    %2068 = vmatpush1.bf16.msra.mxu0 0
    %2069 = vmatprep.subr.bf16.mxu0 0
    %2070 = vmatpush1.bf16.msra.mxu0 0
    %2071 = vmatprep.subr.bf16.mxu0 0
    %2072 = vmatpush1.bf16.msra.mxu0 0
    %2073 = vmatprep.subr.bf16.mxu0 0
    %2074 = vmatpush1.bf16.msra.mxu0 0
    %2075 = vmatprep.subr.bf16.mxu0 0
    %2076 = vmatpush1.bf16.msra.mxu0 0
    %2077 = vmatprep.subr.bf16.mxu0 0
    %2078 = vmatpush1.bf16.msra.mxu0 0
    %2079 = vmatprep.subr.bf16.mxu0 0
    %2080 = vmatpush1.bf16.msra.mxu0 0
    %2081 = vmatprep.mubr.bf16.mxu0 0
    %2082 = vmatmul.mubr.bf16.gmra.mrb[0].mxu0 %v390
    %v2083 = vpop.f32.mrb[0].mxu0
    %v2084 = vadd.f32 %v2041, %v2083
    %v2085 = vpop.f32.mrb[0].mxu0
    %v2086 = vadd.f32 %v2043, %v2085
    %v2087 = vpop.f32.mrb[0].mxu0
    %v2088 = vadd.f32 %v2045, %v2087
    %v2089 = vpop.f32.mrb[0].mxu0
    %v2090 = vadd.f32 %v2047, %v2089
    %2091 = vdwg.mxu0
    %2092 = vmatprep.subr.bf16.mxu0 %v1265
    %2093 = vmatpush1.bf16.msra.mxu0 %v1264
    %2094 = vmatprep.subr.bf16.mxu0 %v1277
    %2095 = vmatpush1.bf16.msra.mxu0 %v1276
    %2096 = vmatprep.subr.bf16.mxu0 %v1289
    %2097 = vmatpush1.bf16.msra.mxu0 %v1288
    %2098 = vmatprep.subr.bf16.mxu0 %v1301
    %2099 = vmatpush1.bf16.msra.mxu0 %v1300
    %2100 = vmatprep.subr.bf16.mxu0 %v1313
    %2101 = vmatpush1.bf16.msra.mxu0 %v1312
    %2102 = vmatprep.subr.bf16.mxu0 %v1325
    %2103 = vmatpush1.bf16.msra.mxu0 %v1324
    %2104 = vmatprep.subr.bf16.mxu0 %v1337
    %2105 = vmatpush1.bf16.msra.mxu0 %v1336
    %2106 = vmatprep.subr.bf16.mxu0 %v1349
    %2107 = vmatpush1.bf16.msra.mxu0 %v1348
    %2108 = vmatprep.subr.bf16.mxu0 %v1361
    %2109 = vmatpush1.bf16.msra.mxu0 %v1360
    %2110 = vmatprep.subr.bf16.mxu0 %v1373
    %2111 = vmatpush1.bf16.msra.mxu0 %v1372
    %2112 = vmatprep.subr.bf16.mxu0 %v1385
    %2113 = vmatpush1.bf16.msra.mxu0 %v1384
    %2114 = vmatprep.subr.bf16.mxu0 %v1397
    %2115 = vmatpush1.bf16.msra.mxu0 %v1396
    %2116 = vmatprep.subr.bf16.mxu0 %v1409
    %2117 = vmatpush1.bf16.msra.mxu0 %v1408
    %2118 = vmatprep.subr.bf16.mxu0 %v1421
    %2119 = vmatpush1.bf16.msra.mxu0 %v1420
    %2120 = vmatprep.subr.bf16.mxu0 %v1433
    %2121 = vmatpush1.bf16.msra.mxu0 %v1432
    %2122 = vmatprep.subr.bf16.mxu0 %v1445
    %2123 = vmatpush1.bf16.msra.mxu0 %v1444
    %2124 = vmatprep.mubr.bf16.mxu0 %v389
    %2125 = vmatmul.mubr.bf16.gmra.mrb[0].mxu0 %v388
    %v2126 = vpop.f32.mrb[0].mxu0
    %v2127 = vadd.f32 %v345, %v2126
    %v2128 = vpop.f32.mrb[0].mxu0
    %v2129 = vadd.f32 %v349, %v2128
    %v2130 = vpop.f32.mrb[0].mxu0
    %v2131 = vadd.f32 %v345, %v2130
    %v2132 = vpop.f32.mrb[0].mxu0
    %v2133 = vadd.f32 %v349, %v2132
    %2134 = vdwg.mxu0
    %2135 = vmatprep.subr.bf16.mxu0 %v1457
    %2136 = vmatpush1.bf16.msra.mxu0 %v1456
    %2137 = vmatprep.subr.bf16.mxu0 %v1469
    %2138 = vmatpush1.bf16.msra.mxu0 %v1468
    %2139 = vmatprep.subr.bf16.mxu0 %v1481
    %2140 = vmatpush1.bf16.msra.mxu0 %v1480
    %2141 = vmatprep.subr.bf16.mxu0 %v1493
    %2142 = vmatpush1.bf16.msra.mxu0 %v1492
    %2143 = vmatprep.subr.bf16.mxu0 %v1505
    %2144 = vmatpush1.bf16.msra.mxu0 %v1504
    %2145 = vmatprep.subr.bf16.mxu0 %v1517
    %2146 = vmatpush1.bf16.msra.mxu0 %v1516
    %2147 = vmatprep.subr.bf16.mxu0 %v1529
    %2148 = vmatpush1.bf16.msra.mxu0 %v1528
    %2149 = vmatprep.subr.bf16.mxu0 %v1541
    %2150 = vmatpush1.bf16.msra.mxu0 %v1540
    %2151 = vmatprep.subr.bf16.mxu0 0
    %2152 = vmatpush1.bf16.msra.mxu0 0
    %2153 = vmatprep.subr.bf16.mxu0 0
    %2154 = vmatpush1.bf16.msra.mxu0 0
    %2155 = vmatprep.subr.bf16.mxu0 0
    %2156 = vmatpush1.bf16.msra.mxu0 0
    %2157 = vmatprep.subr.bf16.mxu0 0
    %2158 = vmatpush1.bf16.msra.mxu0 0
    %2159 = vmatprep.subr.bf16.mxu0 0
    %2160 = vmatpush1.bf16.msra.mxu0 0
    %2161 = vmatprep.subr.bf16.mxu0 0
    %2162 = vmatpush1.bf16.msra.mxu0 0
    %2163 = vmatprep.subr.bf16.mxu0 0
    %2164 = vmatpush1.bf16.msra.mxu0 0
    %2165 = vmatprep.subr.bf16.mxu0 0
    %2166 = vmatpush1.bf16.msra.mxu0 0
    %2167 = vmatprep.mubr.bf16.mxu0 0
    %2168 = vmatmul.mubr.bf16.gmra.mrb[0].mxu0 %v390
    %v2169 = vpop.f32.mrb[0].mxu0
    %v2170 = vadd.f32 %v2127, %v2169
    %v2171 = vpop.f32.mrb[0].mxu0
    %v2172 = vadd.f32 %v2129, %v2171
    %v2173 = vpop.f32.mrb[0].mxu0
    %v2174 = vadd.f32 %v2131, %v2173
    %v2175 = vpop.f32.mrb[0].mxu0
    %v2176 = vadd.f32 %v2133, %v2175
    %2177 = vdwg.mxu0
    %2178 = vmatprep.subr.bf16.mxu0 %v1267
    %2179 = vmatpush1.bf16.msra.mxu0 %v1266
    %2180 = vmatprep.subr.bf16.mxu0 %v1279
    %2181 = vmatpush1.bf16.msra.mxu0 %v1278
    %2182 = vmatprep.subr.bf16.mxu0 %v1291
    %2183 = vmatpush1.bf16.msra.mxu0 %v1290
    %2184 = vmatprep.subr.bf16.mxu0 %v1303
    %2185 = vmatpush1.bf16.msra.mxu0 %v1302
    %2186 = vmatprep.subr.bf16.mxu0 %v1315
    %2187 = vmatpush1.bf16.msra.mxu0 %v1314
    %2188 = vmatprep.subr.bf16.mxu0 %v1327
    %2189 = vmatpush1.bf16.msra.mxu0 %v1326
    %2190 = vmatprep.subr.bf16.mxu0 %v1339
    %2191 = vmatpush1.bf16.msra.mxu0 %v1338
    %2192 = vmatprep.subr.bf16.mxu0 %v1351
    %2193 = vmatpush1.bf16.msra.mxu0 %v1350
    %2194 = vmatprep.subr.bf16.mxu0 %v1363
    %2195 = vmatpush1.bf16.msra.mxu0 %v1362
    %2196 = vmatprep.subr.bf16.mxu0 %v1375
    %2197 = vmatpush1.bf16.msra.mxu0 %v1374
    %2198 = vmatprep.subr.bf16.mxu0 %v1387
    %2199 = vmatpush1.bf16.msra.mxu0 %v1386
    %2200 = vmatprep.subr.bf16.mxu0 %v1399
    %2201 = vmatpush1.bf16.msra.mxu0 %v1398
    %2202 = vmatprep.subr.bf16.mxu0 %v1411
    %2203 = vmatpush1.bf16.msra.mxu0 %v1410
    %2204 = vmatprep.subr.bf16.mxu0 %v1423
    %2205 = vmatpush1.bf16.msra.mxu0 %v1422
    %2206 = vmatprep.subr.bf16.mxu0 %v1435
    %2207 = vmatpush1.bf16.msra.mxu0 %v1434
    %2208 = vmatprep.subr.bf16.mxu0 %v1447
    %2209 = vmatpush1.bf16.msra.mxu0 %v1446
    %2210 = vmatprep.mubr.bf16.mxu0 %v389
    %2211 = vmatmul.mubr.bf16.gmra.mrb[0].mxu0 %v388
    %v2212 = vpop.f32.mrb[0].mxu0
    %v2213 = vadd.f32 %v353, %v2212
    %v2214 = vpop.f32.mrb[0].mxu0
    %v2215 = vadd.f32 %v357, %v2214
    %v2216 = vpop.f32.mrb[0].mxu0
    %v2217 = vadd.f32 %v353, %v2216
    %v2218 = vpop.f32.mrb[0].mxu0
    %v2219 = vadd.f32 %v357, %v2218
    %2220 = vdwg.mxu0
    %2221 = vmatprep.subr.bf16.mxu0 %v1459
    %2222 = vmatpush1.bf16.msra.mxu0 %v1458
    %2223 = vmatprep.subr.bf16.mxu0 %v1471
    %2224 = vmatpush1.bf16.msra.mxu0 %v1470
    %2225 = vmatprep.subr.bf16.mxu0 %v1483
    %2226 = vmatpush1.bf16.msra.mxu0 %v1482
    %2227 = vmatprep.subr.bf16.mxu0 %v1495
    %2228 = vmatpush1.bf16.msra.mxu0 %v1494
    %2229 = vmatprep.subr.bf16.mxu0 %v1507
    %2230 = vmatpush1.bf16.msra.mxu0 %v1506
    %2231 = vmatprep.subr.bf16.mxu0 %v1519
    %2232 = vmatpush1.bf16.msra.mxu0 %v1518
    %2233 = vmatprep.subr.bf16.mxu0 %v1531
    %2234 = vmatpush1.bf16.msra.mxu0 %v1530
    %2235 = vmatprep.subr.bf16.mxu0 %v1543
    %2236 = vmatpush1.bf16.msra.mxu0 %v1542
    %2237 = vmatprep.subr.bf16.mxu0 0
    %2238 = vmatpush1.bf16.msra.mxu0 0
    %2239 = vmatprep.subr.bf16.mxu0 0
    %2240 = vmatpush1.bf16.msra.mxu0 0
    %2241 = vmatprep.subr.bf16.mxu0 0
    %2242 = vmatpush1.bf16.msra.mxu0 0
    %2243 = vmatprep.subr.bf16.mxu0 0
    %2244 = vmatpush1.bf16.msra.mxu0 0
    %2245 = vmatprep.subr.bf16.mxu0 0
    %2246 = vmatpush1.bf16.msra.mxu0 0
    %2247 = vmatprep.subr.bf16.mxu0 0
    %2248 = vmatpush1.bf16.msra.mxu0 0
    %2249 = vmatprep.subr.bf16.mxu0 0
    %2250 = vmatpush1.bf16.msra.mxu0 0
    %2251 = vmatprep.subr.bf16.mxu0 0
    %2252 = vmatpush1.bf16.msra.mxu0 0
    %2253 = vmatprep.mubr.bf16.mxu0 0
    %2254 = vmatmul.mubr.bf16.gmra.mrb[0].mxu0 %v390
    %v2255 = vpop.f32.mrb[0].mxu0
    %v2256 = vadd.f32 %v2213, %v2255
    %v2257 = vpop.f32.mrb[0].mxu0
    %v2258 = vadd.f32 %v2215, %v2257
    %v2259 = vpop.f32.mrb[0].mxu0
    %v2260 = vadd.f32 %v2217, %v2259
    %v2261 = vpop.f32.mrb[0].mxu0
    %v2262 = vadd.f32 %v2219, %v2261
    %2263 = vdwg.mxu0
    %2264 = vmatprep.subr.bf16.mxu0 %v1269
    %2265 = vmatpush1.bf16.msra.mxu0 %v1268
    %2266 = vmatprep.subr.bf16.mxu0 %v1281
    %2267 = vmatpush1.bf16.msra.mxu0 %v1280
    %2268 = vmatprep.subr.bf16.mxu0 %v1293
    %2269 = vmatpush1.bf16.msra.mxu0 %v1292
    %2270 = vmatprep.subr.bf16.mxu0 %v1305
    %2271 = vmatpush1.bf16.msra.mxu0 %v1304
    %2272 = vmatprep.subr.bf16.mxu0 %v1317
    %2273 = vmatpush1.bf16.msra.mxu0 %v1316
    %2274 = vmatprep.subr.bf16.mxu0 %v1329
    %2275 = vmatpush1.bf16.msra.mxu0 %v1328
    %2276 = vmatprep.subr.bf16.mxu0 %v1341
    %2277 = vmatpush1.bf16.msra.mxu0 %v1340
    %2278 = vmatprep.subr.bf16.mxu0 %v1353
    %2279 = vmatpush1.bf16.msra.mxu0 %v1352
    %2280 = vmatprep.subr.bf16.mxu0 %v1365
    %2281 = vmatpush1.bf16.msra.mxu0 %v1364
    %2282 = vmatprep.subr.bf16.mxu0 %v1377
    %2283 = vmatpush1.bf16.msra.mxu0 %v1376
    %2284 = vmatprep.subr.bf16.mxu0 %v1389
    %2285 = vmatpush1.bf16.msra.mxu0 %v1388
    %2286 = vmatprep.subr.bf16.mxu0 %v1401
    %2287 = vmatpush1.bf16.msra.mxu0 %v1400
    %2288 = vmatprep.subr.bf16.mxu0 %v1413
    %2289 = vmatpush1.bf16.msra.mxu0 %v1412
    %2290 = vmatprep.subr.bf16.mxu0 %v1425
    %2291 = vmatpush1.bf16.msra.mxu0 %v1424
    %2292 = vmatprep.subr.bf16.mxu0 %v1437
    %2293 = vmatpush1.bf16.msra.mxu0 %v1436
    %2294 = vmatprep.subr.bf16.mxu0 %v1449
    %2295 = vmatpush1.bf16.msra.mxu0 %v1448
    %2296 = vmatprep.mubr.bf16.mxu0 %v389
    %2297 = vmatmul.mubr.bf16.gmra.mrb[0].mxu0 %v388
    %v2298 = vpop.f32.mrb[0].mxu0
    %v2299 = vadd.f32 %v361, %v2298
    %v2300 = vpop.f32.mrb[0].mxu0
    %v2301 = vadd.f32 %v365, %v2300
    %v2302 = vpop.f32.mrb[0].mxu0
    %v2303 = vadd.f32 %v361, %v2302
    %v2304 = vpop.f32.mrb[0].mxu0
    %v2305 = vadd.f32 %v365, %v2304
    %2306 = vdwg.mxu0
    %2307 = vmatprep.subr.bf16.mxu0 %v1461
    %2308 = vmatpush1.bf16.msra.mxu0 %v1460
    %2309 = vmatprep.subr.bf16.mxu0 %v1473
    %2310 = vmatpush1.bf16.msra.mxu0 %v1472
    %2311 = vmatprep.subr.bf16.mxu0 %v1485
    %2312 = vmatpush1.bf16.msra.mxu0 %v1484
    %2313 = vmatprep.subr.bf16.mxu0 %v1497
    %2314 = vmatpush1.bf16.msra.mxu0 %v1496
    %2315 = vmatprep.subr.bf16.mxu0 %v1509
    %2316 = vmatpush1.bf16.msra.mxu0 %v1508
    %2317 = vmatprep.subr.bf16.mxu0 %v1521
    %2318 = vmatpush1.bf16.msra.mxu0 %v1520
    %2319 = vmatprep.subr.bf16.mxu0 %v1533
    %2320 = vmatpush1.bf16.msra.mxu0 %v1532
    %2321 = vmatprep.subr.bf16.mxu0 %v1545
    %2322 = vmatpush1.bf16.msra.mxu0 %v1544
    %2323 = vmatprep.subr.bf16.mxu0 0
    %2324 = vmatpush1.bf16.msra.mxu0 0
    %2325 = vmatprep.subr.bf16.mxu0 0
    %2326 = vmatpush1.bf16.msra.mxu0 0
    %2327 = vmatprep.subr.bf16.mxu0 0
    %2328 = vmatpush1.bf16.msra.mxu0 0
    %2329 = vmatprep.subr.bf16.mxu0 0
    %2330 = vmatpush1.bf16.msra.mxu0 0
    %2331 = vmatprep.subr.bf16.mxu0 0
    %2332 = vmatpush1.bf16.msra.mxu0 0
    %2333 = vmatprep.subr.bf16.mxu0 0
    %2334 = vmatpush1.bf16.msra.mxu0 0
    %2335 = vmatprep.subr.bf16.mxu0 0
    %2336 = vmatpush1.bf16.msra.mxu0 0
    %2337 = vmatprep.subr.bf16.mxu0 0
    %2338 = vmatpush1.bf16.msra.mxu0 0
    %2339 = vmatprep.mubr.bf16.mxu0 0
    %2340 = vmatmul.mubr.bf16.gmra.mrb[0].mxu0 %v390
    %v2341 = vpop.f32.mrb[0].mxu0
    %v2342 = vadd.f32 %v2299, %v2341
    %v2343 = vpop.f32.mrb[0].mxu0
    %v2344 = vadd.f32 %v2301, %v2343
    %v2345 = vpop.f32.mrb[0].mxu0
    %v2346 = vadd.f32 %v2303, %v2345
    %v2347 = vpop.f32.mrb[0].mxu0
    %v2348 = vadd.f32 %v2305, %v2347
    %2349 = vdwg.mxu0
    %v2350 = vmax.f32 %v1912, 0.0
    %v2351 = vmax.f32 %v1914, 0.0
    %v2352 = vmax.f32 %v1998, 0.0
    %v2353 = vmax.f32 %v2000, 0.0
    %v2354 = vmax.f32 %v2084, 0.0
    %v2355 = vmax.f32 %v2086, 0.0
    %v2356 = vmax.f32 %v2170, 0.0
    %v2357 = vmax.f32 %v2172, 0.0
    %v2358 = vmax.f32 %v2256, 0.0
    %v2359 = vmax.f32 %v2258, 0.0
    %v2360 = vmax.f32 %v2342, 0.0
    %v2361 = vmax.f32 %v2344, 0.0
    %v2362 = vmax.f32 %v1916, 0.0
    %v2363 = vmax.f32 %v1918, 0.0
    %v2364 = vmax.f32 %v2002, 0.0
    %v2365 = vmax.f32 %v2004, 0.0
    %v2366 = vmax.f32 %v2088, 0.0
    %v2367 = vmax.f32 %v2090, 0.0
    %v2368 = vmax.f32 %v2174, 0.0
    %v2369 = vmax.f32 %v2176, 0.0
    %v2370 = vmax.f32 %v2260, 0.0
    %v2371 = vmax.f32 %v2262, 0.0
    %v2372 = vmax.f32 %v2346, 0.0
    %v2373 = vmax.f32 %v2348, 0.0
    %v2374 = vpack.c.bf16 %v2362, %v2350
    %v2375 = vpack.c.bf16 %v2363, %v2351
    %v2376 = vpack.c.bf16 %v2364, %v2352
    %v2377 = vpack.c.bf16 %v2365, %v2353
    %v2378 = vpack.c.bf16 %v2366, %v2354
    %v2379 = vpack.c.bf16 %v2367, %v2355
    %v2380 = vpack.c.bf16 %v2368, %v2356
    %v2381 = vpack.c.bf16 %v2369, %v2357
    %v2382 = vpack.c.bf16 %v2370, %v2358
    %v2383 = vpack.c.bf16 %v2371, %v2359
    %v2384 = vpack.c.bf16 %v2372, %v2360
    %v2385 = vpack.c.bf16 %v2373, %v2361
    %v2386 = vld [vmem:[%s3] sm:$0xff]
    %v2387 = vld [vmem:[%s3 + $0x8] sm:$0xf]
    %v2388 = vld [vmem:[%s3 + $0xc] sm:$0xff]
    %v2389 = vld [vmem:[%s3 + $0x14] sm:$0xf]
    %v2390 = vld [vmem:[%s3 + $0x18] sm:$0xff]
    %v2391 = vld [vmem:[%s3 + $0x20] sm:$0xf]
    %v2392 = vld [vmem:[%s3 + $0x24] sm:$0xff]
    %v2393 = vld [vmem:[%s3 + $0x2c] sm:$0xf]
    %v2394 = vld [vmem:[%s3 + $0x30] sm:$0xff]
    %v2395 = vld [vmem:[%s3 + $0x38] sm:$0xf]
    %v2396 = vld [vmem:[%s3 + $0x3c] sm:$0xff]
    %v2397 = vld [vmem:[%s3 + $0x44] sm:$0xf]
    %v2398 = vld [vmem:[%s3 + $0x48] sm:$0xff]
    %v2399 = vld [vmem:[%s3 + $0x50] sm:$0xf]
    %v2400 = vld [vmem:[%s3 + $0x54] sm:$0xff]
    %v2401 = vld [vmem:[%s3 + $0x5c] sm:$0xf]
    %v2402 = vld [vmem:[%s3 + $0x60] sm:$0xff]
    %v2403 = vld [vmem:[%s3 + $0x68] sm:$0xf]
    %v2404 = vld [vmem:[%s3 + $0x6c] sm:$0xff]
    %v2405 = vld [vmem:[%s3 + $0x74] sm:$0xf]
    %v2406 = vld [vmem:[%s3 + $0x78] sm:$0xff]
    %v2407 = vld [vmem:[%s3 + $0x80] sm:$0xf]
    %v2408 = vld [vmem:[%s3 + $0x84] sm:$0xff]
    %v2409 = vld [vmem:[%s3 + $0x8c] sm:$0xf]
    %v2410 = vld [vmem:[%s3 + $0x90] sm:$0xff]
    %v2411 = vld [vmem:[%s3 + $0x98] sm:$0xf]
    %v2412 = vld [vmem:[%s3 + $0x9c] sm:$0xff]
    %v2413 = vld [vmem:[%s3 + $0xa4] sm:$0xf]
    %v2414 = vld [vmem:[%s3 + $0xa8] sm:$0xff]
    %v2415 = vld [vmem:[%s3 + $0xb0] sm:$0xf]
    %v2416 = vld [vmem:[%s3 + $0xb4] sm:$0xff]
    %v2417 = vld [vmem:[%s3 + $0xbc] sm:$0xf]
    %v2418 = vld [vmem:[%s3 + $0xc0] sm:$0xff]
    %v2419 = vld [vmem:[%s3 + $0xc8] sm:$0xf]
    %v2420 = vld [vmem:[%s3 + $0xcc] sm:$0xff]
    %v2421 = vld [vmem:[%s3 + $0xd4] sm:$0xf]
    %v2422 = vld [vmem:[%s3 + $0xd8] sm:$0xff]
    %v2423 = vld [vmem:[%s3 + $0xe0] sm:$0xf]
    %v2424 = vld [vmem:[%s3 + $0xe4] sm:$0xff]
    %v2425 = vld [vmem:[%s3 + $0xec] sm:$0xf]
    %v2426 = vld [vmem:[%s3 + $0xf0] sm:$0xff]
    %v2427 = vld [vmem:[%s3 + $0xf8] sm:$0xf]
    %v2428 = vld [vmem:[%s3 + $0xfc] sm:$0xff]
    %v2429 = vld [vmem:[%s3 + $0x104] sm:$0xf]
    %v2430 = vld [vmem:[%s3 + $0x108] sm:$0xff]
    %v2431 = vld [vmem:[%s3 + $0x110] sm:$0xf]
    %v2432 = vld [vmem:[%s3 + $0x114] sm:$0xff]
    %v2433 = vld [vmem:[%s3 + $0x11c] sm:$0xf]
    %v2434 = vld [vmem:[%s3 + $0x120] sm:$0xff]
    %v2435 = vld [vmem:[%s3 + $0x128] sm:$0xf]
    %v2436 = vld [vmem:[%s3 + $0x12c] sm:$0xff]
    %v2437 = vld [vmem:[%s3 + $0x134] sm:$0xf]
    %v2438 = vld [vmem:[%s3 + $0x138] sm:$0xff]
    %v2439 = vld [vmem:[%s3 + $0x140] sm:$0xf]
    %v2440 = vld [vmem:[%s3 + $0x144] sm:$0xff]
    %v2441 = vld [vmem:[%s3 + $0x14c] sm:$0xf]
    %v2442 = vld [vmem:[%s3 + $0x150] sm:$0xff]
    %v2443 = vld [vmem:[%s3 + $0x158] sm:$0xf]
    %v2444 = vld [vmem:[%s3 + $0x15c] sm:$0xff]
    %v2445 = vld [vmem:[%s3 + $0x164] sm:$0xf]
    %v2446 = vld [vmem:[%s3 + $0x168] sm:$0xff]
    %v2447 = vld [vmem:[%s3 + $0x170] sm:$0xf]
    %v2448 = vld [vmem:[%s3 + $0x174] sm:$0xff]
    %v2449 = vld [vmem:[%s3 + $0x17c] sm:$0xf]
    %v2450 = vld [vmem:[%s3 + $0x180] sm:$0xff]
    %v2451 = vld [vmem:[%s3 + $0x188] sm:$0xf]
    %v2452 = vld [vmem:[%s3 + $0x18c] sm:$0xff]
    %v2453 = vld [vmem:[%s3 + $0x194] sm:$0xf]
    %v2454 = vld [vmem:[%s3 + $0x198] sm:$0xff]
    %v2455 = vld [vmem:[%s3 + $0x1a0] sm:$0xf]
    %v2456 = vld [vmem:[%s3 + $0x1a4] sm:$0xff]
    %v2457 = vld [vmem:[%s3 + $0x1ac] sm:$0xf]
    %v2458 = vld [vmem:[%s3 + $0x1b0] sm:$0xff]
    %v2459 = vld [vmem:[%s3 + $0x1b8] sm:$0xf]
    %v2460 = vld [vmem:[%s3 + $0x1bc] sm:$0xff]
    %v2461 = vld [vmem:[%s3 + $0x1c4] sm:$0xf]
    %v2462 = vld [vmem:[%s3 + $0x1c8] sm:$0xff]
    %v2463 = vld [vmem:[%s3 + $0x1d0] sm:$0xf]
    %v2464 = vld [vmem:[%s3 + $0x1d4] sm:$0xff]
    %v2465 = vld [vmem:[%s3 + $0x1dc] sm:$0xf]
    %v2466 = vld [vmem:[%s3 + $0x1e0] sm:$0xff]
    %v2467 = vld [vmem:[%s3 + $0x1e8] sm:$0xf]
    %v2468 = vld [vmem:[%s3 + $0x1ec] sm:$0xff]
    %v2469 = vld [vmem:[%s3 + $0x1f4] sm:$0xf]
    %v2470 = vld [vmem:[%s3 + $0x1f8] sm:$0xff]
    %v2471 = vld [vmem:[%s3 + $0x200] sm:$0xf]
    %v2472 = vld [vmem:[%s3 + $0x204] sm:$0xff]
    %v2473 = vld [vmem:[%s3 + $0x20c] sm:$0xf]
    %v2474 = vld [vmem:[%s3 + $0x210] sm:$0xff]
    %v2475 = vld [vmem:[%s3 + $0x218] sm:$0xf]
    %v2476 = vld [vmem:[%s3 + $0x21c] sm:$0xff]
    %v2477 = vld [vmem:[%s3 + $0x224] sm:$0xf]
    %v2478 = vld [vmem:[%s3 + $0x228] sm:$0xff]
    %v2479 = vld [vmem:[%s3 + $0x230] sm:$0xf]
    %v2480 = vld [vmem:[%s3 + $0x234] sm:$0xff]
    %v2481 = vld [vmem:[%s3 + $0x23c] sm:$0xf]
    %v2482 = vld [vmem:[%s3 + $0x240] sm:$0xff]
    %v2483 = vld [vmem:[%s3 + $0x248] sm:$0xf]
    %v2484 = vld [vmem:[%s3 + $0x24c] sm:$0xff]
    %v2485 = vld [vmem:[%s3 + $0x254] sm:$0xf]
    %v2486 = vld [vmem:[%s3 + $0x258] sm:$0xff]
    %v2487 = vld [vmem:[%s3 + $0x260] sm:$0xf]
    %v2488 = vld [vmem:[%s3 + $0x264] sm:$0xff]
    %v2489 = vld [vmem:[%s3 + $0x26c] sm:$0xf]
    %v2490 = vld [vmem:[%s3 + $0x270] sm:$0xff]
    %v2491 = vld [vmem:[%s3 + $0x278] sm:$0xf]
    %v2492 = vld [vmem:[%s3 + $0x27c] sm:$0xff]
    %v2493 = vld [vmem:[%s3 + $0x284] sm:$0xf]
    %v2494 = vld [vmem:[%s3 + $0x288] sm:$0xff]
    %v2495 = vld [vmem:[%s3 + $0x290] sm:$0xf]
    %v2496 = vld [vmem:[%s3 + $0x294] sm:$0xff]
    %v2497 = vld [vmem:[%s3 + $0x29c] sm:$0xf]
    %v2498 = vld [vmem:[%s3 + $0x2a0] sm:$0xff]
    %v2499 = vld [vmem:[%s3 + $0x2a8] sm:$0xf]
    %v2500 = vld [vmem:[%s3 + $0x2ac] sm:$0xff]
    %v2501 = vld [vmem:[%s3 + $0x2b4] sm:$0xf]
    %v2502 = vld [vmem:[%s3 + $0x2b8] sm:$0xff]
    %v2503 = vld [vmem:[%s3 + $0x2c0] sm:$0xf]
    %v2504 = vld [vmem:[%s3 + $0x2c4] sm:$0xff]
    %v2505 = vld [vmem:[%s3 + $0x2cc] sm:$0xf]
    %v2506 = vld [vmem:[%s3 + $0x2d0] sm:$0xff]
    %v2507 = vld [vmem:[%s3 + $0x2d8] sm:$0xf]
    %v2508 = vld [vmem:[%s3 + $0x2dc] sm:$0xff]
    %v2509 = vld [vmem:[%s3 + $0x2e4] sm:$0xf]
    %v2510 = vld [vmem:[%s3 + $0x2e8] sm:$0xff]
    %v2511 = vld [vmem:[%s3 + $0x2f0] sm:$0xf]
    %v2512 = vld [vmem:[%s3 + $0x2f4] sm:$0xff]
    %v2513 = vld [vmem:[%s3 + $0x2fc] sm:$0xf]
    %v2514 = vld [vmem:[%s3 + $0x300] sm:$0xff]
    %v2515 = vld [vmem:[%s3 + $0x308] sm:$0xf]
    %v2516 = vld [vmem:[%s3 + $0x30c] sm:$0xff]
    %v2517 = vld [vmem:[%s3 + $0x314] sm:$0xf]
    %v2518 = vld [vmem:[%s3 + $0x318] sm:$0xff]
    %v2519 = vld [vmem:[%s3 + $0x320] sm:$0xf]
    %v2520 = vld [vmem:[%s3 + $0x324] sm:$0xff]
    %v2521 = vld [vmem:[%s3 + $0x32c] sm:$0xf]
    %v2522 = vld [vmem:[%s3 + $0x330] sm:$0xff]
    %v2523 = vld [vmem:[%s3 + $0x338] sm:$0xf]
    %v2524 = vld [vmem:[%s3 + $0x33c] sm:$0xff]
    %v2525 = vld [vmem:[%s3 + $0x344] sm:$0xf]
    %v2526 = vld [vmem:[%s3 + $0x348] sm:$0xff]
    %v2527 = vld [vmem:[%s3 + $0x350] sm:$0xf]
    %v2528 = vld [vmem:[%s3 + $0x354] sm:$0xff]
    %v2529 = vld [vmem:[%s3 + $0x35c] sm:$0xf]
    %v2530 = vld [vmem:[%s3 + $0x360] sm:$0xff]
    %v2531 = vld [vmem:[%s3 + $0x368] sm:$0xf]
    %v2532 = vld [vmem:[%s3 + $0x36c] sm:$0xff]
    %v2533 = vld [vmem:[%s3 + $0x374] sm:$0xf]
    %v2534 = vld [vmem:[%s3 + $0x378] sm:$0xff]
    %v2535 = vld [vmem:[%s3 + $0x380] sm:$0xf]
    %v2536 = vld [vmem:[%s3 + $0x384] sm:$0xff]
    %v2537 = vld [vmem:[%s3 + $0x38c] sm:$0xf]
    %v2538 = vld [vmem:[%s3 + $0x390] sm:$0xff]
    %v2539 = vld [vmem:[%s3 + $0x398] sm:$0xf]
    %v2540 = vld [vmem:[%s3 + $0x39c] sm:$0xff]
    %v2541 = vld [vmem:[%s3 + $0x3a4] sm:$0xf]
    %v2542 = vld [vmem:[%s3 + $0x3a8] sm:$0xff]
    %v2543 = vld [vmem:[%s3 + $0x3b0] sm:$0xf]
    %v2544 = vld [vmem:[%s3 + $0x3b4] sm:$0xff]
    %v2545 = vld [vmem:[%s3 + $0x3bc] sm:$0xf]
    %v2546 = vld [vmem:[%s3 + $0x3c0] sm:$0xff]
    %v2547 = vld [vmem:[%s3 + $0x3c8] sm:$0xf]
    %v2548 = vld [vmem:[%s3 + $0x3cc] sm:$0xff]
    %v2549 = vld [vmem:[%s3 + $0x3d4] sm:$0xf]
    %v2550 = vld [vmem:[%s3 + $0x3d8] sm:$0xff]
    %v2551 = vld [vmem:[%s3 + $0x3e0] sm:$0xf]
    %v2552 = vld [vmem:[%s3 + $0x3e4] sm:$0xff]
    %v2553 = vld [vmem:[%s3 + $0x3ec] sm:$0xf]
    %v2554 = vld [vmem:[%s3 + $0x3f0] sm:$0xff]
    %v2555 = vld [vmem:[%s3 + $0x3f8] sm:$0xf]
    %v2556 = vld [vmem:[%s3 + $0x3fc] sm:$0xff]
    %v2557 = vld [vmem:[%s3 + $0x404] sm:$0xf]
    %v2558 = vld [vmem:[%s3 + $0x408] sm:$0xff]
    %v2559 = vld [vmem:[%s3 + $0x410] sm:$0xf]
    %v2560 = vld [vmem:[%s3 + $0x414] sm:$0xff]
    %v2561 = vld [vmem:[%s3 + $0x41c] sm:$0xf]
    %v2562 = vld [vmem:[%s3 + $0x420] sm:$0xff]
    %v2563 = vld [vmem:[%s3 + $0x428] sm:$0xf]
    %v2564 = vld [vmem:[%s3 + $0x42c] sm:$0xff]
    %v2565 = vld [vmem:[%s3 + $0x434] sm:$0xf]
    %v2566 = vld [vmem:[%s3 + $0x438] sm:$0xff]
    %v2567 = vld [vmem:[%s3 + $0x440] sm:$0xf]
    %v2568 = vld [vmem:[%s3 + $0x444] sm:$0xff]
    %v2569 = vld [vmem:[%s3 + $0x44c] sm:$0xf]
    %v2570 = vld [vmem:[%s3 + $0x450] sm:$0xff]
    %v2571 = vld [vmem:[%s3 + $0x458] sm:$0xf]
    %v2572 = vld [vmem:[%s3 + $0x45c] sm:$0xff]
    %v2573 = vld [vmem:[%s3 + $0x464] sm:$0xf]
    %v2574 = vld [vmem:[%s3 + $0x468] sm:$0xff]
    %v2575 = vld [vmem:[%s3 + $0x470] sm:$0xf]
    %v2576 = vld [vmem:[%s3 + $0x474] sm:$0xff]
    %v2577 = vld [vmem:[%s3 + $0x47c] sm:$0xf]
    %v2578 = vld [vmem:[%s3 + $0x480] sm:$0xff]
    %v2579 = vld [vmem:[%s3 + $0x488] sm:$0xf]
    %v2580 = vld [vmem:[%s3 + $0x48c] sm:$0xff]
    %v2581 = vld [vmem:[%s3 + $0x494] sm:$0xf]
    %v2582 = vld [vmem:[%s3 + $0x498] sm:$0xff]
    %v2583 = vld [vmem:[%s3 + $0x4a0] sm:$0xf]
    %v2584 = vld [vmem:[%s3 + $0x4a4] sm:$0xff]
    %v2585 = vld [vmem:[%s3 + $0x4ac] sm:$0xf]
    %v2586 = vld [vmem:[%s3 + $0x4b0] sm:$0xff]
    %v2587 = vld [vmem:[%s3 + $0x4b8] sm:$0xf]
    %v2588 = vld [vmem:[%s3 + $0x4bc] sm:$0xff]
    %v2589 = vld [vmem:[%s3 + $0x4c4] sm:$0xf]
    %v2590 = vld [vmem:[%s3 + $0x4c8] sm:$0xff]
    %v2591 = vld [vmem:[%s3 + $0x4d0] sm:$0xf]
    %v2592 = vld [vmem:[%s3 + $0x4d4] sm:$0xff]
    %v2593 = vld [vmem:[%s3 + $0x4dc] sm:$0xf]
    %v2594 = vld [vmem:[%s3 + $0x4e0] sm:$0xff]
    %v2595 = vld [vmem:[%s3 + $0x4e8] sm:$0xf]
    %v2596 = vld [vmem:[%s3 + $0x4ec] sm:$0xff]
    %v2597 = vld [vmem:[%s3 + $0x4f4] sm:$0xf]
    %v2598 = vld [vmem:[%s3 + $0x4f8] sm:$0xff]
    %v2599 = vld [vmem:[%s3 + $0x500] sm:$0xf]
    %v2600 = vld [vmem:[%s3 + $0x504] sm:$0xff]
    %v2601 = vld [vmem:[%s3 + $0x50c] sm:$0xf]
    %v2602 = vld [vmem:[%s3 + $0x510] sm:$0xff]
    %v2603 = vld [vmem:[%s3 + $0x518] sm:$0xf]
    %v2604 = vld [vmem:[%s3 + $0x51c] sm:$0xff]
    %v2605 = vld [vmem:[%s3 + $0x524] sm:$0xf]
    %v2606 = vld [vmem:[%s3 + $0x528] sm:$0xff]
    %v2607 = vld [vmem:[%s3 + $0x530] sm:$0xf]
    %v2608 = vld [vmem:[%s3 + $0x534] sm:$0xff]
    %v2609 = vld [vmem:[%s3 + $0x53c] sm:$0xf]
    %v2610 = vld [vmem:[%s3 + $0x540] sm:$0xff]
    %v2611 = vld [vmem:[%s3 + $0x548] sm:$0xf]
    %v2612 = vld [vmem:[%s3 + $0x54c] sm:$0xff]
    %v2613 = vld [vmem:[%s3 + $0x554] sm:$0xf]
    %v2614 = vld [vmem:[%s3 + $0x558] sm:$0xff]
    %v2615 = vld [vmem:[%s3 + $0x560] sm:$0xf]
    %v2616 = vld [vmem:[%s3 + $0x564] sm:$0xff]
    %v2617 = vld [vmem:[%s3 + $0x56c] sm:$0xf]
    %v2618 = vld [vmem:[%s3 + $0x570] sm:$0xff]
    %v2619 = vld [vmem:[%s3 + $0x578] sm:$0xf]
    %v2620 = vld [vmem:[%s3 + $0x57c] sm:$0xff]
    %v2621 = vld [vmem:[%s3 + $0x584] sm:$0xf]
    %v2622 = vld [vmem:[%s3 + $0x588] sm:$0xff]
    %v2623 = vld [vmem:[%s3 + $0x590] sm:$0xf]
    %v2624 = vld [vmem:[%s3 + $0x594] sm:$0xff]
    %v2625 = vld [vmem:[%s3 + $0x59c] sm:$0xf]
    %v2626 = vld [vmem:[%s3 + $0x5a0] sm:$0xff]
    %v2627 = vld [vmem:[%s3 + $0x5a8] sm:$0xf]
    %v2628 = vld [vmem:[%s3 + $0x5ac] sm:$0xff]
    %v2629 = vld [vmem:[%s3 + $0x5b4] sm:$0xf]
    %v2630 = vld [vmem:[%s3 + $0x5b8] sm:$0xff]
    %v2631 = vld [vmem:[%s3 + $0x5c0] sm:$0xf]
    %v2632 = vld [vmem:[%s3 + $0x5c4] sm:$0xff]
    %v2633 = vld [vmem:[%s3 + $0x5cc] sm:$0xf]
    %v2634 = vld [vmem:[%s3 + $0x5d0] sm:$0xff]
    %v2635 = vld [vmem:[%s3 + $0x5d8] sm:$0xf]
    %v2636 = vld [vmem:[%s3 + $0x5dc] sm:$0xff]
    %v2637 = vld [vmem:[%s3 + $0x5e4] sm:$0xf]
    %v2638 = vld [vmem:[%s3 + $0x5e8] sm:$0xff]
    %v2639 = vld [vmem:[%s3 + $0x5f0] sm:$0xf]
    %v2640 = vld [vmem:[%s3 + $0x5f4] sm:$0xff]
    %v2641 = vld [vmem:[%s3 + $0x5fc] sm:$0xf]
    %v2642 = vld [vmem:[%s3 + $0x600] sm:$0xff]
    %v2643 = vld [vmem:[%s3 + $0x608] sm:$0xf]
    %v2644 = vld [vmem:[%s3 + $0x60c] sm:$0xff]
    %v2645 = vld [vmem:[%s3 + $0x614] sm:$0xf]
    %v2646 = vld [vmem:[%s3 + $0x618] sm:$0xff]
    %v2647 = vld [vmem:[%s3 + $0x620] sm:$0xf]
    %v2648 = vld [vmem:[%s3 + $0x624] sm:$0xff]
    %v2649 = vld [vmem:[%s3 + $0x62c] sm:$0xf]
    %v2650 = vld [vmem:[%s3 + $0x630] sm:$0xff]
    %v2651 = vld [vmem:[%s3 + $0x638] sm:$0xf]
    %v2652 = vld [vmem:[%s3 + $0x63c] sm:$0xff]
    %v2653 = vld [vmem:[%s3 + $0x644] sm:$0xf]
    %v2654 = vld [vmem:[%s3 + $0x648] sm:$0xff]
    %v2655 = vld [vmem:[%s3 + $0x650] sm:$0xf]
    %v2656 = vld [vmem:[%s3 + $0x654] sm:$0xff]
    %v2657 = vld [vmem:[%s3 + $0x65c] sm:$0xf]
    %v2658 = vld [vmem:[%s3 + $0x660] sm:$0xff]
    %v2659 = vld [vmem:[%s3 + $0x668] sm:$0xf]
    %v2660 = vld [vmem:[%s3 + $0x66c] sm:$0xff]
    %v2661 = vld [vmem:[%s3 + $0x674] sm:$0xf]
    %v2662 = vld [vmem:[%s3 + $0x678] sm:$0xff]
    %v2663 = vld [vmem:[%s3 + $0x680] sm:$0xf]
    %v2664 = vld [vmem:[%s3 + $0x684] sm:$0xff]
    %v2665 = vld [vmem:[%s3 + $0x68c] sm:$0xf]
    %v2666 = vld [vmem:[%s3 + $0x690] sm:$0xff]
    %v2667 = vld [vmem:[%s3 + $0x698] sm:$0xf]
    %v2668 = vld [vmem:[%s3 + $0x69c] sm:$0xff]
    %v2669 = vld [vmem:[%s3 + $0x6a4] sm:$0xf]
    %v2670 = vld [vmem:[%s3 + $0x6a8] sm:$0xff]
    %v2671 = vld [vmem:[%s3 + $0x6b0] sm:$0xf]
    %v2672 = vld [vmem:[%s3 + $0x6b4] sm:$0xff]
    %v2673 = vld [vmem:[%s3 + $0x6bc] sm:$0xf]
    %v2674 = vld [vmem:[%s3 + $0x6c0] sm:$0xff]
    %v2675 = vld [vmem:[%s3 + $0x6c8] sm:$0xf]
    %v2676 = vld [vmem:[%s3 + $0x6cc] sm:$0xff]
    %v2677 = vld [vmem:[%s3 + $0x6d4] sm:$0xf]
    %v2678 = vld [vmem:[%s3 + $0x6d8] sm:$0xff]
    %v2679 = vld [vmem:[%s3 + $0x6e0] sm:$0xf]
    %v2680 = vld [vmem:[%s3 + $0x6e4] sm:$0xff]
    %v2681 = vld [vmem:[%s3 + $0x6ec] sm:$0xf]
    %v2682 = vld [vmem:[%s3 + $0x6f0] sm:$0xff]
    %v2683 = vld [vmem:[%s3 + $0x6f8] sm:$0xf]
    %v2684 = vld [vmem:[%s3 + $0x6fc] sm:$0xff]
    %v2685 = vld [vmem:[%s3 + $0x704] sm:$0xf]
    %v2686 = vld [vmem:[%s3 + $0x708] sm:$0xff]
    %v2687 = vld [vmem:[%s3 + $0x710] sm:$0xf]
    %v2688 = vld [vmem:[%s3 + $0x714] sm:$0xff]
    %v2689 = vld [vmem:[%s3 + $0x71c] sm:$0xf]
    %v2690 = vld [vmem:[%s3 + $0x720] sm:$0xff]
    %v2691 = vld [vmem:[%s3 + $0x728] sm:$0xf]
    %v2692 = vld [vmem:[%s3 + $0x72c] sm:$0xff]
    %v2693 = vld [vmem:[%s3 + $0x734] sm:$0xf]
    %v2694 = vld [vmem:[%s3 + $0x738] sm:$0xff]
    %v2695 = vld [vmem:[%s3 + $0x740] sm:$0xf]
    %v2696 = vld [vmem:[%s3 + $0x744] sm:$0xff]
    %v2697 = vld [vmem:[%s3 + $0x74c] sm:$0xf]
    %v2698 = vld [vmem:[%s3 + $0x750] sm:$0xff]
    %v2699 = vld [vmem:[%s3 + $0x758] sm:$0xf]
    %v2700 = vld [vmem:[%s3 + $0x75c] sm:$0xff]
    %v2701 = vld [vmem:[%s3 + $0x764] sm:$0xf]
    %v2702 = vld [vmem:[%s3 + $0x768] sm:$0xff]
    %v2703 = vld [vmem:[%s3 + $0x770] sm:$0xf]
    %v2704 = vld [vmem:[%s3 + $0x774] sm:$0xff]
    %v2705 = vld [vmem:[%s3 + $0x77c] sm:$0xf]
    %v2706 = vld [vmem:[%s3 + $0x780] sm:$0xff]
    %v2707 = vld [vmem:[%s3 + $0x788] sm:$0xf]
    %v2708 = vld [vmem:[%s3 + $0x78c] sm:$0xff]
    %v2709 = vld [vmem:[%s3 + $0x794] sm:$0xf]
    %v2710 = vld [vmem:[%s3 + $0x798] sm:$0xff]
    %v2711 = vld [vmem:[%s3 + $0x7a0] sm:$0xf]
    %v2712 = vld [vmem:[%s3 + $0x7a4] sm:$0xff]
    %v2713 = vld [vmem:[%s3 + $0x7ac] sm:$0xf]
    %v2714 = vld [vmem:[%s3 + $0x7b0] sm:$0xff]
    %v2715 = vld [vmem:[%s3 + $0x7b8] sm:$0xf]
    %v2716 = vld [vmem:[%s3 + $0x7bc] sm:$0xff]
    %v2717 = vld [vmem:[%s3 + $0x7c4] sm:$0xf]
    %v2718 = vld [vmem:[%s3 + $0x7c8] sm:$0xff]
    %v2719 = vld [vmem:[%s3 + $0x7d0] sm:$0xf]
    %v2720 = vld [vmem:[%s3 + $0x7d4] sm:$0xff]
    %v2721 = vld [vmem:[%s3 + $0x7dc] sm:$0xf]
    %v2722 = vld [vmem:[%s3 + $0x7e0] sm:$0xff]
    %v2723 = vld [vmem:[%s3 + $0x7e8] sm:$0xf]
    %v2724 = vld [vmem:[%s3 + $0x7ec] sm:$0xff]
    %v2725 = vld [vmem:[%s3 + $0x7f4] sm:$0xf]
    %v2726 = vld [vmem:[%s3 + $0x7f8] sm:$0xff]
    %v2727 = vld [vmem:[%s3 + $0x800] sm:$0xf]
    %v2728 = vld [vmem:[%s3 + $0x804] sm:$0xff]
    %v2729 = vld [vmem:[%s3 + $0x80c] sm:$0xf]
    %v2730 = vld [vmem:[%s3 + $0x810] sm:$0xff]
    %v2731 = vld [vmem:[%s3 + $0x818] sm:$0xf]
    %v2732 = vld [vmem:[%s3 + $0x81c] sm:$0xff]
    %v2733 = vld [vmem:[%s3 + $0x824] sm:$0xf]
    %v2734 = vld [vmem:[%s3 + $0x828] sm:$0xff]
    %v2735 = vld [vmem:[%s3 + $0x830] sm:$0xf]
    %v2736 = vld [vmem:[%s3 + $0x834] sm:$0xff]
    %v2737 = vld [vmem:[%s3 + $0x83c] sm:$0xf]
    %v2738 = vld [vmem:[%s3 + $0x840] sm:$0xff]
    %v2739 = vld [vmem:[%s3 + $0x848] sm:$0xf]
    %v2740 = vld [vmem:[%s3 + $0x84c] sm:$0xff]
    %v2741 = vld [vmem:[%s3 + $0x854] sm:$0xf]
    %v2742 = vld [vmem:[%s3 + $0x858] sm:$0xff]
    %v2743 = vld [vmem:[%s3 + $0x860] sm:$0xf]
    %v2744 = vld [vmem:[%s3 + $0x864] sm:$0xff]
    %v2745 = vld [vmem:[%s3 + $0x86c] sm:$0xf]
    %v2746 = vld [vmem:[%s3 + $0x870] sm:$0xff]
    %v2747 = vld [vmem:[%s3 + $0x878] sm:$0xf]
    %v2748 = vld [vmem:[%s3 + $0x87c] sm:$0xff]
    %v2749 = vld [vmem:[%s3 + $0x884] sm:$0xf]
    %v2750 = vld [vmem:[%s3 + $0x888] sm:$0xff]
    %v2751 = vld [vmem:[%s3 + $0x890] sm:$0xf]
    %v2752 = vld [vmem:[%s3 + $0x894] sm:$0xff]
    %v2753 = vld [vmem:[%s3 + $0x89c] sm:$0xf]
    %v2754 = vld [vmem:[%s3 + $0x8a0] sm:$0xff]
    %v2755 = vld [vmem:[%s3 + $0x8a8] sm:$0xf]
    %v2756 = vld [vmem:[%s3 + $0x8ac] sm:$0xff]
    %v2757 = vld [vmem:[%s3 + $0x8b4] sm:$0xf]
    %v2758 = vld [vmem:[%s3 + $0x8b8] sm:$0xff]
    %v2759 = vld [vmem:[%s3 + $0x8c0] sm:$0xf]
    %v2760 = vld [vmem:[%s3 + $0x8c4] sm:$0xff]
    %v2761 = vld [vmem:[%s3 + $0x8cc] sm:$0xf]
    %v2762 = vld [vmem:[%s3 + $0x8d0] sm:$0xff]
    %v2763 = vld [vmem:[%s3 + $0x8d8] sm:$0xf]
    %v2764 = vld [vmem:[%s3 + $0x8dc] sm:$0xff]
    %v2765 = vld [vmem:[%s3 + $0x8e4] sm:$0xf]
    %v2766 = vld [vmem:[%s3 + $0x8e8] sm:$0xff]
    %v2767 = vld [vmem:[%s3 + $0x8f0] sm:$0xf]
    %v2768 = vld [vmem:[%s3 + $0x8f4] sm:$0xff]
    %v2769 = vld [vmem:[%s3 + $0x8fc] sm:$0xf]
    %v2770 = vld [vmem:[%s4] sm:$0x7]
    %v2772 = vlaneseq
    %v2773 = vshrl.u32 %v2772, 7
    %v2774 = vsub.s32 0, %v2773
    %v2775 = vrot.slane %v2770, %v2774
    %v2776 = vlaneseq
    %v2777 = vshrl.u32 %v2776, 7
    %v2778 = vsub.s32 1, %v2777
    %v2779 = vrot.slane %v2770, %v2778
    %v2780 = vlaneseq
    %v2781 = vshrl.u32 %v2780, 7
    %v2782 = vsub.s32 2, %v2781
    %v2783 = vrot.slane %v2770, %v2782
    %v3171 = vunpack.c.l.b16 %v2386
    %v3172 = vunpack.c.h.b16 %v2386
    %v3173 = vunpack.c.l.b16 %v2387
    %v3174 = vunpack.c.l.b16 %v2388
    %v3175 = vunpack.c.h.b16 %v2388
    %v3176 = vunpack.c.l.b16 %v2389
    %v3177 = vunpack.c.l.b16 %v2390
    %v3178 = vunpack.c.h.b16 %v2390
    %v3179 = vunpack.c.l.b16 %v2391
    %v3180 = vunpack.c.l.b16 %v2392
    %v3181 = vunpack.c.h.b16 %v2392
    %v3182 = vunpack.c.l.b16 %v2393
    %v3183 = vunpack.c.l.b16 %v2394
    %v3184 = vunpack.c.h.b16 %v2394
    %v3185 = vunpack.c.l.b16 %v2395
    %v3186 = vunpack.c.l.b16 %v2396
    %v3187 = vunpack.c.h.b16 %v2396
    %v3188 = vunpack.c.l.b16 %v2397
    %v3189 = vunpack.c.l.b16 %v2398
    %v3190 = vunpack.c.h.b16 %v2398
    %v3191 = vunpack.c.l.b16 %v2399
    %v3192 = vunpack.c.l.b16 %v2400
    %v3193 = vunpack.c.h.b16 %v2400
    %v3194 = vunpack.c.l.b16 %v2401
    %v3195 = vunpack.c.l.b16 %v2402
    %v3196 = vunpack.c.h.b16 %v2402
    %v3197 = vunpack.c.l.b16 %v2403
    %v3198 = vunpack.c.l.b16 %v2404
    %v3199 = vunpack.c.h.b16 %v2404
    %v3200 = vunpack.c.l.b16 %v2405
    %v3201 = vunpack.c.l.b16 %v2406
    %v3202 = vunpack.c.h.b16 %v2406
    %v3203 = vunpack.c.l.b16 %v2407
    %v3204 = vunpack.c.l.b16 %v2408
    %v3205 = vunpack.c.h.b16 %v2408
    %v3206 = vunpack.c.l.b16 %v2409
    %v3207 = vunpack.c.l.b16 %v2410
    %v3208 = vunpack.c.h.b16 %v2410
    %v3209 = vunpack.c.l.b16 %v2411
    %v3210 = vunpack.c.l.b16 %v2412
    %v3211 = vunpack.c.h.b16 %v2412
    %v3212 = vunpack.c.l.b16 %v2413
    %v3213 = vunpack.c.l.b16 %v2414
    %v3214 = vunpack.c.h.b16 %v2414
    %v3215 = vunpack.c.l.b16 %v2415
    %v3216 = vunpack.c.l.b16 %v2416
    %v3217 = vunpack.c.h.b16 %v2416
    %v3218 = vunpack.c.l.b16 %v2417
    %v3219 = vunpack.c.l.b16 %v2418
    %v3220 = vunpack.c.h.b16 %v2418
    %v3221 = vunpack.c.l.b16 %v2419
    %v3222 = vunpack.c.l.b16 %v2420
    %v3223 = vunpack.c.h.b16 %v2420
    %v3224 = vunpack.c.l.b16 %v2421
    %v3225 = vunpack.c.l.b16 %v2422
    %v3226 = vunpack.c.h.b16 %v2422
    %v3227 = vunpack.c.l.b16 %v2423
    %v3228 = vunpack.c.l.b16 %v2424
    %v3229 = vunpack.c.h.b16 %v2424
    %v3230 = vunpack.c.l.b16 %v2425
    %v3231 = vunpack.c.l.b16 %v2426
    %v3232 = vunpack.c.h.b16 %v2426
    %v3233 = vunpack.c.l.b16 %v2427
    %v3234 = vunpack.c.l.b16 %v2428
    %v3235 = vunpack.c.h.b16 %v2428
    %v3236 = vunpack.c.l.b16 %v2429
    %v3237 = vunpack.c.l.b16 %v2430
    %v3238 = vunpack.c.h.b16 %v2430
    %v3239 = vunpack.c.l.b16 %v2431
    %v3240 = vunpack.c.l.b16 %v2432
    %v3241 = vunpack.c.h.b16 %v2432
    %v3242 = vunpack.c.l.b16 %v2433
    %v3243 = vunpack.c.l.b16 %v2434
    %v3244 = vunpack.c.h.b16 %v2434
    %v3245 = vunpack.c.l.b16 %v2435
    %v3246 = vunpack.c.l.b16 %v2436
    %v3247 = vunpack.c.h.b16 %v2436
    %v3248 = vunpack.c.l.b16 %v2437
    %v3249 = vunpack.c.l.b16 %v2438
    %v3250 = vunpack.c.h.b16 %v2438
    %v3251 = vunpack.c.l.b16 %v2439
    %v3252 = vunpack.c.l.b16 %v2440
    %v3253 = vunpack.c.h.b16 %v2440
    %v3254 = vunpack.c.l.b16 %v2441
    %v3255 = vunpack.c.l.b16 %v2442
    %v3256 = vunpack.c.h.b16 %v2442
    %v3257 = vunpack.c.l.b16 %v2443
    %v3258 = vunpack.c.l.b16 %v2444
    %v3259 = vunpack.c.h.b16 %v2444
    %v3260 = vunpack.c.l.b16 %v2445
    %v3261 = vunpack.c.l.b16 %v2446
    %v3262 = vunpack.c.h.b16 %v2446
    %v3263 = vunpack.c.l.b16 %v2447
    %v3264 = vunpack.c.l.b16 %v2448
    %v3265 = vunpack.c.h.b16 %v2448
    %v3266 = vunpack.c.l.b16 %v2449
    %v3267 = vunpack.c.l.b16 %v2450
    %v3268 = vunpack.c.h.b16 %v2450
    %v3269 = vunpack.c.l.b16 %v2451
    %v3270 = vunpack.c.l.b16 %v2452
    %v3271 = vunpack.c.h.b16 %v2452
    %v3272 = vunpack.c.l.b16 %v2453
    %v3273 = vunpack.c.l.b16 %v2454
    %v3274 = vunpack.c.h.b16 %v2454
    %v3275 = vunpack.c.l.b16 %v2455
    %v3276 = vunpack.c.l.b16 %v2456
    %v3277 = vunpack.c.h.b16 %v2456
    %v3278 = vunpack.c.l.b16 %v2457
    %v3279 = vunpack.c.l.b16 %v2458
    %v3280 = vunpack.c.h.b16 %v2458
    %v3281 = vunpack.c.l.b16 %v2459
    %v3282 = vunpack.c.l.b16 %v2460
    %v3283 = vunpack.c.h.b16 %v2460
    %v3284 = vunpack.c.l.b16 %v2461
    %v3285 = vunpack.c.l.b16 %v2462
    %v3286 = vunpack.c.h.b16 %v2462
    %v3287 = vunpack.c.l.b16 %v2463
    %v3288 = vunpack.c.l.b16 %v2464
    %v3289 = vunpack.c.h.b16 %v2464
    %v3290 = vunpack.c.l.b16 %v2465
    %v3291 = vunpack.c.l.b16 %v2466
    %v3292 = vunpack.c.h.b16 %v2466
    %v3293 = vunpack.c.l.b16 %v2467
    %v3294 = vunpack.c.l.b16 %v2468
    %v3295 = vunpack.c.h.b16 %v2468
    %v3296 = vunpack.c.l.b16 %v2469
    %v3297 = vunpack.c.l.b16 %v2470
    %v3298 = vunpack.c.h.b16 %v2470
    %v3299 = vunpack.c.l.b16 %v2471
    %v3300 = vunpack.c.l.b16 %v2472
    %v3301 = vunpack.c.h.b16 %v2472
    %v3302 = vunpack.c.l.b16 %v2473
    %v3303 = vunpack.c.l.b16 %v2474
    %v3304 = vunpack.c.h.b16 %v2474
    %v3305 = vunpack.c.l.b16 %v2475
    %v3306 = vunpack.c.l.b16 %v2476
    %v3307 = vunpack.c.h.b16 %v2476
    %v3308 = vunpack.c.l.b16 %v2477
    %v3309 = vunpack.c.l.b16 %v2478
    %v3310 = vunpack.c.h.b16 %v2478
    %v3311 = vunpack.c.l.b16 %v2479
    %v3312 = vunpack.c.l.b16 %v2480
    %v3313 = vunpack.c.h.b16 %v2480
    %v3314 = vunpack.c.l.b16 %v2481
    %v3315 = vunpack.c.l.b16 %v2482
    %v3316 = vunpack.c.h.b16 %v2482
    %v3317 = vunpack.c.l.b16 %v2483
    %v3318 = vunpack.c.l.b16 %v2484
    %v3319 = vunpack.c.h.b16 %v2484
    %v3320 = vunpack.c.l.b16 %v2485
    %v3321 = vunpack.c.l.b16 %v2486
    %v3322 = vunpack.c.h.b16 %v2486
    %v3323 = vunpack.c.l.b16 %v2487
    %v3324 = vunpack.c.l.b16 %v2488
    %v3325 = vunpack.c.h.b16 %v2488
    %v3326 = vunpack.c.l.b16 %v2489
    %v3327 = vunpack.c.l.b16 %v2490
    %v3328 = vunpack.c.h.b16 %v2490
    %v3329 = vunpack.c.l.b16 %v2491
    %v3330 = vunpack.c.l.b16 %v2492
    %v3331 = vunpack.c.h.b16 %v2492
    %v3332 = vunpack.c.l.b16 %v2493
    %v3333 = vunpack.c.l.b16 %v2494
    %v3334 = vunpack.c.h.b16 %v2494
    %v3335 = vunpack.c.l.b16 %v2495
    %v3336 = vunpack.c.l.b16 %v2496
    %v3337 = vunpack.c.h.b16 %v2496
    %v3338 = vunpack.c.l.b16 %v2497
    %v3339 = vunpack.c.l.b16 %v2498
    %v3340 = vunpack.c.h.b16 %v2498
    %v3341 = vunpack.c.l.b16 %v2499
    %v3342 = vunpack.c.l.b16 %v2500
    %v3343 = vunpack.c.h.b16 %v2500
    %v3344 = vunpack.c.l.b16 %v2501
    %v3345 = vunpack.c.l.b16 %v2502
    %v3346 = vunpack.c.h.b16 %v2502
    %v3347 = vunpack.c.l.b16 %v2503
    %v3348 = vunpack.c.l.b16 %v2504
    %v3349 = vunpack.c.h.b16 %v2504
    %v3350 = vunpack.c.l.b16 %v2505
    %v3351 = vunpack.c.l.b16 %v2506
    %v3352 = vunpack.c.h.b16 %v2506
    %v3353 = vunpack.c.l.b16 %v2507
    %v3354 = vunpack.c.l.b16 %v2508
    %v3355 = vunpack.c.h.b16 %v2508
    %v3356 = vunpack.c.l.b16 %v2509
    %v3357 = vunpack.c.l.b16 %v2510
    %v3358 = vunpack.c.h.b16 %v2510
    %v3359 = vunpack.c.l.b16 %v2511
    %v3360 = vunpack.c.l.b16 %v2512
    %v3361 = vunpack.c.h.b16 %v2512
    %v3362 = vunpack.c.l.b16 %v2513
    %v3363 = vunpack.c.l.b16 %v2514
    %v3364 = vunpack.c.h.b16 %v2514
    %v3365 = vunpack.c.l.b16 %v2515
    %v3366 = vunpack.c.l.b16 %v2516
    %v3367 = vunpack.c.h.b16 %v2516
    %v3368 = vunpack.c.l.b16 %v2517
    %v3369 = vunpack.c.l.b16 %v2518
    %v3370 = vunpack.c.h.b16 %v2518
    %v3371 = vunpack.c.l.b16 %v2519
    %v3372 = vunpack.c.l.b16 %v2520
    %v3373 = vunpack.c.h.b16 %v2520
    %v3374 = vunpack.c.l.b16 %v2521
    %v3375 = vunpack.c.l.b16 %v2522
    %v3376 = vunpack.c.h.b16 %v2522
    %v3377 = vunpack.c.l.b16 %v2523
    %v3378 = vunpack.c.l.b16 %v2524
    %v3379 = vunpack.c.h.b16 %v2524
    %v3380 = vunpack.c.l.b16 %v2525
    %v3381 = vunpack.c.l.b16 %v2526
    %v3382 = vunpack.c.h.b16 %v2526
    %v3383 = vunpack.c.l.b16 %v2527
    %v3384 = vunpack.c.l.b16 %v2528
    %v3385 = vunpack.c.h.b16 %v2528
    %v3386 = vunpack.c.l.b16 %v2529
    %v3387 = vunpack.c.l.b16 %v2530
    %v3388 = vunpack.c.h.b16 %v2530
    %v3389 = vunpack.c.l.b16 %v2531
    %v3390 = vunpack.c.l.b16 %v2532
    %v3391 = vunpack.c.h.b16 %v2532
    %v3392 = vunpack.c.l.b16 %v2533
    %v3393 = vunpack.c.l.b16 %v2534
    %v3394 = vunpack.c.h.b16 %v2534
    %v3395 = vunpack.c.l.b16 %v2535
    %v3396 = vunpack.c.l.b16 %v2536
    %v3397 = vunpack.c.h.b16 %v2536
    %v3398 = vunpack.c.l.b16 %v2537
    %v3399 = vunpack.c.l.b16 %v2538
    %v3400 = vunpack.c.h.b16 %v2538
    %v3401 = vunpack.c.l.b16 %v2539
    %v3402 = vunpack.c.l.b16 %v2540
    %v3403 = vunpack.c.h.b16 %v2540
    %v3404 = vunpack.c.l.b16 %v2541
    %v3405 = vunpack.c.l.b16 %v2542
    %v3406 = vunpack.c.h.b16 %v2542
    %v3407 = vunpack.c.l.b16 %v2543
    %v3408 = vunpack.c.l.b16 %v2544
    %v3409 = vunpack.c.h.b16 %v2544
    %v3410 = vunpack.c.l.b16 %v2545
    %v3411 = vunpack.c.l.b16 %v2546
    %v3412 = vunpack.c.h.b16 %v2546
    %v3413 = vunpack.c.l.b16 %v2547
    %v3414 = vunpack.c.l.b16 %v2548
    %v3415 = vunpack.c.h.b16 %v2548
    %v3416 = vunpack.c.l.b16 %v2549
    %v3417 = vunpack.c.l.b16 %v2550
    %v3418 = vunpack.c.h.b16 %v2550
    %v3419 = vunpack.c.l.b16 %v2551
    %v3420 = vunpack.c.l.b16 %v2552
    %v3421 = vunpack.c.h.b16 %v2552
    %v3422 = vunpack.c.l.b16 %v2553
    %v3423 = vunpack.c.l.b16 %v2554
    %v3424 = vunpack.c.h.b16 %v2554
    %v3425 = vunpack.c.l.b16 %v2555
    %v3426 = vunpack.c.l.b16 %v2556
    %v3427 = vunpack.c.h.b16 %v2556
    %v3428 = vunpack.c.l.b16 %v2557
    %v3429 = vunpack.c.l.b16 %v2558
    %v3430 = vunpack.c.h.b16 %v2558
    %v3431 = vunpack.c.l.b16 %v2559
    %v3432 = vunpack.c.l.b16 %v2560
    %v3433 = vunpack.c.h.b16 %v2560
    %v3434 = vunpack.c.l.b16 %v2561
    %v3435 = vunpack.c.l.b16 %v2562
    %v3436 = vunpack.c.h.b16 %v2562
    %v3437 = vunpack.c.l.b16 %v2563
    %v3438 = vunpack.c.l.b16 %v2564
    %v3439 = vunpack.c.h.b16 %v2564
    %v3440 = vunpack.c.l.b16 %v2565
    %v3441 = vunpack.c.l.b16 %v2566
    %v3442 = vunpack.c.h.b16 %v2566
    %v3443 = vunpack.c.l.b16 %v2567
    %v3444 = vunpack.c.l.b16 %v2568
    %v3445 = vunpack.c.h.b16 %v2568
    %v3446 = vunpack.c.l.b16 %v2569
    %v3447 = vunpack.c.l.b16 %v2570
    %v3448 = vunpack.c.h.b16 %v2570
    %v3449 = vunpack.c.l.b16 %v2571
    %v3450 = vunpack.c.l.b16 %v2572
    %v3451 = vunpack.c.h.b16 %v2572
    %v3452 = vunpack.c.l.b16 %v2573
    %v3453 = vunpack.c.l.b16 %v2574
    %v3454 = vunpack.c.h.b16 %v2574
    %v3455 = vunpack.c.l.b16 %v2575
    %v3456 = vunpack.c.l.b16 %v2576
    %v3457 = vunpack.c.h.b16 %v2576
    %v3458 = vunpack.c.l.b16 %v2577
    %v3459 = vunpack.c.l.b16 %v2578
    %v3460 = vunpack.c.h.b16 %v2578
    %v3461 = vunpack.c.l.b16 %v2579
    %v3462 = vunpack.c.l.b16 %v2580
    %v3463 = vunpack.c.h.b16 %v2580
    %v3464 = vunpack.c.l.b16 %v2581
    %v3465 = vunpack.c.l.b16 %v2582
    %v3466 = vunpack.c.h.b16 %v2582
    %v3467 = vunpack.c.l.b16 %v2583
    %v3468 = vunpack.c.l.b16 %v2584
    %v3469 = vunpack.c.h.b16 %v2584
    %v3470 = vunpack.c.l.b16 %v2585
    %v3471 = vunpack.c.l.b16 %v2586
    %v3472 = vunpack.c.h.b16 %v2586
    %v3473 = vunpack.c.l.b16 %v2587
    %v3474 = vunpack.c.l.b16 %v2588
    %v3475 = vunpack.c.h.b16 %v2588
    %v3476 = vunpack.c.l.b16 %v2589
    %v3477 = vunpack.c.l.b16 %v2590
    %v3478 = vunpack.c.h.b16 %v2590
    %v3479 = vunpack.c.l.b16 %v2591
    %v3480 = vunpack.c.l.b16 %v2592
    %v3481 = vunpack.c.h.b16 %v2592
    %v3482 = vunpack.c.l.b16 %v2593
    %v3483 = vunpack.c.l.b16 %v2594
    %v3484 = vunpack.c.h.b16 %v2594
    %v3485 = vunpack.c.l.b16 %v2595
    %v3486 = vunpack.c.l.b16 %v2596
    %v3487 = vunpack.c.h.b16 %v2596
    %v3488 = vunpack.c.l.b16 %v2597
    %v3489 = vunpack.c.l.b16 %v2598
    %v3490 = vunpack.c.h.b16 %v2598
    %v3491 = vunpack.c.l.b16 %v2599
    %v3492 = vunpack.c.l.b16 %v2600
    %v3493 = vunpack.c.h.b16 %v2600
    %v3494 = vunpack.c.l.b16 %v2601
    %v3495 = vunpack.c.l.b16 %v2602
    %v3496 = vunpack.c.h.b16 %v2602
    %v3497 = vunpack.c.l.b16 %v2603
    %v3498 = vunpack.c.l.b16 %v2604
    %v3499 = vunpack.c.h.b16 %v2604
    %v3500 = vunpack.c.l.b16 %v2605
    %v3501 = vunpack.c.l.b16 %v2606
    %v3502 = vunpack.c.h.b16 %v2606
    %v3503 = vunpack.c.l.b16 %v2607
    %v3504 = vunpack.c.l.b16 %v2608
    %v3505 = vunpack.c.h.b16 %v2608
    %v3506 = vunpack.c.l.b16 %v2609
    %v3507 = vunpack.c.l.b16 %v2610
    %v3508 = vunpack.c.h.b16 %v2610
    %v3509 = vunpack.c.l.b16 %v2611
    %v3510 = vunpack.c.l.b16 %v2612
    %v3511 = vunpack.c.h.b16 %v2612
    %v3512 = vunpack.c.l.b16 %v2613
    %v3513 = vunpack.c.l.b16 %v2614
    %v3514 = vunpack.c.h.b16 %v2614
    %v3515 = vunpack.c.l.b16 %v2615
    %v3516 = vunpack.c.l.b16 %v2616
    %v3517 = vunpack.c.h.b16 %v2616
    %v3518 = vunpack.c.l.b16 %v2617
    %v3519 = vunpack.c.l.b16 %v2618
    %v3520 = vunpack.c.h.b16 %v2618
    %v3521 = vunpack.c.l.b16 %v2619
    %v3522 = vunpack.c.l.b16 %v2620
    %v3523 = vunpack.c.h.b16 %v2620
    %v3524 = vunpack.c.l.b16 %v2621
    %v3525 = vunpack.c.l.b16 %v2622
    %v3526 = vunpack.c.h.b16 %v2622
    %v3527 = vunpack.c.l.b16 %v2623
    %v3528 = vunpack.c.l.b16 %v2624
    %v3529 = vunpack.c.h.b16 %v2624
    %v3530 = vunpack.c.l.b16 %v2625
    %v3531 = vunpack.c.l.b16 %v2626
    %v3532 = vunpack.c.h.b16 %v2626
    %v3533 = vunpack.c.l.b16 %v2627
    %v3534 = vunpack.c.l.b16 %v2628
    %v3535 = vunpack.c.h.b16 %v2628
    %v3536 = vunpack.c.l.b16 %v2629
    %v3537 = vunpack.c.l.b16 %v2630
    %v3538 = vunpack.c.h.b16 %v2630
    %v3539 = vunpack.c.l.b16 %v2631
    %v3540 = vunpack.c.l.b16 %v2632
    %v3541 = vunpack.c.h.b16 %v2632
    %v3542 = vunpack.c.l.b16 %v2633
    %v3543 = vunpack.c.l.b16 %v2634
    %v3544 = vunpack.c.h.b16 %v2634
    %v3545 = vunpack.c.l.b16 %v2635
    %v3546 = vunpack.c.l.b16 %v2636
    %v3547 = vunpack.c.h.b16 %v2636
    %v3548 = vunpack.c.l.b16 %v2637
    %v3549 = vunpack.c.l.b16 %v2638
    %v3550 = vunpack.c.h.b16 %v2638
    %v3551 = vunpack.c.l.b16 %v2639
    %v3552 = vunpack.c.l.b16 %v2640
    %v3553 = vunpack.c.h.b16 %v2640
    %v3554 = vunpack.c.l.b16 %v2641
    %v3555 = vunpack.c.l.b16 %v2642
    %v3556 = vunpack.c.h.b16 %v2642
    %v3557 = vunpack.c.l.b16 %v2643
    %v3558 = vunpack.c.l.b16 %v2644
    %v3559 = vunpack.c.h.b16 %v2644
    %v3560 = vunpack.c.l.b16 %v2645
    %v3561 = vunpack.c.l.b16 %v2646
    %v3562 = vunpack.c.h.b16 %v2646
    %v3563 = vunpack.c.l.b16 %v2647
    %v3564 = vunpack.c.l.b16 %v2648
    %v3565 = vunpack.c.h.b16 %v2648
    %v3566 = vunpack.c.l.b16 %v2649
    %v3567 = vunpack.c.l.b16 %v2650
    %v3568 = vunpack.c.h.b16 %v2650
    %v3569 = vunpack.c.l.b16 %v2651
    %v3570 = vunpack.c.l.b16 %v2652
    %v3571 = vunpack.c.h.b16 %v2652
    %v3572 = vunpack.c.l.b16 %v2653
    %v3573 = vunpack.c.l.b16 %v2654
    %v3574 = vunpack.c.h.b16 %v2654
    %v3575 = vunpack.c.l.b16 %v2655
    %v3576 = vunpack.c.l.b16 %v2656
    %v3577 = vunpack.c.h.b16 %v2656
    %v3578 = vunpack.c.l.b16 %v2657
    %v3579 = vunpack.c.l.b16 %v2658
    %v3580 = vunpack.c.h.b16 %v2658
    %v3581 = vunpack.c.l.b16 %v2659
    %v3582 = vunpack.c.l.b16 %v2660
    %v3583 = vunpack.c.h.b16 %v2660
    %v3584 = vunpack.c.l.b16 %v2661
    %v3585 = vunpack.c.l.b16 %v2662
    %v3586 = vunpack.c.h.b16 %v2662
    %v3587 = vunpack.c.l.b16 %v2663
    %v3588 = vunpack.c.l.b16 %v2664
    %v3589 = vunpack.c.h.b16 %v2664
    %v3590 = vunpack.c.l.b16 %v2665
    %v3591 = vunpack.c.l.b16 %v2666
    %v3592 = vunpack.c.h.b16 %v2666
    %v3593 = vunpack.c.l.b16 %v2667
    %v3594 = vunpack.c.l.b16 %v2668
    %v3595 = vunpack.c.h.b16 %v2668
    %v3596 = vunpack.c.l.b16 %v2669
    %v3597 = vunpack.c.l.b16 %v2670
    %v3598 = vunpack.c.h.b16 %v2670
    %v3599 = vunpack.c.l.b16 %v2671
    %v3600 = vunpack.c.l.b16 %v2672
    %v3601 = vunpack.c.h.b16 %v2672
    %v3602 = vunpack.c.l.b16 %v2673
    %v3603 = vunpack.c.l.b16 %v2674
    %v3604 = vunpack.c.h.b16 %v2674
    %v3605 = vunpack.c.l.b16 %v2675
    %v3606 = vunpack.c.l.b16 %v2676
    %v3607 = vunpack.c.h.b16 %v2676
    %v3608 = vunpack.c.l.b16 %v2677
    %v3609 = vunpack.c.l.b16 %v2678
    %v3610 = vunpack.c.h.b16 %v2678
    %v3611 = vunpack.c.l.b16 %v2679
    %v3612 = vunpack.c.l.b16 %v2680
    %v3613 = vunpack.c.h.b16 %v2680
    %v3614 = vunpack.c.l.b16 %v2681
    %v3615 = vunpack.c.l.b16 %v2682
    %v3616 = vunpack.c.h.b16 %v2682
    %v3617 = vunpack.c.l.b16 %v2683
    %v3618 = vunpack.c.l.b16 %v2684
    %v3619 = vunpack.c.h.b16 %v2684
    %v3620 = vunpack.c.l.b16 %v2685
    %v3621 = vunpack.c.l.b16 %v2686
    %v3622 = vunpack.c.h.b16 %v2686
    %v3623 = vunpack.c.l.b16 %v2687
    %v3624 = vunpack.c.l.b16 %v2688
    %v3625 = vunpack.c.h.b16 %v2688
    %v3626 = vunpack.c.l.b16 %v2689
    %v3627 = vunpack.c.l.b16 %v2690
    %v3628 = vunpack.c.h.b16 %v2690
    %v3629 = vunpack.c.l.b16 %v2691
    %v3630 = vunpack.c.l.b16 %v2692
    %v3631 = vunpack.c.h.b16 %v2692
    %v3632 = vunpack.c.l.b16 %v2693
    %v3633 = vunpack.c.l.b16 %v2694
    %v3634 = vunpack.c.h.b16 %v2694
    %v3635 = vunpack.c.l.b16 %v2695
    %v3636 = vunpack.c.l.b16 %v2696
    %v3637 = vunpack.c.h.b16 %v2696
    %v3638 = vunpack.c.l.b16 %v2697
    %v3639 = vunpack.c.l.b16 %v2698
    %v3640 = vunpack.c.h.b16 %v2698
    %v3641 = vunpack.c.l.b16 %v2699
    %v3642 = vunpack.c.l.b16 %v2700
    %v3643 = vunpack.c.h.b16 %v2700
    %v3644 = vunpack.c.l.b16 %v2701
    %v3645 = vunpack.c.l.b16 %v2702
    %v3646 = vunpack.c.h.b16 %v2702
    %v3647 = vunpack.c.l.b16 %v2703
    %v3648 = vunpack.c.l.b16 %v2704
    %v3649 = vunpack.c.h.b16 %v2704
    %v3650 = vunpack.c.l.b16 %v2705
    %v3651 = vunpack.c.l.b16 %v2706
    %v3652 = vunpack.c.h.b16 %v2706
    %v3653 = vunpack.c.l.b16 %v2707
    %v3654 = vunpack.c.l.b16 %v2708
    %v3655 = vunpack.c.h.b16 %v2708
    %v3656 = vunpack.c.l.b16 %v2709
    %v3657 = vunpack.c.l.b16 %v2710
    %v3658 = vunpack.c.h.b16 %v2710
    %v3659 = vunpack.c.l.b16 %v2711
    %v3660 = vunpack.c.l.b16 %v2712
    %v3661 = vunpack.c.h.b16 %v2712
    %v3662 = vunpack.c.l.b16 %v2713
    %v3663 = vunpack.c.l.b16 %v2714
    %v3664 = vunpack.c.h.b16 %v2714
    %v3665 = vunpack.c.l.b16 %v2715
    %v3666 = vunpack.c.l.b16 %v2716
    %v3667 = vunpack.c.h.b16 %v2716
    %v3668 = vunpack.c.l.b16 %v2717
    %v3669 = vunpack.c.l.b16 %v2718
    %v3670 = vunpack.c.h.b16 %v2718
    %v3671 = vunpack.c.l.b16 %v2719
    %v3672 = vunpack.c.l.b16 %v2720
    %v3673 = vunpack.c.h.b16 %v2720
    %v3674 = vunpack.c.l.b16 %v2721
    %v3675 = vunpack.c.l.b16 %v2722
    %v3676 = vunpack.c.h.b16 %v2722
    %v3677 = vunpack.c.l.b16 %v2723
    %v3678 = vunpack.c.l.b16 %v2724
    %v3679 = vunpack.c.h.b16 %v2724
    %v3680 = vunpack.c.l.b16 %v2725
    %v3681 = vunpack.c.l.b16 %v2726
    %v3682 = vunpack.c.h.b16 %v2726
    %v3683 = vunpack.c.l.b16 %v2727
    %v3684 = vunpack.c.l.b16 %v2728
    %v3685 = vunpack.c.h.b16 %v2728
    %v3686 = vunpack.c.l.b16 %v2729
    %v3687 = vunpack.c.l.b16 %v2730
    %v3688 = vunpack.c.h.b16 %v2730
    %v3689 = vunpack.c.l.b16 %v2731
    %v3690 = vunpack.c.l.b16 %v2732
    %v3691 = vunpack.c.h.b16 %v2732
    %v3692 = vunpack.c.l.b16 %v2733
    %v3693 = vunpack.c.l.b16 %v2734
    %v3694 = vunpack.c.h.b16 %v2734
    %v3695 = vunpack.c.l.b16 %v2735
    %v3696 = vunpack.c.l.b16 %v2736
    %v3697 = vunpack.c.h.b16 %v2736
    %v3698 = vunpack.c.l.b16 %v2737
    %v3699 = vunpack.c.l.b16 %v2738
    %v3700 = vunpack.c.h.b16 %v2738
    %v3701 = vunpack.c.l.b16 %v2739
    %v3702 = vunpack.c.l.b16 %v2740
    %v3703 = vunpack.c.h.b16 %v2740
    %v3704 = vunpack.c.l.b16 %v2741
    %v3705 = vunpack.c.l.b16 %v2742
    %v3706 = vunpack.c.h.b16 %v2742
    %v3707 = vunpack.c.l.b16 %v2743
    %v3708 = vunpack.c.l.b16 %v2744
    %v3709 = vunpack.c.h.b16 %v2744
    %v3710 = vunpack.c.l.b16 %v2745
    %v3711 = vunpack.c.l.b16 %v2746
    %v3712 = vunpack.c.h.b16 %v2746
    %v3713 = vunpack.c.l.b16 %v2747
    %v3714 = vunpack.c.l.b16 %v2748
    %v3715 = vunpack.c.h.b16 %v2748
    %v3716 = vunpack.c.l.b16 %v2749
    %v3717 = vunpack.c.l.b16 %v2750
    %v3718 = vunpack.c.h.b16 %v2750
    %v3719 = vunpack.c.l.b16 %v2751
    %v3720 = vunpack.c.l.b16 %v2752
    %v3721 = vunpack.c.h.b16 %v2752
    %v3722 = vunpack.c.l.b16 %v2753
    %v3723 = vunpack.c.l.b16 %v2754
    %v3724 = vunpack.c.h.b16 %v2754
    %v3725 = vunpack.c.l.b16 %v2755
    %v3726 = vunpack.c.l.b16 %v2756
    %v3727 = vunpack.c.h.b16 %v2756
    %v3728 = vunpack.c.l.b16 %v2757
    %v3729 = vunpack.c.l.b16 %v2758
    %v3730 = vunpack.c.h.b16 %v2758
    %v3731 = vunpack.c.l.b16 %v2759
    %v3732 = vunpack.c.l.b16 %v2760
    %v3733 = vunpack.c.h.b16 %v2760
    %v3734 = vunpack.c.l.b16 %v2761
    %v3735 = vunpack.c.l.b16 %v2762
    %v3736 = vunpack.c.h.b16 %v2762
    %v3737 = vunpack.c.l.b16 %v2763
    %v3738 = vunpack.c.l.b16 %v2764
    %v3739 = vunpack.c.h.b16 %v2764
    %v3740 = vunpack.c.l.b16 %v2765
    %v3741 = vunpack.c.l.b16 %v2766
    %v3742 = vunpack.c.h.b16 %v2766
    %v3743 = vunpack.c.l.b16 %v2767
    %v3744 = vunpack.c.l.b16 %v2768
    %v3745 = vunpack.c.h.b16 %v2768
    %v3746 = vunpack.c.l.b16 %v2769
    %v3747 = vpack.c.b16 %v3174, %v3171
    %v3748 = vpack.c.b16 %v3175, %v3172
    %v3749 = vpack.c.b16 %v3176, %v3173
    %v3750 = vpack.c.b16 %v3180, %v3177
    %v3751 = vpack.c.b16 %v3181, %v3178
    %v3752 = vpack.c.b16 %v3182, %v3179
    %v3753 = vpack.c.b16 %v3186, %v3183
    %v3754 = vpack.c.b16 %v3187, %v3184
    %v3755 = vpack.c.b16 %v3188, %v3185
    %v3756 = vpack.c.b16 %v3192, %v3189
    %v3757 = vpack.c.b16 %v3193, %v3190
    %v3758 = vpack.c.b16 %v3194, %v3191
    %v3759 = vpack.c.b16 %v3198, %v3195
    %v3760 = vpack.c.b16 %v3199, %v3196
    %v3761 = vpack.c.b16 %v3200, %v3197
    %v3762 = vpack.c.b16 %v3204, %v3201
    %v3763 = vpack.c.b16 %v3205, %v3202
    %v3764 = vpack.c.b16 %v3206, %v3203
    %v3765 = vpack.c.b16 %v3210, %v3207
    %v3766 = vpack.c.b16 %v3211, %v3208
    %v3767 = vpack.c.b16 %v3212, %v3209
    %v3768 = vpack.c.b16 %v3216, %v3213
    %v3769 = vpack.c.b16 %v3217, %v3214
    %v3770 = vpack.c.b16 %v3218, %v3215
    %v3771 = vpack.c.b16 %v3222, %v3219
    %v3772 = vpack.c.b16 %v3223, %v3220
    %v3773 = vpack.c.b16 %v3224, %v3221
    %v3774 = vpack.c.b16 %v3228, %v3225
    %v3775 = vpack.c.b16 %v3229, %v3226
    %v3776 = vpack.c.b16 %v3230, %v3227
    %v3777 = vpack.c.b16 %v3234, %v3231
    %v3778 = vpack.c.b16 %v3235, %v3232
    %v3779 = vpack.c.b16 %v3236, %v3233
    %v3780 = vpack.c.b16 %v3240, %v3237
    %v3781 = vpack.c.b16 %v3241, %v3238
    %v3782 = vpack.c.b16 %v3242, %v3239
    %v3783 = vpack.c.b16 %v3246, %v3243
    %v3784 = vpack.c.b16 %v3247, %v3244
    %v3785 = vpack.c.b16 %v3248, %v3245
    %v3786 = vpack.c.b16 %v3252, %v3249
    %v3787 = vpack.c.b16 %v3253, %v3250
    %v3788 = vpack.c.b16 %v3254, %v3251
    %v3789 = vpack.c.b16 %v3258, %v3255
    %v3790 = vpack.c.b16 %v3259, %v3256
    %v3791 = vpack.c.b16 %v3260, %v3257
    %v3792 = vpack.c.b16 %v3264, %v3261
    %v3793 = vpack.c.b16 %v3265, %v3262
    %v3794 = vpack.c.b16 %v3266, %v3263
    %v3795 = vpack.c.b16 %v3270, %v3267
    %v3796 = vpack.c.b16 %v3271, %v3268
    %v3797 = vpack.c.b16 %v3272, %v3269
    %v3798 = vpack.c.b16 %v3276, %v3273
    %v3799 = vpack.c.b16 %v3277, %v3274
    %v3800 = vpack.c.b16 %v3278, %v3275
    %v3801 = vpack.c.b16 %v3282, %v3279
    %v3802 = vpack.c.b16 %v3283, %v3280
    %v3803 = vpack.c.b16 %v3284, %v3281
    %v3804 = vpack.c.b16 %v3288, %v3285
    %v3805 = vpack.c.b16 %v3289, %v3286
    %v3806 = vpack.c.b16 %v3290, %v3287
    %v3807 = vpack.c.b16 %v3294, %v3291
    %v3808 = vpack.c.b16 %v3295, %v3292
    %v3809 = vpack.c.b16 %v3296, %v3293
    %v3810 = vpack.c.b16 %v3300, %v3297
    %v3811 = vpack.c.b16 %v3301, %v3298
    %v3812 = vpack.c.b16 %v3302, %v3299
    %v3813 = vpack.c.b16 %v3306, %v3303
    %v3814 = vpack.c.b16 %v3307, %v3304
    %v3815 = vpack.c.b16 %v3308, %v3305
    %v3816 = vpack.c.b16 %v3312, %v3309
    %v3817 = vpack.c.b16 %v3313, %v3310
    %v3818 = vpack.c.b16 %v3314, %v3311
    %v3819 = vpack.c.b16 %v3318, %v3315
    %v3820 = vpack.c.b16 %v3319, %v3316
    %v3821 = vpack.c.b16 %v3320, %v3317
    %v3822 = vpack.c.b16 %v3324, %v3321
    %v3823 = vpack.c.b16 %v3325, %v3322
    %v3824 = vpack.c.b16 %v3326, %v3323
    %v3825 = vpack.c.b16 %v3330, %v3327
    %v3826 = vpack.c.b16 %v3331, %v3328
    %v3827 = vpack.c.b16 %v3332, %v3329
    %v3828 = vpack.c.b16 %v3336, %v3333
    %v3829 = vpack.c.b16 %v3337, %v3334
    %v3830 = vpack.c.b16 %v3338, %v3335
    %v3831 = vpack.c.b16 %v3342, %v3339
    %v3832 = vpack.c.b16 %v3343, %v3340
    %v3833 = vpack.c.b16 %v3344, %v3341
    %v3834 = vpack.c.b16 %v3348, %v3345
    %v3835 = vpack.c.b16 %v3349, %v3346
    %v3836 = vpack.c.b16 %v3350, %v3347
    %v3837 = vpack.c.b16 %v3354, %v3351
    %v3838 = vpack.c.b16 %v3355, %v3352
    %v3839 = vpack.c.b16 %v3356, %v3353
    %v3840 = vpack.c.b16 %v3360, %v3357
    %v3841 = vpack.c.b16 %v3361, %v3358
    %v3842 = vpack.c.b16 %v3362, %v3359
    %v3843 = vpack.c.b16 %v3366, %v3363
    %v3844 = vpack.c.b16 %v3367, %v3364
    %v3845 = vpack.c.b16 %v3368, %v3365
    %v3846 = vpack.c.b16 %v3372, %v3369
    %v3847 = vpack.c.b16 %v3373, %v3370
    %v3848 = vpack.c.b16 %v3374, %v3371
    %v3849 = vpack.c.b16 %v3378, %v3375
    %v3850 = vpack.c.b16 %v3379, %v3376
    %v3851 = vpack.c.b16 %v3380, %v3377
    %v3852 = vpack.c.b16 %v3384, %v3381
    %v3853 = vpack.c.b16 %v3385, %v3382
    %v3854 = vpack.c.b16 %v3386, %v3383
    %v3855 = vpack.c.b16 %v3390, %v3387
    %v3856 = vpack.c.b16 %v3391, %v3388
    %v3857 = vpack.c.b16 %v3392, %v3389
    %v3858 = vpack.c.b16 %v3396, %v3393
    %v3859 = vpack.c.b16 %v3397, %v3394
    %v3860 = vpack.c.b16 %v3398, %v3395
    %v3861 = vpack.c.b16 %v3402, %v3399
    %v3862 = vpack.c.b16 %v3403, %v3400
    %v3863 = vpack.c.b16 %v3404, %v3401
    %v3864 = vpack.c.b16 %v3408, %v3405
    %v3865 = vpack.c.b16 %v3409, %v3406
    %v3866 = vpack.c.b16 %v3410, %v3407
    %v3867 = vpack.c.b16 %v3414, %v3411
    %v3868 = vpack.c.b16 %v3415, %v3412
    %v3869 = vpack.c.b16 %v3416, %v3413
    %v3870 = vpack.c.b16 %v3420, %v3417
    %v3871 = vpack.c.b16 %v3421, %v3418
    %v3872 = vpack.c.b16 %v3422, %v3419
    %v3873 = vpack.c.b16 %v3426, %v3423
    %v3874 = vpack.c.b16 %v3427, %v3424
    %v3875 = vpack.c.b16 %v3428, %v3425
    %v3876 = vpack.c.b16 %v3432, %v3429
    %v3877 = vpack.c.b16 %v3433, %v3430
    %v3878 = vpack.c.b16 %v3434, %v3431
    %v3879 = vpack.c.b16 %v3438, %v3435
    %v3880 = vpack.c.b16 %v3439, %v3436
    %v3881 = vpack.c.b16 %v3440, %v3437
    %v3882 = vpack.c.b16 %v3444, %v3441
    %v3883 = vpack.c.b16 %v3445, %v3442
    %v3884 = vpack.c.b16 %v3446, %v3443
    %v3885 = vpack.c.b16 %v3450, %v3447
    %v3886 = vpack.c.b16 %v3451, %v3448
    %v3887 = vpack.c.b16 %v3452, %v3449
    %v3888 = vpack.c.b16 %v3456, %v3453
    %v3889 = vpack.c.b16 %v3457, %v3454
    %v3890 = vpack.c.b16 %v3458, %v3455
    %v3891 = vpack.c.b16 %v3462, %v3459
    %v3892 = vpack.c.b16 %v3463, %v3460
    %v3893 = vpack.c.b16 %v3464, %v3461
    %v3894 = vpack.c.b16 %v3468, %v3465
    %v3895 = vpack.c.b16 %v3469, %v3466
    %v3896 = vpack.c.b16 %v3470, %v3467
    %v3897 = vpack.c.b16 %v3474, %v3471
    %v3898 = vpack.c.b16 %v3475, %v3472
    %v3899 = vpack.c.b16 %v3476, %v3473
    %v3900 = vpack.c.b16 %v3480, %v3477
    %v3901 = vpack.c.b16 %v3481, %v3478
    %v3902 = vpack.c.b16 %v3482, %v3479
    %v3903 = vpack.c.b16 %v3486, %v3483
    %v3904 = vpack.c.b16 %v3487, %v3484
    %v3905 = vpack.c.b16 %v3488, %v3485
    %v3906 = vpack.c.b16 %v3492, %v3489
    %v3907 = vpack.c.b16 %v3493, %v3490
    %v3908 = vpack.c.b16 %v3494, %v3491
    %v3909 = vpack.c.b16 %v3498, %v3495
    %v3910 = vpack.c.b16 %v3499, %v3496
    %v3911 = vpack.c.b16 %v3500, %v3497
    %v3912 = vpack.c.b16 %v3504, %v3501
    %v3913 = vpack.c.b16 %v3505, %v3502
    %v3914 = vpack.c.b16 %v3506, %v3503
    %v3915 = vpack.c.b16 %v3510, %v3507
    %v3916 = vpack.c.b16 %v3511, %v3508
    %v3917 = vpack.c.b16 %v3512, %v3509
    %v3918 = vpack.c.b16 %v3516, %v3513
    %v3919 = vpack.c.b16 %v3517, %v3514
    %v3920 = vpack.c.b16 %v3518, %v3515
    %v3921 = vpack.c.b16 %v3522, %v3519
    %v3922 = vpack.c.b16 %v3523, %v3520
    %v3923 = vpack.c.b16 %v3524, %v3521
    %v3924 = vpack.c.b16 %v3528, %v3525
    %v3925 = vpack.c.b16 %v3529, %v3526
    %v3926 = vpack.c.b16 %v3530, %v3527
    %v3927 = vpack.c.b16 %v3534, %v3531
    %v3928 = vpack.c.b16 %v3535, %v3532
    %v3929 = vpack.c.b16 %v3536, %v3533
    %v3930 = vpack.c.b16 %v3540, %v3537
    %v3931 = vpack.c.b16 %v3541, %v3538
    %v3932 = vpack.c.b16 %v3542, %v3539
    %v3933 = vpack.c.b16 %v3546, %v3543
    %v3934 = vpack.c.b16 %v3547, %v3544
    %v3935 = vpack.c.b16 %v3548, %v3545
    %v3936 = vpack.c.b16 %v3552, %v3549
    %v3937 = vpack.c.b16 %v3553, %v3550
    %v3938 = vpack.c.b16 %v3554, %v3551
    %v3939 = vpack.c.b16 %v3558, %v3555
    %v3940 = vpack.c.b16 %v3559, %v3556
    %v3941 = vpack.c.b16 %v3560, %v3557
    %v3942 = vpack.c.b16 %v3564, %v3561
    %v3943 = vpack.c.b16 %v3565, %v3562
    %v3944 = vpack.c.b16 %v3566, %v3563
    %v3945 = vpack.c.b16 %v3570, %v3567
    %v3946 = vpack.c.b16 %v3571, %v3568
    %v3947 = vpack.c.b16 %v3572, %v3569
    %v3948 = vpack.c.b16 %v3576, %v3573
    %v3949 = vpack.c.b16 %v3577, %v3574
    %v3950 = vpack.c.b16 %v3578, %v3575
    %v3951 = vpack.c.b16 %v3582, %v3579
    %v3952 = vpack.c.b16 %v3583, %v3580
    %v3953 = vpack.c.b16 %v3584, %v3581
    %v3954 = vpack.c.b16 %v3588, %v3585
    %v3955 = vpack.c.b16 %v3589, %v3586
    %v3956 = vpack.c.b16 %v3590, %v3587
    %v3957 = vpack.c.b16 %v3594, %v3591
    %v3958 = vpack.c.b16 %v3595, %v3592
    %v3959 = vpack.c.b16 %v3596, %v3593
    %v3960 = vpack.c.b16 %v3600, %v3597
    %v3961 = vpack.c.b16 %v3601, %v3598
    %v3962 = vpack.c.b16 %v3602, %v3599
    %v3963 = vpack.c.b16 %v3606, %v3603
    %v3964 = vpack.c.b16 %v3607, %v3604
    %v3965 = vpack.c.b16 %v3608, %v3605
    %v3966 = vpack.c.b16 %v3612, %v3609
    %v3967 = vpack.c.b16 %v3613, %v3610
    %v3968 = vpack.c.b16 %v3614, %v3611
    %v3969 = vpack.c.b16 %v3618, %v3615
    %v3970 = vpack.c.b16 %v3619, %v3616
    %v3971 = vpack.c.b16 %v3620, %v3617
    %v3972 = vpack.c.b16 %v3624, %v3621
    %v3973 = vpack.c.b16 %v3625, %v3622
    %v3974 = vpack.c.b16 %v3626, %v3623
    %v3975 = vpack.c.b16 %v3630, %v3627
    %v3976 = vpack.c.b16 %v3631, %v3628
    %v3977 = vpack.c.b16 %v3632, %v3629
    %v3978 = vpack.c.b16 %v3636, %v3633
    %v3979 = vpack.c.b16 %v3637, %v3634
    %v3980 = vpack.c.b16 %v3638, %v3635
    %v3981 = vpack.c.b16 %v3642, %v3639
    %v3982 = vpack.c.b16 %v3643, %v3640
    %v3983 = vpack.c.b16 %v3644, %v3641
    %v3984 = vpack.c.b16 %v3648, %v3645
    %v3985 = vpack.c.b16 %v3649, %v3646
    %v3986 = vpack.c.b16 %v3650, %v3647
    %v3987 = vpack.c.b16 %v3654, %v3651
    %v3988 = vpack.c.b16 %v3655, %v3652
    %v3989 = vpack.c.b16 %v3656, %v3653
    %v3990 = vpack.c.b16 %v3660, %v3657
    %v3991 = vpack.c.b16 %v3661, %v3658
    %v3992 = vpack.c.b16 %v3662, %v3659
    %v3993 = vpack.c.b16 %v3666, %v3663
    %v3994 = vpack.c.b16 %v3667, %v3664
    %v3995 = vpack.c.b16 %v3668, %v3665
    %v3996 = vpack.c.b16 %v3672, %v3669
    %v3997 = vpack.c.b16 %v3673, %v3670
    %v3998 = vpack.c.b16 %v3674, %v3671
    %v3999 = vpack.c.b16 %v3678, %v3675
    %v4000 = vpack.c.b16 %v3679, %v3676
    %v4001 = vpack.c.b16 %v3680, %v3677
    %v4002 = vpack.c.b16 %v3684, %v3681
    %v4003 = vpack.c.b16 %v3685, %v3682
    %v4004 = vpack.c.b16 %v3686, %v3683
    %v4005 = vpack.c.b16 %v3690, %v3687
    %v4006 = vpack.c.b16 %v3691, %v3688
    %v4007 = vpack.c.b16 %v3692, %v3689
    %v4008 = vpack.c.b16 %v3696, %v3693
    %v4009 = vpack.c.b16 %v3697, %v3694
    %v4010 = vpack.c.b16 %v3698, %v3695
    %v4011 = vpack.c.b16 %v3702, %v3699
    %v4012 = vpack.c.b16 %v3703, %v3700
    %v4013 = vpack.c.b16 %v3704, %v3701
    %v4014 = vpack.c.b16 %v3708, %v3705
    %v4015 = vpack.c.b16 %v3709, %v3706
    %v4016 = vpack.c.b16 %v3710, %v3707
    %v4017 = vpack.c.b16 %v3714, %v3711
    %v4018 = vpack.c.b16 %v3715, %v3712
    %v4019 = vpack.c.b16 %v3716, %v3713
    %v4020 = vpack.c.b16 %v3720, %v3717
    %v4021 = vpack.c.b16 %v3721, %v3718
    %v4022 = vpack.c.b16 %v3722, %v3719
    %v4023 = vpack.c.b16 %v3726, %v3723
    %v4024 = vpack.c.b16 %v3727, %v3724
    %v4025 = vpack.c.b16 %v3728, %v3725
    %v4026 = vpack.c.b16 %v3732, %v3729
    %v4027 = vpack.c.b16 %v3733, %v3730
    %v4028 = vpack.c.b16 %v3734, %v3731
    %v4029 = vpack.c.b16 %v3738, %v3735
    %v4030 = vpack.c.b16 %v3739, %v3736
    %v4031 = vpack.c.b16 %v3740, %v3737
    %v4032 = vpack.c.b16 %v3744, %v3741
    %v4033 = vpack.c.b16 %v3745, %v3742
    %v4034 = vpack.c.b16 %v3746, %v3743
    %4323 = vmatprep.subr.bf16.mxu0 %v3748
    %4324 = vmatpush1.bf16.msra.mxu0 %v3747
    %4325 = vmatprep.subr.bf16.mxu0 %v3751
    %4326 = vmatpush1.bf16.msra.mxu0 %v3750
    %4327 = vmatprep.subr.bf16.mxu0 %v3754
    %4328 = vmatpush1.bf16.msra.mxu0 %v3753
    %4329 = vmatprep.subr.bf16.mxu0 %v3757
    %4330 = vmatpush1.bf16.msra.mxu0 %v3756
    %4331 = vmatprep.subr.bf16.mxu0 %v3760
    %4332 = vmatpush1.bf16.msra.mxu0 %v3759
    %4333 = vmatprep.subr.bf16.mxu0 %v3763
    %4334 = vmatpush1.bf16.msra.mxu0 %v3762
    %4335 = vmatprep.subr.bf16.mxu0 %v3766
    %4336 = vmatpush1.bf16.msra.mxu0 %v3765
    %4337 = vmatprep.subr.bf16.mxu0 %v3769
    %4338 = vmatpush1.bf16.msra.mxu0 %v3768
    %4339 = vmatprep.subr.bf16.mxu0 %v3772
    %4340 = vmatpush1.bf16.msra.mxu0 %v3771
    %4341 = vmatprep.subr.bf16.mxu0 %v3775
    %4342 = vmatpush1.bf16.msra.mxu0 %v3774
    %4343 = vmatprep.subr.bf16.mxu0 %v3778
    %4344 = vmatpush1.bf16.msra.mxu0 %v3777
    %4345 = vmatprep.subr.bf16.mxu0 %v3781
    %4346 = vmatpush1.bf16.msra.mxu0 %v3780
    %4347 = vmatprep.subr.bf16.mxu0 %v3784
    %4348 = vmatpush1.bf16.msra.mxu0 %v3783
    %4349 = vmatprep.subr.bf16.mxu0 %v3787
    %4350 = vmatpush1.bf16.msra.mxu0 %v3786
    %4351 = vmatprep.subr.bf16.mxu0 %v3790
    %4352 = vmatpush1.bf16.msra.mxu0 %v3789
    %4353 = vmatprep.subr.bf16.mxu0 %v3793
    %4354 = vmatpush1.bf16.msra.mxu0 %v3792
    %4355 = vmatprep.mubr.bf16.mxu0 %v2375
    %4356 = vmatmul.mubr.bf16.gmra.mrb[0].mxu0 %v2374
    %v4357 = vpop.f32.mrb[0].mxu0
    %v4358 = vadd.f32 %v2775, %v4357
    %v4359 = vpop.f32.mrb[0].mxu0
    %v4360 = vadd.f32 %v2779, %v4359
    %v4361 = vpop.f32.mrb[0].mxu0
    %v4362 = vadd.f32 %v2775, %v4361
    %v4363 = vpop.f32.mrb[0].mxu0
    %v4364 = vadd.f32 %v2779, %v4363
    %4365 = vdwg.mxu0
    %4366 = vmatprep.subr.bf16.mxu0 %v3796
    %4367 = vmatpush1.bf16.msra.mxu0 %v3795
    %4368 = vmatprep.subr.bf16.mxu0 %v3799
    %4369 = vmatpush1.bf16.msra.mxu0 %v3798
    %4370 = vmatprep.subr.bf16.mxu0 %v3802
    %4371 = vmatpush1.bf16.msra.mxu0 %v3801
    %4372 = vmatprep.subr.bf16.mxu0 %v3805
    %4373 = vmatpush1.bf16.msra.mxu0 %v3804
    %4374 = vmatprep.subr.bf16.mxu0 %v3808
    %4375 = vmatpush1.bf16.msra.mxu0 %v3807
    %4376 = vmatprep.subr.bf16.mxu0 %v3811
    %4377 = vmatpush1.bf16.msra.mxu0 %v3810
    %4378 = vmatprep.subr.bf16.mxu0 %v3814
    %4379 = vmatpush1.bf16.msra.mxu0 %v3813
    %4380 = vmatprep.subr.bf16.mxu0 %v3817
    %4381 = vmatpush1.bf16.msra.mxu0 %v3816
    %4382 = vmatprep.subr.bf16.mxu0 %v3820
    %4383 = vmatpush1.bf16.msra.mxu0 %v3819
    %4384 = vmatprep.subr.bf16.mxu0 %v3823
    %4385 = vmatpush1.bf16.msra.mxu0 %v3822
    %4386 = vmatprep.subr.bf16.mxu0 %v3826
    %4387 = vmatpush1.bf16.msra.mxu0 %v3825
    %4388 = vmatprep.subr.bf16.mxu0 %v3829
    %4389 = vmatpush1.bf16.msra.mxu0 %v3828
    %4390 = vmatprep.subr.bf16.mxu0 %v3832
    %4391 = vmatpush1.bf16.msra.mxu0 %v3831
    %4392 = vmatprep.subr.bf16.mxu0 %v3835
    %4393 = vmatpush1.bf16.msra.mxu0 %v3834
    %4394 = vmatprep.subr.bf16.mxu0 %v3838
    %4395 = vmatpush1.bf16.msra.mxu0 %v3837
    %4396 = vmatprep.subr.bf16.mxu0 %v3841
    %4397 = vmatpush1.bf16.msra.mxu0 %v3840
    %4398 = vmatprep.mubr.bf16.mxu0 %v2377
    %4399 = vmatmul.mubr.bf16.gmra.mrb[0].mxu0 %v2376
    %v4400 = vpop.f32.mrb[0].mxu0
    %v4401 = vadd.f32 %v4358, %v4400
    %v4402 = vpop.f32.mrb[0].mxu0
    %v4403 = vadd.f32 %v4360, %v4402
    %v4404 = vpop.f32.mrb[0].mxu0
    %v4405 = vadd.f32 %v4362, %v4404
    %v4406 = vpop.f32.mrb[0].mxu0
    %v4407 = vadd.f32 %v4364, %v4406
    %4408 = vdwg.mxu0
    %4409 = vmatprep.subr.bf16.mxu0 %v3844
    %4410 = vmatpush1.bf16.msra.mxu0 %v3843
    %4411 = vmatprep.subr.bf16.mxu0 %v3847
    %4412 = vmatpush1.bf16.msra.mxu0 %v3846
    %4413 = vmatprep.subr.bf16.mxu0 %v3850
    %4414 = vmatpush1.bf16.msra.mxu0 %v3849
    %4415 = vmatprep.subr.bf16.mxu0 %v3853
    %4416 = vmatpush1.bf16.msra.mxu0 %v3852
    %4417 = vmatprep.subr.bf16.mxu0 %v3856
    %4418 = vmatpush1.bf16.msra.mxu0 %v3855
    %4419 = vmatprep.subr.bf16.mxu0 %v3859
    %4420 = vmatpush1.bf16.msra.mxu0 %v3858
    %4421 = vmatprep.subr.bf16.mxu0 %v3862
    %4422 = vmatpush1.bf16.msra.mxu0 %v3861
    %4423 = vmatprep.subr.bf16.mxu0 %v3865
    %4424 = vmatpush1.bf16.msra.mxu0 %v3864
    %4425 = vmatprep.subr.bf16.mxu0 %v3868
    %4426 = vmatpush1.bf16.msra.mxu0 %v3867
    %4427 = vmatprep.subr.bf16.mxu0 %v3871
    %4428 = vmatpush1.bf16.msra.mxu0 %v3870
    %4429 = vmatprep.subr.bf16.mxu0 %v3874
    %4430 = vmatpush1.bf16.msra.mxu0 %v3873
    %4431 = vmatprep.subr.bf16.mxu0 %v3877
    %4432 = vmatpush1.bf16.msra.mxu0 %v3876
    %4433 = vmatprep.subr.bf16.mxu0 %v3880
    %4434 = vmatpush1.bf16.msra.mxu0 %v3879
    %4435 = vmatprep.subr.bf16.mxu0 %v3883
    %4436 = vmatpush1.bf16.msra.mxu0 %v3882
    %4437 = vmatprep.subr.bf16.mxu0 %v3886
    %4438 = vmatpush1.bf16.msra.mxu0 %v3885
    %4439 = vmatprep.subr.bf16.mxu0 %v3889
    %4440 = vmatpush1.bf16.msra.mxu0 %v3888
    %4441 = vmatprep.mubr.bf16.mxu0 %v2379
    %4442 = vmatmul.mubr.bf16.gmra.mrb[0].mxu0 %v2378
    %v4443 = vpop.f32.mrb[0].mxu0
    %v4444 = vadd.f32 %v4401, %v4443
    %v4445 = vpop.f32.mrb[0].mxu0
    %v4446 = vadd.f32 %v4403, %v4445
    %v4447 = vpop.f32.mrb[0].mxu0
    %v4448 = vadd.f32 %v4405, %v4447
    %v4449 = vpop.f32.mrb[0].mxu0
    %v4450 = vadd.f32 %v4407, %v4449
    %4451 = vdwg.mxu0
    %4452 = vmatprep.subr.bf16.mxu0 %v3892
    %4453 = vmatpush1.bf16.msra.mxu0 %v3891
    %4454 = vmatprep.subr.bf16.mxu0 %v3895
    %4455 = vmatpush1.bf16.msra.mxu0 %v3894
    %4456 = vmatprep.subr.bf16.mxu0 %v3898
    %4457 = vmatpush1.bf16.msra.mxu0 %v3897
    %4458 = vmatprep.subr.bf16.mxu0 %v3901
    %4459 = vmatpush1.bf16.msra.mxu0 %v3900
    %4460 = vmatprep.subr.bf16.mxu0 %v3904
    %4461 = vmatpush1.bf16.msra.mxu0 %v3903
    %4462 = vmatprep.subr.bf16.mxu0 %v3907
    %4463 = vmatpush1.bf16.msra.mxu0 %v3906
    %4464 = vmatprep.subr.bf16.mxu0 %v3910
    %4465 = vmatpush1.bf16.msra.mxu0 %v3909
    %4466 = vmatprep.subr.bf16.mxu0 %v3913
    %4467 = vmatpush1.bf16.msra.mxu0 %v3912
    %4468 = vmatprep.subr.bf16.mxu0 %v3916
    %4469 = vmatpush1.bf16.msra.mxu0 %v3915
    %4470 = vmatprep.subr.bf16.mxu0 %v3919
    %4471 = vmatpush1.bf16.msra.mxu0 %v3918
    %4472 = vmatprep.subr.bf16.mxu0 %v3922
    %4473 = vmatpush1.bf16.msra.mxu0 %v3921
    %4474 = vmatprep.subr.bf16.mxu0 %v3925
    %4475 = vmatpush1.bf16.msra.mxu0 %v3924
    %4476 = vmatprep.subr.bf16.mxu0 %v3928
    %4477 = vmatpush1.bf16.msra.mxu0 %v3927
    %4478 = vmatprep.subr.bf16.mxu0 %v3931
    %4479 = vmatpush1.bf16.msra.mxu0 %v3930
    %4480 = vmatprep.subr.bf16.mxu0 %v3934
    %4481 = vmatpush1.bf16.msra.mxu0 %v3933
    %4482 = vmatprep.subr.bf16.mxu0 %v3937
    %4483 = vmatpush1.bf16.msra.mxu0 %v3936
    %4484 = vmatprep.mubr.bf16.mxu0 %v2381
    %4485 = vmatmul.mubr.bf16.gmra.mrb[0].mxu0 %v2380
    %v4486 = vpop.f32.mrb[0].mxu0
    %v4487 = vadd.f32 %v4444, %v4486
    %v4488 = vpop.f32.mrb[0].mxu0
    %v4489 = vadd.f32 %v4446, %v4488
    %v4490 = vpop.f32.mrb[0].mxu0
    %v4491 = vadd.f32 %v4448, %v4490
    %v4492 = vpop.f32.mrb[0].mxu0
    %v4493 = vadd.f32 %v4450, %v4492
    %4494 = vdwg.mxu0
    %4495 = vmatprep.subr.bf16.mxu0 %v3940
    %4496 = vmatpush1.bf16.msra.mxu0 %v3939
    %4497 = vmatprep.subr.bf16.mxu0 %v3943
    %4498 = vmatpush1.bf16.msra.mxu0 %v3942
    %4499 = vmatprep.subr.bf16.mxu0 %v3946
    %4500 = vmatpush1.bf16.msra.mxu0 %v3945
    %4501 = vmatprep.subr.bf16.mxu0 %v3949
    %4502 = vmatpush1.bf16.msra.mxu0 %v3948
    %4503 = vmatprep.subr.bf16.mxu0 %v3952
    %4504 = vmatpush1.bf16.msra.mxu0 %v3951
    %4505 = vmatprep.subr.bf16.mxu0 %v3955
    %4506 = vmatpush1.bf16.msra.mxu0 %v3954
    %4507 = vmatprep.subr.bf16.mxu0 %v3958
    %4508 = vmatpush1.bf16.msra.mxu0 %v3957
    %4509 = vmatprep.subr.bf16.mxu0 %v3961
    %4510 = vmatpush1.bf16.msra.mxu0 %v3960
    %4511 = vmatprep.subr.bf16.mxu0 %v3964
    %4512 = vmatpush1.bf16.msra.mxu0 %v3963
    %4513 = vmatprep.subr.bf16.mxu0 %v3967
    %4514 = vmatpush1.bf16.msra.mxu0 %v3966
    %4515 = vmatprep.subr.bf16.mxu0 %v3970
    %4516 = vmatpush1.bf16.msra.mxu0 %v3969
    %4517 = vmatprep.subr.bf16.mxu0 %v3973
    %4518 = vmatpush1.bf16.msra.mxu0 %v3972
    %4519 = vmatprep.subr.bf16.mxu0 %v3976
    %4520 = vmatpush1.bf16.msra.mxu0 %v3975
    %4521 = vmatprep.subr.bf16.mxu0 %v3979
    %4522 = vmatpush1.bf16.msra.mxu0 %v3978
    %4523 = vmatprep.subr.bf16.mxu0 %v3982
    %4524 = vmatpush1.bf16.msra.mxu0 %v3981
    %4525 = vmatprep.subr.bf16.mxu0 %v3985
    %4526 = vmatpush1.bf16.msra.mxu0 %v3984
    %4527 = vmatprep.mubr.bf16.mxu0 %v2383
    %4528 = vmatmul.mubr.bf16.gmra.mrb[0].mxu0 %v2382
    %v4529 = vpop.f32.mrb[0].mxu0
    %v4530 = vadd.f32 %v4487, %v4529
    %v4531 = vpop.f32.mrb[0].mxu0
    %v4532 = vadd.f32 %v4489, %v4531
    %v4533 = vpop.f32.mrb[0].mxu0
    %v4534 = vadd.f32 %v4491, %v4533
    %v4535 = vpop.f32.mrb[0].mxu0
    %v4536 = vadd.f32 %v4493, %v4535
    %4537 = vdwg.mxu0
    %4538 = vmatprep.subr.bf16.mxu0 %v3988
    %4539 = vmatpush1.bf16.msra.mxu0 %v3987
    %4540 = vmatprep.subr.bf16.mxu0 %v3991
    %4541 = vmatpush1.bf16.msra.mxu0 %v3990
    %4542 = vmatprep.subr.bf16.mxu0 %v3994
    %4543 = vmatpush1.bf16.msra.mxu0 %v3993
    %4544 = vmatprep.subr.bf16.mxu0 %v3997
    %4545 = vmatpush1.bf16.msra.mxu0 %v3996
    %4546 = vmatprep.subr.bf16.mxu0 %v4000
    %4547 = vmatpush1.bf16.msra.mxu0 %v3999
    %4548 = vmatprep.subr.bf16.mxu0 %v4003
    %4549 = vmatpush1.bf16.msra.mxu0 %v4002
    %4550 = vmatprep.subr.bf16.mxu0 %v4006
    %4551 = vmatpush1.bf16.msra.mxu0 %v4005
    %4552 = vmatprep.subr.bf16.mxu0 %v4009
    %4553 = vmatpush1.bf16.msra.mxu0 %v4008
    %4554 = vmatprep.subr.bf16.mxu0 %v4012
    %4555 = vmatpush1.bf16.msra.mxu0 %v4011
    %4556 = vmatprep.subr.bf16.mxu0 %v4015
    %4557 = vmatpush1.bf16.msra.mxu0 %v4014
    %4558 = vmatprep.subr.bf16.mxu0 %v4018
    %4559 = vmatpush1.bf16.msra.mxu0 %v4017
    %4560 = vmatprep.subr.bf16.mxu0 %v4021
    %4561 = vmatpush1.bf16.msra.mxu0 %v4020
    %4562 = vmatprep.subr.bf16.mxu0 %v4024
    %4563 = vmatpush1.bf16.msra.mxu0 %v4023
    %4564 = vmatprep.subr.bf16.mxu0 %v4027
    %4565 = vmatpush1.bf16.msra.mxu0 %v4026
    %4566 = vmatprep.subr.bf16.mxu0 %v4030
    %4567 = vmatpush1.bf16.msra.mxu0 %v4029
    %4568 = vmatprep.subr.bf16.mxu0 %v4033
    %4569 = vmatpush1.bf16.msra.mxu0 %v4032
    %4570 = vmatprep.mubr.bf16.mxu0 %v2385
    %4571 = vmatmul.mubr.bf16.gmra.mrb[0].mxu0 %v2384
    %v4572 = vpop.f32.mrb[0].mxu0
    %v4573 = vadd.f32 %v4530, %v4572
    %v4574 = vpop.f32.mrb[0].mxu0
    %v4575 = vadd.f32 %v4532, %v4574
    %v4576 = vpop.f32.mrb[0].mxu0
    %v4577 = vadd.f32 %v4534, %v4576
    %v4578 = vpop.f32.mrb[0].mxu0
    %v4579 = vadd.f32 %v4536, %v4578
    %4580 = vdwg.mxu0
    %4581 = vmatprep.subr.bf16.mxu0 0
    %4582 = vmatpush1.bf16.msra.mxu0 %v3749
    %4583 = vmatprep.subr.bf16.mxu0 0
    %4584 = vmatpush1.bf16.msra.mxu0 %v3752
    %4585 = vmatprep.subr.bf16.mxu0 0
    %4586 = vmatpush1.bf16.msra.mxu0 %v3755
    %4587 = vmatprep.subr.bf16.mxu0 0
    %4588 = vmatpush1.bf16.msra.mxu0 %v3758
    %4589 = vmatprep.subr.bf16.mxu0 0
    %4590 = vmatpush1.bf16.msra.mxu0 %v3761
    %4591 = vmatprep.subr.bf16.mxu0 0
    %4592 = vmatpush1.bf16.msra.mxu0 %v3764
    %4593 = vmatprep.subr.bf16.mxu0 0
    %4594 = vmatpush1.bf16.msra.mxu0 %v3767
    %4595 = vmatprep.subr.bf16.mxu0 0
    %4596 = vmatpush1.bf16.msra.mxu0 %v3770
    %4597 = vmatprep.subr.bf16.mxu0 0
    %4598 = vmatpush1.bf16.msra.mxu0 %v3773
    %4599 = vmatprep.subr.bf16.mxu0 0
    %4600 = vmatpush1.bf16.msra.mxu0 %v3776
    %4601 = vmatprep.subr.bf16.mxu0 0
    %4602 = vmatpush1.bf16.msra.mxu0 %v3779
    %4603 = vmatprep.subr.bf16.mxu0 0
    %4604 = vmatpush1.bf16.msra.mxu0 %v3782
    %4605 = vmatprep.subr.bf16.mxu0 0
    %4606 = vmatpush1.bf16.msra.mxu0 %v3785
    %4607 = vmatprep.subr.bf16.mxu0 0
    %4608 = vmatpush1.bf16.msra.mxu0 %v3788
    %4609 = vmatprep.subr.bf16.mxu0 0
    %4610 = vmatpush1.bf16.msra.mxu0 %v3791
    %4611 = vmatprep.subr.bf16.mxu0 0
    %4612 = vmatpush1.bf16.msra.mxu0 %v3794
    %4613 = vmatprep.mubr.bf16.mxu0 %v2375
    %4614 = vmatmul.mubr.bf16.gmra.mrb[0].mxu0 %v2374
    %v4615 = vpop.f32.mrb[0].mxu0
    %v4616 = vadd.f32 %v2783, %v4615
    %v4617 = vpop.f32.mrb[0].mxu0
    %v4618 = vpop.f32.mrb[0].mxu0
    %v4619 = vadd.f32 %v2783, %v4618
    %v4620 = vpop.f32.mrb[0].mxu0
    %4621 = vdwg.mxu0
    %4622 = vmatprep.subr.bf16.mxu0 0
    %4623 = vmatpush1.bf16.msra.mxu0 %v3797
    %4624 = vmatprep.subr.bf16.mxu0 0
    %4625 = vmatpush1.bf16.msra.mxu0 %v3800
    %4626 = vmatprep.subr.bf16.mxu0 0
    %4627 = vmatpush1.bf16.msra.mxu0 %v3803
    %4628 = vmatprep.subr.bf16.mxu0 0
    %4629 = vmatpush1.bf16.msra.mxu0 %v3806
    %4630 = vmatprep.subr.bf16.mxu0 0
    %4631 = vmatpush1.bf16.msra.mxu0 %v3809
    %4632 = vmatprep.subr.bf16.mxu0 0
    %4633 = vmatpush1.bf16.msra.mxu0 %v3812
    %4634 = vmatprep.subr.bf16.mxu0 0
    %4635 = vmatpush1.bf16.msra.mxu0 %v3815
    %4636 = vmatprep.subr.bf16.mxu0 0
    %4637 = vmatpush1.bf16.msra.mxu0 %v3818
    %4638 = vmatprep.subr.bf16.mxu0 0
    %4639 = vmatpush1.bf16.msra.mxu0 %v3821
    %4640 = vmatprep.subr.bf16.mxu0 0
    %4641 = vmatpush1.bf16.msra.mxu0 %v3824
    %4642 = vmatprep.subr.bf16.mxu0 0
    %4643 = vmatpush1.bf16.msra.mxu0 %v3827
    %4644 = vmatprep.subr.bf16.mxu0 0
    %4645 = vmatpush1.bf16.msra.mxu0 %v3830
    %4646 = vmatprep.subr.bf16.mxu0 0
    %4647 = vmatpush1.bf16.msra.mxu0 %v3833
    %4648 = vmatprep.subr.bf16.mxu0 0
    %4649 = vmatpush1.bf16.msra.mxu0 %v3836
    %4650 = vmatprep.subr.bf16.mxu0 0
    %4651 = vmatpush1.bf16.msra.mxu0 %v3839
    %4652 = vmatprep.subr.bf16.mxu0 0
    %4653 = vmatpush1.bf16.msra.mxu0 %v3842
    %4654 = vmatprep.mubr.bf16.mxu0 %v2377
    %4655 = vmatmul.mubr.bf16.gmra.mrb[0].mxu0 %v2376
    %v4656 = vpop.f32.mrb[0].mxu0
    %v4657 = vadd.f32 %v4616, %v4656
    %v4658 = vpop.f32.mrb[0].mxu0
    %v4659 = vpop.f32.mrb[0].mxu0
    %v4660 = vadd.f32 %v4619, %v4659
    %v4661 = vpop.f32.mrb[0].mxu0
    %4662 = vdwg.mxu0
    %4663 = vmatprep.subr.bf16.mxu0 0
    %4664 = vmatpush1.bf16.msra.mxu0 %v3845
    %4665 = vmatprep.subr.bf16.mxu0 0
    %4666 = vmatpush1.bf16.msra.mxu0 %v3848
    %4667 = vmatprep.subr.bf16.mxu0 0
    %4668 = vmatpush1.bf16.msra.mxu0 %v3851
    %4669 = vmatprep.subr.bf16.mxu0 0
    %4670 = vmatpush1.bf16.msra.mxu0 %v3854
    %4671 = vmatprep.subr.bf16.mxu0 0
    %4672 = vmatpush1.bf16.msra.mxu0 %v3857
    %4673 = vmatprep.subr.bf16.mxu0 0
    %4674 = vmatpush1.bf16.msra.mxu0 %v3860
    %4675 = vmatprep.subr.bf16.mxu0 0
    %4676 = vmatpush1.bf16.msra.mxu0 %v3863
    %4677 = vmatprep.subr.bf16.mxu0 0
    %4678 = vmatpush1.bf16.msra.mxu0 %v3866
    %4679 = vmatprep.subr.bf16.mxu0 0
    %4680 = vmatpush1.bf16.msra.mxu0 %v3869
    %4681 = vmatprep.subr.bf16.mxu0 0
    %4682 = vmatpush1.bf16.msra.mxu0 %v3872
    %4683 = vmatprep.subr.bf16.mxu0 0
    %4684 = vmatpush1.bf16.msra.mxu0 %v3875
    %4685 = vmatprep.subr.bf16.mxu0 0
    %4686 = vmatpush1.bf16.msra.mxu0 %v3878
    %4687 = vmatprep.subr.bf16.mxu0 0
    %4688 = vmatpush1.bf16.msra.mxu0 %v3881
    %4689 = vmatprep.subr.bf16.mxu0 0
    %4690 = vmatpush1.bf16.msra.mxu0 %v3884
    %4691 = vmatprep.subr.bf16.mxu0 0
    %4692 = vmatpush1.bf16.msra.mxu0 %v3887
    %4693 = vmatprep.subr.bf16.mxu0 0
    %4694 = vmatpush1.bf16.msra.mxu0 %v3890
    %4695 = vmatprep.mubr.bf16.mxu0 %v2379
    %4696 = vmatmul.mubr.bf16.gmra.mrb[0].mxu0 %v2378
    %v4697 = vpop.f32.mrb[0].mxu0
    %v4698 = vadd.f32 %v4657, %v4697
    %v4699 = vpop.f32.mrb[0].mxu0
    %v4700 = vpop.f32.mrb[0].mxu0
    %v4701 = vadd.f32 %v4660, %v4700
    %v4702 = vpop.f32.mrb[0].mxu0
    %4703 = vdwg.mxu0
    %4704 = vmatprep.subr.bf16.mxu0 0
    %4705 = vmatpush1.bf16.msra.mxu0 %v3893
    %4706 = vmatprep.subr.bf16.mxu0 0
    %4707 = vmatpush1.bf16.msra.mxu0 %v3896
    %4708 = vmatprep.subr.bf16.mxu0 0
    %4709 = vmatpush1.bf16.msra.mxu0 %v3899
    %4710 = vmatprep.subr.bf16.mxu0 0
    %4711 = vmatpush1.bf16.msra.mxu0 %v3902
    %4712 = vmatprep.subr.bf16.mxu0 0
    %4713 = vmatpush1.bf16.msra.mxu0 %v3905
    %4714 = vmatprep.subr.bf16.mxu0 0
    %4715 = vmatpush1.bf16.msra.mxu0 %v3908
    %4716 = vmatprep.subr.bf16.mxu0 0
    %4717 = vmatpush1.bf16.msra.mxu0 %v3911
    %4718 = vmatprep.subr.bf16.mxu0 0
    %4719 = vmatpush1.bf16.msra.mxu0 %v3914
    %4720 = vmatprep.subr.bf16.mxu0 0
    %4721 = vmatpush1.bf16.msra.mxu0 %v3917
    %4722 = vmatprep.subr.bf16.mxu0 0
    %4723 = vmatpush1.bf16.msra.mxu0 %v3920
    %4724 = vmatprep.subr.bf16.mxu0 0
    %4725 = vmatpush1.bf16.msra.mxu0 %v3923
    %4726 = vmatprep.subr.bf16.mxu0 0
    %4727 = vmatpush1.bf16.msra.mxu0 %v3926
    %4728 = vmatprep.subr.bf16.mxu0 0
    %4729 = vmatpush1.bf16.msra.mxu0 %v3929
    %4730 = vmatprep.subr.bf16.mxu0 0
    %4731 = vmatpush1.bf16.msra.mxu0 %v3932
    %4732 = vmatprep.subr.bf16.mxu0 0
    %4733 = vmatpush1.bf16.msra.mxu0 %v3935
    %4734 = vmatprep.subr.bf16.mxu0 0
    %4735 = vmatpush1.bf16.msra.mxu0 %v3938
    %4736 = vmatprep.mubr.bf16.mxu0 %v2381
    %4737 = vmatmul.mubr.bf16.gmra.mrb[0].mxu0 %v2380
    %v4738 = vpop.f32.mrb[0].mxu0
    %v4739 = vadd.f32 %v4698, %v4738
    %v4740 = vpop.f32.mrb[0].mxu0
    %v4741 = vpop.f32.mrb[0].mxu0
    %v4742 = vadd.f32 %v4701, %v4741
    %v4743 = vpop.f32.mrb[0].mxu0
    %4744 = vdwg.mxu0
    %4745 = vmatprep.subr.bf16.mxu0 0
    %4746 = vmatpush1.bf16.msra.mxu0 %v3941
    %4747 = vmatprep.subr.bf16.mxu0 0
    %4748 = vmatpush1.bf16.msra.mxu0 %v3944
    %4749 = vmatprep.subr.bf16.mxu0 0
    %4750 = vmatpush1.bf16.msra.mxu0 %v3947
    %4751 = vmatprep.subr.bf16.mxu0 0
    %4752 = vmatpush1.bf16.msra.mxu0 %v3950
    %4753 = vmatprep.subr.bf16.mxu0 0
    %4754 = vmatpush1.bf16.msra.mxu0 %v3953
    %4755 = vmatprep.subr.bf16.mxu0 0
    %4756 = vmatpush1.bf16.msra.mxu0 %v3956
    %4757 = vmatprep.subr.bf16.mxu0 0
    %4758 = vmatpush1.bf16.msra.mxu0 %v3959
    %4759 = vmatprep.subr.bf16.mxu0 0
    %4760 = vmatpush1.bf16.msra.mxu0 %v3962
    %4761 = vmatprep.subr.bf16.mxu0 0
    %4762 = vmatpush1.bf16.msra.mxu0 %v3965
    %4763 = vmatprep.subr.bf16.mxu0 0
    %4764 = vmatpush1.bf16.msra.mxu0 %v3968
    %4765 = vmatprep.subr.bf16.mxu0 0
    %4766 = vmatpush1.bf16.msra.mxu0 %v3971
    %4767 = vmatprep.subr.bf16.mxu0 0
    %4768 = vmatpush1.bf16.msra.mxu0 %v3974
    %4769 = vmatprep.subr.bf16.mxu0 0
    %4770 = vmatpush1.bf16.msra.mxu0 %v3977
    %4771 = vmatprep.subr.bf16.mxu0 0
    %4772 = vmatpush1.bf16.msra.mxu0 %v3980
    %4773 = vmatprep.subr.bf16.mxu0 0
    %4774 = vmatpush1.bf16.msra.mxu0 %v3983
    %4775 = vmatprep.subr.bf16.mxu0 0
    %4776 = vmatpush1.bf16.msra.mxu0 %v3986
    %4777 = vmatprep.mubr.bf16.mxu0 %v2383
    %4778 = vmatmul.mubr.bf16.gmra.mrb[0].mxu0 %v2382
    %v4779 = vpop.f32.mrb[0].mxu0
    %v4780 = vadd.f32 %v4739, %v4779
    %v4781 = vpop.f32.mrb[0].mxu0
    %v4782 = vpop.f32.mrb[0].mxu0
    %v4783 = vadd.f32 %v4742, %v4782
    %v4784 = vpop.f32.mrb[0].mxu0
    %4785 = vdwg.mxu0
    %4786 = vmatprep.subr.bf16.mxu0 0
    %4787 = vmatpush1.bf16.msra.mxu0 %v3989
    %4788 = vmatprep.subr.bf16.mxu0 0
    %4789 = vmatpush1.bf16.msra.mxu0 %v3992
    %4790 = vmatprep.subr.bf16.mxu0 0
    %4791 = vmatpush1.bf16.msra.mxu0 %v3995
    %4792 = vmatprep.subr.bf16.mxu0 0
    %4793 = vmatpush1.bf16.msra.mxu0 %v3998
    %4794 = vmatprep.subr.bf16.mxu0 0
    %4795 = vmatpush1.bf16.msra.mxu0 %v4001
    %4796 = vmatprep.subr.bf16.mxu0 0
    %4797 = vmatpush1.bf16.msra.mxu0 %v4004
    %4798 = vmatprep.subr.bf16.mxu0 0
    %4799 = vmatpush1.bf16.msra.mxu0 %v4007
    %4800 = vmatprep.subr.bf16.mxu0 0
    %4801 = vmatpush1.bf16.msra.mxu0 %v4010
    %4802 = vmatprep.subr.bf16.mxu0 0
    %4803 = vmatpush1.bf16.msra.mxu0 %v4013
    %4804 = vmatprep.subr.bf16.mxu0 0
    %4805 = vmatpush1.bf16.msra.mxu0 %v4016
    %4806 = vmatprep.subr.bf16.mxu0 0
    %4807 = vmatpush1.bf16.msra.mxu0 %v4019
    %4808 = vmatprep.subr.bf16.mxu0 0
    %4809 = vmatpush1.bf16.msra.mxu0 %v4022
    %4810 = vmatprep.subr.bf16.mxu0 0
    %4811 = vmatpush1.bf16.msra.mxu0 %v4025
    %4812 = vmatprep.subr.bf16.mxu0 0
    %4813 = vmatpush1.bf16.msra.mxu0 %v4028
    %4814 = vmatprep.subr.bf16.mxu0 0
    %4815 = vmatpush1.bf16.msra.mxu0 %v4031
    %4816 = vmatprep.subr.bf16.mxu0 0
    %4817 = vmatpush1.bf16.msra.mxu0 %v4034
    %4818 = vmatprep.mubr.bf16.mxu0 %v2385
    %4819 = vmatmul.mubr.bf16.gmra.mrb[0].mxu0 %v2384
    %v4820 = vpop.f32.mrb[0].mxu0
    %v4821 = vadd.f32 %v4780, %v4820
    %v4822 = vpop.f32.mrb[0].mxu0
    %v4823 = vpop.f32.mrb[0].mxu0
    %v4824 = vadd.f32 %v4783, %v4823
    %v4825 = vpop.f32.mrb[0].mxu0
    %4826 = vdwg.mxu0
    %4827 = vst [vmem:[#allocation2] sm:$0xff] %v4573
    %4828 = vst [vmem:[#allocation2 + $0x8] sm:$0xff] %v4575
    %4829 = vst [vmem:[#allocation2 + $0x10] sm:$0xff] %v4821
    %4830 = vst [vmem:[#allocation2 + $0x18] sm:$0xff] %v4577
    %4831 = vst [vmem:[#allocation2 + $0x20] sm:$0xff] %v4579
    %4832 = vst [vmem:[#allocation2 + $0x28] sm:$0xff] %v4824
    // Predicated region
    $region22: #{feed_forward.1} parent=1 // pred_check
      _
    $region23: #{feed_forward.1} parent=1 // pred_check_branch
      %4834 = sbr.rel (0) target = $region25
    $region24: #{feed_forward.1} parent=1 // pred_region
      %s4836 = ssub.s32 768, 768
      %4837 = vsyncadd [#allocation3], %s4836
      %s4838 = sshll.u32 [#allocation2], 4
      %s4839 = int_to_ptr.vmem [resolvable:$true] %s4838
      %4844 = dma.vmem_to_hbm [thread:$0]  %s4839, 768, %s5, [#allocation3], 384, 384, 24
    $region25: #{feed_forward.1} parent=1 // pred_fallthru
      _
    // Predicated region
    $region26: #{feed_forward.1} parent=1 // pred_check
      _
    $region27: #{feed_forward.1} parent=1 // pred_check_branch
      %4846 = sbr.rel (0) target = $region29
    $region28: #{feed_forward.1} parent=1 // pred_region
      %4847 = dma.done [#allocation3], 768
    $region29: #{feed_forward.1} parent=1 // pred_fallthru
      _
    %4848 = vsyncpa [#allocation3], 1

</llo_original>
